<compile_context>
chip_gen: v6e
topology: v6e:2x2x1
jax: 0.10.0
libtpu: 0.0.40
codegen_flags: <defaults>
</compile_context>

<pallas_src>
import functools
import math

import jax
import jax.numpy as jnp
from jax import lax
from jax.experimental import pallas as pl
from jax.experimental.pallas import tpu as pltpu


# ----------------------------------------------------------------------------
# Model config
# ----------------------------------------------------------------------------
VOCAB = 100
MAX_POS = 16
TYPE_VOCAB = 2
HIDDEN = 32
HEADS = 2
HEAD_DIM = HIDDEN // HEADS
LAYERS = 2
INTERMEDIATE = 64
N_CLASSES = 3
LN_EPS = 1e-12

VOCAB_PAD = ((VOCAB + 7) // 8) * 8          # word rows padded so pos rows are sublane-aligned
SLAB_LANES = 128
ROWS_PER_LAYER = 10                          # bq bk bv bo ln1g ln1b b1 b2 ln2g ln2b


def _pad_lanes(x, width=SLAB_LANES):
    return jnp.pad(x, ((0, 0), (0, width - x.shape[-1])))


def _row(v, width=SLAB_LANES):
    return jnp.pad(v.reshape(1, -1), ((0, 0), (0, width - v.shape[-1])))


# ----------------------------------------------------------------------------
# Fused whole-model Pallas kernel
# ----------------------------------------------------------------------------
def _fused_forward_kernel(
    ids_ref,       # (B, S)   int32, SMEM  — token ids for the in-kernel gather
    mask_ref,      # (B, S)   int32, VMEM  — attention mask (1 = keep, 0 = pad)
    emb_tab_ref,   # (VOCAB_PAD + MAX_POS, H) — [word table | pos+type0 table]
    w_attn_ref,    # (L, H, 4*128) — [Wq | Wk | Wv | Wo], 128-lane aligned blocks
    w_ffn_ref,     # (L, H+I, 128) — rows [W1 (HxI) ; W2 (IxH)], lanes 0-padded
    slab_ref,      # (2+10L+2+2H, 128) — biases / LN gamma,beta / pooler_w / cls_w
    logits_ref,    # (B, 128)  lane-dense logits (first N_CLASSES lanes valid)
    *, batch, seq, hidden, heads, head_dim, inter, layers, pos_off, scale, eps,
):
    f32 = jnp.float32
    tokens = batch * seq

    def srow(r, width):                       # one packed (1, width) bias/LN row
        return slab_ref[r:r + 1, :width]

    def layernorm(x, g, b):
        mean = jnp.mean(x, axis=-1, keepdims=True)
        var = jnp.mean(jnp.square(x - mean), axis=-1, keepdims=True)
        return (x - mean) * lax.rsqrt(var + eps) * g + b

    def gelu(x):
        # tanh-approximate GELU.
        # TODO(synk): exact erf GELU (PyTorch nn.GELU / HF BERT default) not
        # emitted; erf lowering in Mosaic is not guaranteed, tanh approx used.
        return 0.5 * x * (1.0 + jnp.tanh(0.7978845608028654 *
                                         (x + 0.044715 * x * x * x)))

    # ---- embeddings: in-kernel gather from SMEM token ids (no XLA launch) ----
    gathered = jnp.concatenate(
        [emb_tab_ref[pl.ds(ids_ref[t // seq, t % seq], 1), :]
         for t in range(tokens)], axis=0)                          # (B*S, H)
    pos_type = emb_tab_ref[pos_off:pos_off + seq, :]               # (S, H)
    emb = (gathered.reshape(batch, seq, hidden)
           + pos_type[None, :, :]).reshape(tokens, hidden)
    h = layernorm(emb.astype(f32), srow(0, hidden), srow(1, hidden))

    # additive attention mask, broadcast ONCE and reused by every layer/head
    neg = (1.0 - mask_ref[...].astype(f32)) * -10000.0             # (B, S)
    add_mask = jnp.broadcast_to(neg[:, None, :], (batch, seq, seq))

    # ---- encoder layers (static unroll over LAYERS) ----
    for l in range(layers):
        base = 2 + l * ROWS_PER_LAYER
        wa = w_attn_ref[l]                                         # (H, 4*128)

        # fused QKV projection; Q/K/V segments are 128-lane aligned slices
        qkv = jnp.dot(h, wa[:, :3 * 128], preferred_element_type=f32)
        q = qkv[:, 0:hidden] + srow(base + 0, hidden)
        k = qkv[:, 128:128 + hidden] + srow(base + 1, hidden)
        v = qkv[:, 256:256 + hidden] + srow(base + 2, hidden)

        # multi-head attention.
        # TODO(synk): at real head counts fold heads into dot_general batch dims;
        # with heads=2 the static unroll avoids risky 4-D relayouts for ~no cost.
        ctx_heads = []
        for hh in range(heads):
            sl = slice(hh * head_dim, (hh + 1) * head_dim)
            qh = q[:, sl].reshape(batch, seq, head_dim)
            kh = k[:, sl].reshape(batch, seq, head_dim)
            vh = v[:, sl].reshape(batch, seq, head_dim)
            s = lax.dot_general(qh, kh, (((2,), (2,)), ((0,), (0,))),
                                preferred_element_type=f32) * scale + add_mask
            s = s - jnp.max(s, axis=-1, keepdims=True)
            p = jnp.exp(s)
            p = p * pl.reciprocal(jnp.sum(p, axis=-1, keepdims=True), approx=True)
            ctx_heads.append(lax.dot_general(p, vh, (((2,), (1,)), ((0,), (0,))),
                                             preferred_element_type=f32))
        ctx = jnp.concatenate(ctx_heads, axis=-1).reshape(tokens, hidden)

        # SINGLE output projection on the re-concatenated context
        attn = jnp.dot(ctx, wa[:, 3 * 128:3 * 128 + hidden],
                       preferred_element_type=f32) + srow(base + 3, hidden)
        h = layernorm(h + attn, srow(base + 4, hidden), srow(base + 5, hidden))

        # feed-forward with fused GELU
        wf = w_ffn_ref[l]                                          # (H+I, 128)
        f = jnp.dot(h, wf[:hidden, :inter],
                    preferred_element_type=f32) + srow(base + 6, inter)
        f = gelu(f)
        f = jnp.dot(f, wf[hidden:hidden + inter, :hidden],
                    preferred_element_type=f32) + srow(base + 7, hidden)
        h = layernorm(h + f, srow(base + 8, hidden), srow(base + 9, hidden))

    # ---- pooler on [CLS] (strided first-token select) + classifier head ----
    off = 2 + layers * ROWS_PER_LAYER
    cls = h.reshape(batch, seq, hidden)[:, 0, :]                   # (B, H)
    pool_w = slab_ref[off + 2:off + 2 + hidden, :hidden]           # (H, H)
    pooled = jnp.tanh(jnp.dot(cls, pool_w, preferred_element_type=f32)
                      + srow(off, hidden))

    # nn.Dropout(p=0.3) in eval mode is identity.
    # TODO(synk): training-mode dropout (pltpu.prng_*) not implemented.

    cls_w = slab_ref[off + 2 + hidden:off + 2 + 2 * hidden, :]     # (H, 128), 0-padded
    logits = jnp.dot(pooled, cls_w, preferred_element_type=f32) + srow(off + 1, 128)
    logits_ref[...] = logits.astype(logits_ref.dtype)              # lane-dense store


# ----------------------------------------------------------------------------
# Parameters: standard BERT shapes, packed once into the kernel layout
# ----------------------------------------------------------------------------
def init_params(key):
    ks = jax.random.split(key, 12)

    def w(k, *shape):
        return jax.random.normal(k, shape, jnp.float32) * 0.02

    word_emb = w(ks[0], VOCAB, HIDDEN)
    pos_emb = w(ks[1], MAX_POS, HIDDEN)
    type_emb = w(ks[2], TYPE_VOCAB, HIDDEN)
    emb_ln_g = jnp.ones((HIDDEN,), jnp.float32)
    emb_ln_b = jnp.zeros((HIDDEN,), jnp.float32)

    wq = w(ks[3], LAYERS, HIDDEN, HIDDEN)
    wk = w(ks[4], LAYERS, HIDDEN, HIDDEN)
    wv = w(ks[5], LAYERS, HIDDEN, HIDDEN)
    wo = w(ks[6], LAYERS, HIDDEN, HIDDEN)
    w1 = w(ks[7], LAYERS, HIDDEN, INTERMEDIATE)
    w2 = w(ks[8], LAYERS, INTERMEDIATE, HIDDEN)
    zeros_h = jnp.zeros((LAYERS, HIDDEN), jnp.float32)
    zeros_i = jnp.zeros((LAYERS, INTERMEDIATE), jnp.float32)
    ones_h = jnp.ones((LAYERS, HIDDEN), jnp.float32)
    bq, bk, bv, bo, b1, b2 = zeros_h, zeros_h, zeros_h, zeros_h, zeros_i, zeros_h
    ln1_g, ln1_b, ln2_g, ln2_b = ones_h, zeros_h, ones_h, zeros_h

    pooler_w = w(ks[9], HIDDEN, HIDDEN)
    pooler_b = jnp.zeros((HIDDEN,), jnp.float32)
    cls_w = w(ks[10], HIDDEN, N_CLASSES)
    cls_b = jnp.zeros((N_CLASSES,), jnp.float32)

    # --- packed kernel layout (one-time; per-forward launch count stays 1) ---
    # 1) embedding table: [word rows | pad-to-8 | pos+type0 rows]
    emb_tab = jnp.concatenate([
        word_emb,
        jnp.zeros((VOCAB_PAD - VOCAB, HIDDEN), jnp.float32),
        pos_emb + type_emb[0][None, :],
    ], axis=0)                                                     # (VOCAB_PAD+MAX_POS, H)

    # 2) attention weights: per layer [Wq | Wk | Wv | Wo], each 128-lane aligned
    w_attn = jnp.stack([
        jnp.concatenate([_pad_lanes(wq[l]), _pad_lanes(wk[l]),
                         _pad_lanes(wv[l]), _pad_lanes(wo[l])], axis=1)
        for l in range(LAYERS)
    ])                                                             # (L, H, 4*128)

    # 3) FFN weights: per layer rows [W1 ; W2], lanes 0-padded to 128
    w_ffn = jnp.stack([
        jnp.concatenate([_pad_lanes(w1[l]), _pad_lanes(w2[l])], axis=0)
        for l in range(LAYERS)
    ])                                                             # (L, H+I, 128)

    # 4) small-params slab: one 128-lane row per bias/LN vector, then pooler/cls W
    rows = [_row(emb_ln_g), _row(emb_ln_b)]
    for l in range(LAYERS):
        rows += [_row(bq[l]), _row(bk[l]), _row(bv[l]), _row(bo[l]),
                 _row(ln1_g[l]), _row(ln1_b[l]), _row(b1[l]), _row(b2[l]),
                 _row(ln2_g[l]), _row(ln2_b[l])]
    rows += [_row(pooler_b), _row(cls_b)]
    slab = jnp.concatenate(rows + [_pad_lanes(pooler_w), _pad_lanes(cls_w)], axis=0)
    # shape: (2 + 10*L + 2 + 2*H, 128) = (88, 128)

    return {"emb_tab": emb_tab, "w_attn": w_attn, "w_ffn": w_ffn, "slab": slab}


# ----------------------------------------------------------------------------
# Forward pass: ONE fused Pallas kernel (gather + encoder + pooler + head)
# ----------------------------------------------------------------------------
def sentiment_classifier_forward(params, input_ids, attention_mask):
    B, S = input_ids.shape

    kernel = functools.partial(
        _fused_forward_kernel,
        batch=B, seq=S, hidden=HIDDEN, heads=HEADS, head_dim=HEAD_DIM,
        inter=INTERMEDIATE, layers=LAYERS, pos_off=VOCAB_PAD,
        scale=1.0 / math.sqrt(HEAD_DIM), eps=LN_EPS,
    )

    # TODO(synk): at real BERT sizes switch to an (M,N,K)-tiled grid with bf16
    # MXU operands / f32 VMEM accumulators (256-wide tiles on v6e/v7x, 128-wide
    # f32-friendly tiles on v5e), re-derive block sizes for v7x's 64 MiB VMEM,
    # and add a batch-parallel leading grid axis to feed v7x's second TensorCore.
    logits_pad = pl.pallas_call(
        kernel,
        out_shape=jax.ShapeDtypeStruct((B, 128), jnp.float32),      # lane-dense
        in_specs=[
            pl.BlockSpec(memory_space=pltpu.MemorySpace.SMEM),      # input_ids
            pl.BlockSpec(memory_space=pltpu.MemorySpace.VMEM),      # attention_mask
            pl.BlockSpec(memory_space=pltpu.MemorySpace.VMEM),      # emb_tab
            pl.BlockSpec(memory_space=pltpu.MemorySpace.VMEM),      # w_attn
            pl.BlockSpec(memory_space=pltpu.MemorySpace.VMEM),      # w_ffn
            pl.BlockSpec(memory_space=pltpu.MemorySpace.VMEM),      # slab
        ],
        out_specs=pl.BlockSpec(memory_space=pltpu.MemorySpace.VMEM),
    )(input_ids.astype(jnp.int32), attention_mask.astype(jnp.int32),
      params["emb_tab"], params["w_attn"], params["w_ffn"], params["slab"])

    return logits_pad[:, :N_CLASSES]


# ----------------------------------------------------------------------------
if __name__ == "__main__":
    key = jax.random.PRNGKey(0)
    k_param, k_ids = jax.random.split(key)

    params = init_params(k_param)

    B, S = 2, 8
    input_ids = jax.random.randint(k_ids, (B, S), 0, VOCAB, dtype=jnp.int32)
    attention_mask = jnp.ones((B, S), jnp.int32).at[1, 6:].set(0)

    fwd = jax.jit(sentiment_classifier_forward)
    logits = jax.block_until_ready(fwd(params, input_ids, attention_mask))

    assert logits.shape == (B, N_CLASSES)
    assert bool(jnp.all(jnp.isfinite(logits)))
    print("KERNEL_OK")
</pallas_src>

<mosaic_0001>
module attributes {stable_mosaic.version = 11 : i64} {
  func.func @_fused_forward_kernel(%arg0: memref<2x8xi32, #tpu.memory_space<smem>>, %arg1: memref<2x8xi32, #tpu.memory_space<vmem>>, %arg2: memref<120x32xf32, #tpu.memory_space<vmem>>, %arg3: memref<2x32x512xf32, #tpu.memory_space<vmem>>, %arg4: memref<2x96x128xf32, #tpu.memory_space<vmem>>, %arg5: memref<88x128xf32, #tpu.memory_space<vmem>>, %arg6: memref<2x128xf32, #tpu.memory_space<vmem>>) attributes {dimension_semantics = [], scalar_prefetch = 0 : i64, scratch_operands = 0 : i64, tpu.core_type = #tpu.core_type<tc>} {
    %c0 = arith.constant 0 : index
    %c0_0 = arith.constant 0 : index
    %0 = memref.load %arg0[%c0, %c0_0] : memref<2x8xi32, #tpu.memory_space<smem>>
    %1 = arith.index_cast %0 : i32 to index
    %c0_1 = arith.constant 0 : index
    %2 = vector.load %arg2[%1, %c0_1] : memref<120x32xf32, #tpu.memory_space<vmem>>, vector<1x32xf32>
    %c0_2 = arith.constant 0 : index
    %c1 = arith.constant 1 : index
    %3 = memref.load %arg0[%c0_2, %c1] : memref<2x8xi32, #tpu.memory_space<smem>>
    %4 = arith.index_cast %3 : i32 to index
    %c0_3 = arith.constant 0 : index
    %5 = vector.load %arg2[%4, %c0_3] : memref<120x32xf32, #tpu.memory_space<vmem>>, vector<1x32xf32>
    %c0_4 = arith.constant 0 : index
    %c2 = arith.constant 2 : index
    %6 = memref.load %arg0[%c0_4, %c2] : memref<2x8xi32, #tpu.memory_space<smem>>
    %7 = arith.index_cast %6 : i32 to index
    %c0_5 = arith.constant 0 : index
    %8 = vector.load %arg2[%7, %c0_5] : memref<120x32xf32, #tpu.memory_space<vmem>>, vector<1x32xf32>
    %c0_6 = arith.constant 0 : index
    %c3 = arith.constant 3 : index
    %9 = memref.load %arg0[%c0_6, %c3] : memref<2x8xi32, #tpu.memory_space<smem>>
    %10 = arith.index_cast %9 : i32 to index
    %c0_7 = arith.constant 0 : index
    %11 = vector.load %arg2[%10, %c0_7] : memref<120x32xf32, #tpu.memory_space<vmem>>, vector<1x32xf32>
    %c0_8 = arith.constant 0 : index
    %c4 = arith.constant 4 : index
    %12 = memref.load %arg0[%c0_8, %c4] : memref<2x8xi32, #tpu.memory_space<smem>>
    %13 = arith.index_cast %12 : i32 to index
    %c0_9 = arith.constant 0 : index
    %14 = vector.load %arg2[%13, %c0_9] : memref<120x32xf32, #tpu.memory_space<vmem>>, vector<1x32xf32>
    %c0_10 = arith.constant 0 : index
    %c5 = arith.constant 5 : index
    %15 = memref.load %arg0[%c0_10, %c5] : memref<2x8xi32, #tpu.memory_space<smem>>
    %16 = arith.index_cast %15 : i32 to index
    %c0_11 = arith.constant 0 : index
    %17 = vector.load %arg2[%16, %c0_11] : memref<120x32xf32, #tpu.memory_space<vmem>>, vector<1x32xf32>
    %c0_12 = arith.constant 0 : index
    %c6 = arith.constant 6 : index
    %18 = memref.load %arg0[%c0_12, %c6] : memref<2x8xi32, #tpu.memory_space<smem>>
    %19 = arith.index_cast %18 : i32 to index
    %c0_13 = arith.constant 0 : index
    %20 = vector.load %arg2[%19, %c0_13] : memref<120x32xf32, #tpu.memory_space<vmem>>, vector<1x32xf32>
    %c0_14 = arith.constant 0 : index
    %c7 = arith.constant 7 : index
    %21 = memref.load %arg0[%c0_14, %c7] : memref<2x8xi32, #tpu.memory_space<smem>>
    %22 = arith.index_cast %21 : i32 to index
    %c0_15 = arith.constant 0 : index
    %23 = vector.load %arg2[%22, %c0_15] : memref<120x32xf32, #tpu.memory_space<vmem>>, vector<1x32xf32>
    %c1_16 = arith.constant 1 : index
    %c0_17 = arith.constant 0 : index
    %24 = memref.load %arg0[%c1_16, %c0_17] : memref<2x8xi32, #tpu.memory_space<smem>>
    %25 = arith.index_cast %24 : i32 to index
    %c0_18 = arith.constant 0 : index
    %26 = vector.load %arg2[%25, %c0_18] : memref<120x32xf32, #tpu.memory_space<vmem>>, vector<1x32xf32>
    %c1_19 = arith.constant 1 : index
    %c1_20 = arith.constant 1 : index
    %27 = memref.load %arg0[%c1_19, %c1_20] : memref<2x8xi32, #tpu.memory_space<smem>>
    %28 = arith.index_cast %27 : i32 to index
    %c0_21 = arith.constant 0 : index
    %29 = vector.load %arg2[%28, %c0_21] : memref<120x32xf32, #tpu.memory_space<vmem>>, vector<1x32xf32>
    %c1_22 = arith.constant 1 : index
    %c2_23 = arith.constant 2 : index
    %30 = memref.load %arg0[%c1_22, %c2_23] : memref<2x8xi32, #tpu.memory_space<smem>>
    %31 = arith.index_cast %30 : i32 to index
    %c0_24 = arith.constant 0 : index
    %32 = vector.load %arg2[%31, %c0_24] : memref<120x32xf32, #tpu.memory_space<vmem>>, vector<1x32xf32>
    %c1_25 = arith.constant 1 : index
    %c3_26 = arith.constant 3 : index
    %33 = memref.load %arg0[%c1_25, %c3_26] : memref<2x8xi32, #tpu.memory_space<smem>>
    %34 = arith.index_cast %33 : i32 to index
    %c0_27 = arith.constant 0 : index
    %35 = vector.load %arg2[%34, %c0_27] : memref<120x32xf32, #tpu.memory_space<vmem>>, vector<1x32xf32>
    %c1_28 = arith.constant 1 : index
    %c4_29 = arith.constant 4 : index
    %36 = memref.load %arg0[%c1_28, %c4_29] : memref<2x8xi32, #tpu.memory_space<smem>>
    %37 = arith.index_cast %36 : i32 to index
    %c0_30 = arith.constant 0 : index
    %38 = vector.load %arg2[%37, %c0_30] : memref<120x32xf32, #tpu.memory_space<vmem>>, vector<1x32xf32>
    %c1_31 = arith.constant 1 : index
    %c5_32 = arith.constant 5 : index
    %39 = memref.load %arg0[%c1_31, %c5_32] : memref<2x8xi32, #tpu.memory_space<smem>>
    %40 = arith.index_cast %39 : i32 to index
    %c0_33 = arith.constant 0 : index
    %41 = vector.load %arg2[%40, %c0_33] : memref<120x32xf32, #tpu.memory_space<vmem>>, vector<1x32xf32>
    %c1_34 = arith.constant 1 : index
    %c6_35 = arith.constant 6 : index
    %42 = memref.load %arg0[%c1_34, %c6_35] : memref<2x8xi32, #tpu.memory_space<smem>>
    %43 = arith.index_cast %42 : i32 to index
    %c0_36 = arith.constant 0 : index
    %44 = vector.load %arg2[%43, %c0_36] : memref<120x32xf32, #tpu.memory_space<vmem>>, vector<1x32xf32>
    %c1_37 = arith.constant 1 : index
    %c7_38 = arith.constant 7 : index
    %45 = memref.load %arg0[%c1_37, %c7_38] : memref<2x8xi32, #tpu.memory_space<smem>>
    %46 = arith.index_cast %45 : i32 to index
    %c0_39 = arith.constant 0 : index
    %47 = vector.load %arg2[%46, %c0_39] : memref<120x32xf32, #tpu.memory_space<vmem>>, vector<1x32xf32>
    %48 = tpu.concatenate %2, %5, %8, %11, %14, %17, %20, %23, %26, %29, %32, %35, %38, %41, %44, %47 in 0 : vector<1x32xf32>, vector<1x32xf32>, vector<1x32xf32>, vector<1x32xf32>, vector<1x32xf32>, vector<1x32xf32>, vector<1x32xf32>, vector<1x32xf32>, vector<1x32xf32>, vector<1x32xf32>, vector<1x32xf32>, vector<1x32xf32>, vector<1x32xf32>, vector<1x32xf32>, vector<1x32xf32>, vector<1x32xf32> -> vector<16x32xf32>
    %c104 = arith.constant 104 : index
    %c0_40 = arith.constant 0 : index
    %49 = vector.load %arg2[%c104, %c0_40] : memref<120x32xf32, #tpu.memory_space<vmem>>, vector<8x32xf32>
    %50 = vector.shape_cast %48 : vector<16x32xf32> to vector<2x8x32xf32>
    %51 = vector.shape_cast %49 : vector<8x32xf32> to vector<1x8x32xf32>
    %52 = vector.broadcast %51 : vector<1x8x32xf32> to vector<2x8x32xf32>
    %53 = arith.addf %50, %52 : vector<2x8x32xf32>
    %54 = vector.shape_cast %53 : vector<2x8x32xf32> to vector<16x32xf32>
    %c0_41 = arith.constant 0 : index
    %c0_42 = arith.constant 0 : index
    %55 = vector.load %arg5[%c0_41, %c0_42] : memref<88x128xf32, #tpu.memory_space<vmem>>, vector<1x32xf32>
    %c1_43 = arith.constant 1 : index
    %c0_44 = arith.constant 0 : index
    %56 = vector.load %arg5[%c1_43, %c0_44] : memref<88x128xf32, #tpu.memory_space<vmem>>, vector<1x32xf32>
    %cst = arith.constant dense<0.000000e+00> : vector<16xf32>
    %57 = vector.multi_reduction <add>, %54, %cst [1] : vector<16x32xf32> to vector<16xf32>
    %58 = vector.shape_cast %57 : vector<16xf32> to vector<16x1xf32>
    %cst_45 = arith.constant 3.200000e+01 : f32
    %59 = vector.broadcast %cst_45 : f32 to vector<16x1xf32>
    %60 = arith.divf %58, %59 : vector<16x1xf32>
    %61 = vector.broadcast %60 : vector<16x1xf32> to vector<16x32xf32>
    %62 = arith.subf %54, %61 : vector<16x32xf32>
    %63 = arith.mulf %62, %62 : vector<16x32xf32>
    %cst_46 = arith.constant dense<0.000000e+00> : vector<16xf32>
    %64 = vector.multi_reduction <add>, %63, %cst_46 [1] : vector<16x32xf32> to vector<16xf32>
    %65 = vector.shape_cast %64 : vector<16xf32> to vector<16x1xf32>
    %cst_47 = arith.constant 3.200000e+01 : f32
    %66 = vector.broadcast %cst_47 : f32 to vector<16x1xf32>
    %67 = arith.divf %65, %66 : vector<16x1xf32>
    %68 = vector.broadcast %60 : vector<16x1xf32> to vector<16x32xf32>
    %69 = arith.subf %54, %68 : vector<16x32xf32>
    %cst_48 = arith.constant 9.99999996E-13 : f32
    %70 = vector.broadcast %cst_48 : f32 to vector<16x1xf32>
    %71 = arith.addf %67, %70 : vector<16x1xf32>
    %72 = math.rsqrt %71 : vector<16x1xf32>
    %73 = vector.broadcast %72 : vector<16x1xf32> to vector<16x32xf32>
    %74 = arith.mulf %69, %73 : vector<16x32xf32>
    %75 = vector.broadcast %55 : vector<1x32xf32> to vector<16x32xf32>
    %76 = arith.mulf %74, %75 : vector<16x32xf32>
    %77 = vector.broadcast %56 : vector<1x32xf32> to vector<16x32xf32>
    %78 = arith.addf %76, %77 : vector<16x32xf32>
    %c0_49 = arith.constant 0 : index
    %c0_50 = arith.constant 0 : index
    %79 = vector.load %arg1[%c0_49, %c0_50] : memref<2x8xi32, #tpu.memory_space<vmem>>, vector<2x8xi32>
    %80 = arith.sitofp %79 : vector<2x8xi32> to vector<2x8xf32>
    %cst_51 = arith.constant 1.000000e+00 : f32
    %81 = vector.broadcast %cst_51 : f32 to vector<2x8xf32>
    %82 = arith.subf %81, %80 : vector<2x8xf32>
    %cst_52 = arith.constant -1.000000e+04 : f32
    %83 = vector.broadcast %cst_52 : f32 to vector<2x8xf32>
    %84 = arith.mulf %82, %83 : vector<2x8xf32>
    %85 = vector.shape_cast %84 : vector<2x8xf32> to vector<2x1x8xf32>
    %86 = vector.shape_cast %85 : vector<2x1x8xf32> to vector<2x1x8xf32>
    %87 = vector.broadcast %86 : vector<2x1x8xf32> to vector<2x8x8xf32>
    %c0_53 = arith.constant 0 : index
    %c0_54 = arith.constant 0 : index
    %c0_55 = arith.constant 0 : index
    %88 = vector.load %arg3[%c0_53, %c0_54, %c0_55] : memref<2x32x512xf32, #tpu.memory_space<vmem>>, vector<1x32x512xf32>
    %89 = vector.shape_cast %88 : vector<1x32x512xf32> to vector<32x512xf32>
    %90 = vector.extract_strided_slice %89 {offsets = [0, 0], sizes = [32, 384], strides = [1, 1]} : vector<32x512xf32> to vector<32x384xf32>
    %cst_56 = arith.constant dense<0.000000e+00> : vector<16x384xf32>
    %91 = tpu.matmul %78, %90, %cst_56 {dimension_numbers = #tpu.dot_dimension_numbers<[1], [0], [0], [1], [0, 0, 1, 1], [], []>} : vector<16x32xf32>, vector<32x384xf32>, vector<16x384xf32> -> vector<16x384xf32>
    %92 = vector.extract_strided_slice %91 {offsets = [0, 0], sizes = [16, 32], strides = [1, 1]} : vector<16x384xf32> to vector<16x32xf32>
    %c2_57 = arith.constant 2 : index
    %c0_58 = arith.constant 0 : index
    %93 = vector.load %arg5[%c2_57, %c0_58] : memref<88x128xf32, #tpu.memory_space<vmem>>, vector<1x32xf32>
    %94 = vector.broadcast %93 : vector<1x32xf32> to vector<16x32xf32>
    %95 = arith.addf %92, %94 : vector<16x32xf32>
    %96 = vector.extract_strided_slice %91 {offsets = [0, 128], sizes = [16, 32], strides = [1, 1]} : vector<16x384xf32> to vector<16x32xf32>
    %c3_59 = arith.constant 3 : index
    %c0_60 = arith.constant 0 : index
    %97 = vector.load %arg5[%c3_59, %c0_60] : memref<88x128xf32, #tpu.memory_space<vmem>>, vector<1x32xf32>
    %98 = vector.broadcast %97 : vector<1x32xf32> to vector<16x32xf32>
    %99 = arith.addf %96, %98 : vector<16x32xf32>
    %100 = vector.extract_strided_slice %91 {offsets = [0, 256], sizes = [16, 32], strides = [1, 1]} : vector<16x384xf32> to vector<16x32xf32>
    %c4_61 = arith.constant 4 : index
    %c0_62 = arith.constant 0 : index
    %101 = vector.load %arg5[%c4_61, %c0_62] : memref<88x128xf32, #tpu.memory_space<vmem>>, vector<1x32xf32>
    %102 = vector.broadcast %101 : vector<1x32xf32> to vector<16x32xf32>
    %103 = arith.addf %100, %102 : vector<16x32xf32>
    %104 = vector.extract_strided_slice %95 {offsets = [0, 0], sizes = [16, 16], strides = [1, 1]} : vector<16x32xf32> to vector<16x16xf32>
    %105 = vector.shape_cast %104 : vector<16x16xf32> to vector<2x8x16xf32>
    %106 = vector.extract_strided_slice %99 {offsets = [0, 0], sizes = [16, 16], strides = [1, 1]} : vector<16x32xf32> to vector<16x16xf32>
    %107 = vector.shape_cast %106 : vector<16x16xf32> to vector<2x8x16xf32>
    %108 = vector.extract_strided_slice %103 {offsets = [0, 0], sizes = [16, 16], strides = [1, 1]} : vector<16x32xf32> to vector<16x16xf32>
    %109 = vector.shape_cast %108 : vector<16x16xf32> to vector<2x8x16xf32>
    %cst_63 = arith.constant dense<0.000000e+00> : vector<2x8x8xf32>
    %110 = tpu.matmul %105, %107, %cst_63 {dimension_numbers = #tpu.dot_dimension_numbers<[2], [2], [1], [1], [0, 0, 0, 1, 1, 1], [0], [0]>} : vector<2x8x16xf32>, vector<2x8x16xf32>, vector<2x8x8xf32> -> vector<2x8x8xf32>
    %cst_64 = arith.constant 2.500000e-01 : f32
    %111 = vector.broadcast %cst_64 : f32 to vector<2x8x8xf32>
    %112 = arith.mulf %110, %111 : vector<2x8x8xf32>
    %113 = arith.addf %112, %87 : vector<2x8x8xf32>
    %cst_65 = arith.constant dense<0xFF800000> : vector<2x8xf32>
    %114 = vector.multi_reduction <maximumf>, %113, %cst_65 [2] : vector<2x8x8xf32> to vector<2x8xf32>
    %115 = vector.shape_cast %114 : vector<2x8xf32> to vector<2x8x1xf32>
    %116 = vector.broadcast %115 : vector<2x8x1xf32> to vector<2x8x8xf32>
    %117 = arith.subf %113, %116 : vector<2x8x8xf32>
    %118 = math.exp %117 : vector<2x8x8xf32>
    %cst_66 = arith.constant dense<0.000000e+00> : vector<2x8xf32>
    %119 = vector.multi_reduction <add>, %118, %cst_66 [2] : vector<2x8x8xf32> to vector<2x8xf32>
    %120 = vector.shape_cast %119 : vector<2x8xf32> to vector<2x8x1xf32>
    %121 = tpu.reciprocal %120 {approx = true} : vector<2x8x1xf32> -> vector<2x8x1xf32>
    %122 = vector.broadcast %121 : vector<2x8x1xf32> to vector<2x8x8xf32>
    %123 = arith.mulf %118, %122 : vector<2x8x8xf32>
    %cst_67 = arith.constant dense<0.000000e+00> : vector<2x8x16xf32>
    %124 = tpu.matmul %123, %109, %cst_67 {dimension_numbers = #tpu.dot_dimension_numbers<[2], [1], [1], [2], [0, 0, 0, 1, 1, 2], [0], [0]>} : vector<2x8x8xf32>, vector<2x8x16xf32>, vector<2x8x16xf32> -> vector<2x8x16xf32>
    %125 = vector.extract_strided_slice %95 {offsets = [0, 16], sizes = [16, 16], strides = [1, 1]} : vector<16x32xf32> to vector<16x16xf32>
    %126 = vector.shape_cast %125 : vector<16x16xf32> to vector<2x8x16xf32>
    %127 = vector.extract_strided_slice %99 {offsets = [0, 16], sizes = [16, 16], strides = [1, 1]} : vector<16x32xf32> to vector<16x16xf32>
    %128 = vector.shape_cast %127 : vector<16x16xf32> to vector<2x8x16xf32>
    %129 = vector.extract_strided_slice %103 {offsets = [0, 16], sizes = [16, 16], strides = [1, 1]} : vector<16x32xf32> to vector<16x16xf32>
    %130 = vector.shape_cast %129 : vector<16x16xf32> to vector<2x8x16xf32>
    %cst_68 = arith.constant dense<0.000000e+00> : vector<2x8x8xf32>
    %131 = tpu.matmul %126, %128, %cst_68 {dimension_numbers = #tpu.dot_dimension_numbers<[2], [2], [1], [1], [0, 0, 0, 1, 1, 1], [0], [0]>} : vector<2x8x16xf32>, vector<2x8x16xf32>, vector<2x8x8xf32> -> vector<2x8x8xf32>
    %cst_69 = arith.constant 2.500000e-01 : f32
    %132 = vector.broadcast %cst_69 : f32 to vector<2x8x8xf32>
    %133 = arith.mulf %131, %132 : vector<2x8x8xf32>
    %134 = arith.addf %133, %87 : vector<2x8x8xf32>
    %cst_70 = arith.constant dense<0xFF800000> : vector<2x8xf32>
    %135 = vector.multi_reduction <maximumf>, %134, %cst_70 [2] : vector<2x8x8xf32> to vector<2x8xf32>
    %136 = vector.shape_cast %135 : vector<2x8xf32> to vector<2x8x1xf32>
    %137 = vector.broadcast %136 : vector<2x8x1xf32> to vector<2x8x8xf32>
    %138 = arith.subf %134, %137 : vector<2x8x8xf32>
    %139 = math.exp %138 : vector<2x8x8xf32>
    %cst_71 = arith.constant dense<0.000000e+00> : vector<2x8xf32>
    %140 = vector.multi_reduction <add>, %139, %cst_71 [2] : vector<2x8x8xf32> to vector<2x8xf32>
    %141 = vector.shape_cast %140 : vector<2x8xf32> to vector<2x8x1xf32>
    %142 = tpu.reciprocal %141 {approx = true} : vector<2x8x1xf32> -> vector<2x8x1xf32>
    %143 = vector.broadcast %142 : vector<2x8x1xf32> to vector<2x8x8xf32>
    %144 = arith.mulf %139, %143 : vector<2x8x8xf32>
    %cst_72 = arith.constant dense<0.000000e+00> : vector<2x8x16xf32>
    %145 = tpu.matmul %144, %130, %cst_72 {dimension_numbers = #tpu.dot_dimension_numbers<[2], [1], [1], [2], [0, 0, 0, 1, 1, 2], [0], [0]>} : vector<2x8x8xf32>, vector<2x8x16xf32>, vector<2x8x16xf32> -> vector<2x8x16xf32>
    %146 = tpu.concatenate %124, %145 in 2 : vector<2x8x16xf32>, vector<2x8x16xf32> -> vector<2x8x32xf32>
    %147 = vector.shape_cast %146 : vector<2x8x32xf32> to vector<16x32xf32>
    %148 = vector.extract_strided_slice %89 {offsets = [0, 384], sizes = [32, 32], strides = [1, 1]} : vector<32x512xf32> to vector<32x32xf32>
    %cst_73 = arith.constant dense<0.000000e+00> : vector<16x32xf32>
    %149 = tpu.matmul %147, %148, %cst_73 {dimension_numbers = #tpu.dot_dimension_numbers<[1], [0], [0], [1], [0, 0, 1, 1], [], []>} : vector<16x32xf32>, vector<32x32xf32>, vector<16x32xf32> -> vector<16x32xf32>
    %c5_74 = arith.constant 5 : index
    %c0_75 = arith.constant 0 : index
    %150 = vector.load %arg5[%c5_74, %c0_75] : memref<88x128xf32, #tpu.memory_space<vmem>>, vector<1x32xf32>
    %151 = vector.broadcast %150 : vector<1x32xf32> to vector<16x32xf32>
    %152 = arith.addf %149, %151 : vector<16x32xf32>
    %153 = arith.addf %78, %152 : vector<16x32xf32>
    %c6_76 = arith.constant 6 : index
    %c0_77 = arith.constant 0 : index
    %154 = vector.load %arg5[%c6_76, %c0_77] : memref<88x128xf32, #tpu.memory_space<vmem>>, vector<1x32xf32>
    %c7_78 = arith.constant 7 : index
    %c0_79 = arith.constant 0 : index
    %155 = vector.load %arg5[%c7_78, %c0_79] : memref<88x128xf32, #tpu.memory_space<vmem>>, vector<1x32xf32>
    %cst_80 = arith.constant dense<0.000000e+00> : vector<16xf32>
    %156 = vector.multi_reduction <add>, %153, %cst_80 [1] : vector<16x32xf32> to vector<16xf32>
    %157 = vector.shape_cast %156 : vector<16xf32> to vector<16x1xf32>
    %cst_81 = arith.constant 3.200000e+01 : f32
    %158 = vector.broadcast %cst_81 : f32 to vector<16x1xf32>
    %159 = arith.divf %157, %158 : vector<16x1xf32>
    %160 = vector.broadcast %159 : vector<16x1xf32> to vector<16x32xf32>
    %161 = arith.subf %153, %160 : vector<16x32xf32>
    %162 = arith.mulf %161, %161 : vector<16x32xf32>
    %cst_82 = arith.constant dense<0.000000e+00> : vector<16xf32>
    %163 = vector.multi_reduction <add>, %162, %cst_82 [1] : vector<16x32xf32> to vector<16xf32>
    %164 = vector.shape_cast %163 : vector<16xf32> to vector<16x1xf32>
    %cst_83 = arith.constant 3.200000e+01 : f32
    %165 = vector.broadcast %cst_83 : f32 to vector<16x1xf32>
    %166 = arith.divf %164, %165 : vector<16x1xf32>
    %167 = vector.broadcast %159 : vector<16x1xf32> to vector<16x32xf32>
    %168 = arith.subf %153, %167 : vector<16x32xf32>
    %cst_84 = arith.constant 9.99999996E-13 : f32
    %169 = vector.broadcast %cst_84 : f32 to vector<16x1xf32>
    %170 = arith.addf %166, %169 : vector<16x1xf32>
    %171 = math.rsqrt %170 : vector<16x1xf32>
    %172 = vector.broadcast %171 : vector<16x1xf32> to vector<16x32xf32>
    %173 = arith.mulf %168, %172 : vector<16x32xf32>
    %174 = vector.broadcast %154 : vector<1x32xf32> to vector<16x32xf32>
    %175 = arith.mulf %173, %174 : vector<16x32xf32>
    %176 = vector.broadcast %155 : vector<1x32xf32> to vector<16x32xf32>
    %177 = arith.addf %175, %176 : vector<16x32xf32>
    %c0_85 = arith.constant 0 : index
    %c0_86 = arith.constant 0 : index
    %c0_87 = arith.constant 0 : index
    %178 = vector.load %arg4[%c0_85, %c0_86, %c0_87] : memref<2x96x128xf32, #tpu.memory_space<vmem>>, vector<1x96x128xf32>
    %179 = vector.shape_cast %178 : vector<1x96x128xf32> to vector<96x128xf32>
    %180 = vector.extract_strided_slice %179 {offsets = [0, 0], sizes = [32, 64], strides = [1, 1]} : vector<96x128xf32> to vector<32x64xf32>
    %cst_88 = arith.constant dense<0.000000e+00> : vector<16x64xf32>
    %181 = tpu.matmul %177, %180, %cst_88 {dimension_numbers = #tpu.dot_dimension_numbers<[1], [0], [0], [1], [0, 0, 1, 1], [], []>} : vector<16x32xf32>, vector<32x64xf32>, vector<16x64xf32> -> vector<16x64xf32>
    %c8 = arith.constant 8 : index
    %c0_89 = arith.constant 0 : index
    %182 = vector.load %arg5[%c8, %c0_89] : memref<88x128xf32, #tpu.memory_space<vmem>>, vector<1x64xf32>
    %183 = vector.broadcast %182 : vector<1x64xf32> to vector<16x64xf32>
    %184 = arith.addf %181, %183 : vector<16x64xf32>
    %cst_90 = arith.constant 5.000000e-01 : f32
    %185 = vector.broadcast %cst_90 : f32 to vector<16x64xf32>
    %186 = arith.mulf %185, %184 : vector<16x64xf32>
    %cst_91 = arith.constant 4.471500e-02 : f32
    %187 = vector.broadcast %cst_91 : f32 to vector<16x64xf32>
    %188 = arith.mulf %187, %184 : vector<16x64xf32>
    %189 = arith.mulf %188, %184 : vector<16x64xf32>
    %190 = arith.mulf %189, %184 : vector<16x64xf32>
    %191 = arith.addf %184, %190 : vector<16x64xf32>
    %cst_92 = arith.constant 0.797884583 : f32
    %192 = vector.broadcast %cst_92 : f32 to vector<16x64xf32>
    %193 = arith.mulf %192, %191 : vector<16x64xf32>
    %194 = math.tanh %193 : vector<16x64xf32>
    %cst_93 = arith.constant 1.000000e+00 : f32
    %195 = vector.broadcast %cst_93 : f32 to vector<16x64xf32>
    %196 = arith.addf %195, %194 : vector<16x64xf32>
    %197 = arith.mulf %186, %196 : vector<16x64xf32>
    %198 = vector.extract_strided_slice %179 {offsets = [32, 0], sizes = [64, 32], strides = [1, 1]} : vector<96x128xf32> to vector<64x32xf32>
    %cst_94 = arith.constant dense<0.000000e+00> : vector<16x32xf32>
    %199 = tpu.matmul %197, %198, %cst_94 {dimension_numbers = #tpu.dot_dimension_numbers<[1], [0], [0], [1], [0, 0, 1, 1], [], []>} : vector<16x64xf32>, vector<64x32xf32>, vector<16x32xf32> -> vector<16x32xf32>
    %c9 = arith.constant 9 : index
    %c0_95 = arith.constant 0 : index
    %200 = vector.load %arg5[%c9, %c0_95] : memref<88x128xf32, #tpu.memory_space<vmem>>, vector<1x32xf32>
    %201 = vector.broadcast %200 : vector<1x32xf32> to vector<16x32xf32>
    %202 = arith.addf %199, %201 : vector<16x32xf32>
    %203 = arith.addf %177, %202 : vector<16x32xf32>
    %c10 = arith.constant 10 : index
    %c0_96 = arith.constant 0 : index
    %204 = vector.load %arg5[%c10, %c0_96] : memref<88x128xf32, #tpu.memory_space<vmem>>, vector<1x32xf32>
    %c11 = arith.constant 11 : index
    %c0_97 = arith.constant 0 : index
    %205 = vector.load %arg5[%c11, %c0_97] : memref<88x128xf32, #tpu.memory_space<vmem>>, vector<1x32xf32>
    %cst_98 = arith.constant dense<0.000000e+00> : vector<16xf32>
    %206 = vector.multi_reduction <add>, %203, %cst_98 [1] : vector<16x32xf32> to vector<16xf32>
    %207 = vector.shape_cast %206 : vector<16xf32> to vector<16x1xf32>
    %cst_99 = arith.constant 3.200000e+01 : f32
    %208 = vector.broadcast %cst_99 : f32 to vector<16x1xf32>
    %209 = arith.divf %207, %208 : vector<16x1xf32>
    %210 = vector.broadcast %209 : vector<16x1xf32> to vector<16x32xf32>
    %211 = arith.subf %203, %210 : vector<16x32xf32>
    %212 = arith.mulf %211, %211 : vector<16x32xf32>
    %cst_100 = arith.constant dense<0.000000e+00> : vector<16xf32>
    %213 = vector.multi_reduction <add>, %212, %cst_100 [1] : vector<16x32xf32> to vector<16xf32>
    %214 = vector.shape_cast %213 : vector<16xf32> to vector<16x1xf32>
    %cst_101 = arith.constant 3.200000e+01 : f32
    %215 = vector.broadcast %cst_101 : f32 to vector<16x1xf32>
    %216 = arith.divf %214, %215 : vector<16x1xf32>
    %217 = vector.broadcast %209 : vector<16x1xf32> to vector<16x32xf32>
    %218 = arith.subf %203, %217 : vector<16x32xf32>
    %cst_102 = arith.constant 9.99999996E-13 : f32
    %219 = vector.broadcast %cst_102 : f32 to vector<16x1xf32>
    %220 = arith.addf %216, %219 : vector<16x1xf32>
    %221 = math.rsqrt %220 : vector<16x1xf32>
    %222 = vector.broadcast %221 : vector<16x1xf32> to vector<16x32xf32>
    %223 = arith.mulf %218, %222 : vector<16x32xf32>
    %224 = vector.broadcast %204 : vector<1x32xf32> to vector<16x32xf32>
    %225 = arith.mulf %223, %224 : vector<16x32xf32>
    %226 = vector.broadcast %205 : vector<1x32xf32> to vector<16x32xf32>
    %227 = arith.addf %225, %226 : vector<16x32xf32>
    %c1_103 = arith.constant 1 : index
    %c0_104 = arith.constant 0 : index
    %c0_105 = arith.constant 0 : index
    %228 = vector.load %arg3[%c1_103, %c0_104, %c0_105] : memref<2x32x512xf32, #tpu.memory_space<vmem>>, vector<1x32x512xf32>
    %229 = vector.shape_cast %228 : vector<1x32x512xf32> to vector<32x512xf32>
    %230 = vector.extract_strided_slice %229 {offsets = [0, 0], sizes = [32, 384], strides = [1, 1]} : vector<32x512xf32> to vector<32x384xf32>
    %cst_106 = arith.constant dense<0.000000e+00> : vector<16x384xf32>
    %231 = tpu.matmul %227, %230, %cst_106 {dimension_numbers = #tpu.dot_dimension_numbers<[1], [0], [0], [1], [0, 0, 1, 1], [], []>} : vector<16x32xf32>, vector<32x384xf32>, vector<16x384xf32> -> vector<16x384xf32>
    %232 = vector.extract_strided_slice %231 {offsets = [0, 0], sizes = [16, 32], strides = [1, 1]} : vector<16x384xf32> to vector<16x32xf32>
    %c12 = arith.constant 12 : index
    %c0_107 = arith.constant 0 : index
    %233 = vector.load %arg5[%c12, %c0_107] : memref<88x128xf32, #tpu.memory_space<vmem>>, vector<1x32xf32>
    %234 = vector.broadcast %233 : vector<1x32xf32> to vector<16x32xf32>
    %235 = arith.addf %232, %234 : vector<16x32xf32>
    %236 = vector.extract_strided_slice %231 {offsets = [0, 128], sizes = [16, 32], strides = [1, 1]} : vector<16x384xf32> to vector<16x32xf32>
    %c13 = arith.constant 13 : index
    %c0_108 = arith.constant 0 : index
    %237 = vector.load %arg5[%c13, %c0_108] : memref<88x128xf32, #tpu.memory_space<vmem>>, vector<1x32xf32>
    %238 = vector.broadcast %237 : vector<1x32xf32> to vector<16x32xf32>
    %239 = arith.addf %236, %238 : vector<16x32xf32>
    %240 = vector.extract_strided_slice %231 {offsets = [0, 256], sizes = [16, 32], strides = [1, 1]} : vector<16x384xf32> to vector<16x32xf32>
    %c14 = arith.constant 14 : index
    %c0_109 = arith.constant 0 : index
    %241 = vector.load %arg5[%c14, %c0_109] : memref<88x128xf32, #tpu.memory_space<vmem>>, vector<1x32xf32>
    %242 = vector.broadcast %241 : vector<1x32xf32> to vector<16x32xf32>
    %243 = arith.addf %240, %242 : vector<16x32xf32>
    %244 = vector.extract_strided_slice %235 {offsets = [0, 0], sizes = [16, 16], strides = [1, 1]} : vector<16x32xf32> to vector<16x16xf32>
    %245 = vector.shape_cast %244 : vector<16x16xf32> to vector<2x8x16xf32>
    %246 = vector.extract_strided_slice %239 {offsets = [0, 0], sizes = [16, 16], strides = [1, 1]} : vector<16x32xf32> to vector<16x16xf32>
    %247 = vector.shape_cast %246 : vector<16x16xf32> to vector<2x8x16xf32>
    %248 = vector.extract_strided_slice %243 {offsets = [0, 0], sizes = [16, 16], strides = [1, 1]} : vector<16x32xf32> to vector<16x16xf32>
    %249 = vector.shape_cast %248 : vector<16x16xf32> to vector<2x8x16xf32>
    %cst_110 = arith.constant dense<0.000000e+00> : vector<2x8x8xf32>
    %250 = tpu.matmul %245, %247, %cst_110 {dimension_numbers = #tpu.dot_dimension_numbers<[2], [2], [1], [1], [0, 0, 0, 1, 1, 1], [0], [0]>} : vector<2x8x16xf32>, vector<2x8x16xf32>, vector<2x8x8xf32> -> vector<2x8x8xf32>
    %cst_111 = arith.constant 2.500000e-01 : f32
    %251 = vector.broadcast %cst_111 : f32 to vector<2x8x8xf32>
    %252 = arith.mulf %250, %251 : vector<2x8x8xf32>
    %253 = arith.addf %252, %87 : vector<2x8x8xf32>
    %cst_112 = arith.constant dense<0xFF800000> : vector<2x8xf32>
    %254 = vector.multi_reduction <maximumf>, %253, %cst_112 [2] : vector<2x8x8xf32> to vector<2x8xf32>
    %255 = vector.shape_cast %254 : vector<2x8xf32> to vector<2x8x1xf32>
    %256 = vector.broadcast %255 : vector<2x8x1xf32> to vector<2x8x8xf32>
    %257 = arith.subf %253, %256 : vector<2x8x8xf32>
    %258 = math.exp %257 : vector<2x8x8xf32>
    %cst_113 = arith.constant dense<0.000000e+00> : vector<2x8xf32>
    %259 = vector.multi_reduction <add>, %258, %cst_113 [2] : vector<2x8x8xf32> to vector<2x8xf32>
    %260 = vector.shape_cast %259 : vector<2x8xf32> to vector<2x8x1xf32>
    %261 = tpu.reciprocal %260 {approx = true} : vector<2x8x1xf32> -> vector<2x8x1xf32>
    %262 = vector.broadcast %261 : vector<2x8x1xf32> to vector<2x8x8xf32>
    %263 = arith.mulf %258, %262 : vector<2x8x8xf32>
    %cst_114 = arith.constant dense<0.000000e+00> : vector<2x8x16xf32>
    %264 = tpu.matmul %263, %249, %cst_114 {dimension_numbers = #tpu.dot_dimension_numbers<[2], [1], [1], [2], [0, 0, 0, 1, 1, 2], [0], [0]>} : vector<2x8x8xf32>, vector<2x8x16xf32>, vector<2x8x16xf32> -> vector<2x8x16xf32>
    %265 = vector.extract_strided_slice %235 {offsets = [0, 16], sizes = [16, 16], strides = [1, 1]} : vector<16x32xf32> to vector<16x16xf32>
    %266 = vector.shape_cast %265 : vector<16x16xf32> to vector<2x8x16xf32>
    %267 = vector.extract_strided_slice %239 {offsets = [0, 16], sizes = [16, 16], strides = [1, 1]} : vector<16x32xf32> to vector<16x16xf32>
    %268 = vector.shape_cast %267 : vector<16x16xf32> to vector<2x8x16xf32>
    %269 = vector.extract_strided_slice %243 {offsets = [0, 16], sizes = [16, 16], strides = [1, 1]} : vector<16x32xf32> to vector<16x16xf32>
    %270 = vector.shape_cast %269 : vector<16x16xf32> to vector<2x8x16xf32>
    %cst_115 = arith.constant dense<0.000000e+00> : vector<2x8x8xf32>
    %271 = tpu.matmul %266, %268, %cst_115 {dimension_numbers = #tpu.dot_dimension_numbers<[2], [2], [1], [1], [0, 0, 0, 1, 1, 1], [0], [0]>} : vector<2x8x16xf32>, vector<2x8x16xf32>, vector<2x8x8xf32> -> vector<2x8x8xf32>
    %cst_116 = arith.constant 2.500000e-01 : f32
    %272 = vector.broadcast %cst_116 : f32 to vector<2x8x8xf32>
    %273 = arith.mulf %271, %272 : vector<2x8x8xf32>
    %274 = arith.addf %273, %87 : vector<2x8x8xf32>
    %cst_117 = arith.constant dense<0xFF800000> : vector<2x8xf32>
    %275 = vector.multi_reduction <maximumf>, %274, %cst_117 [2] : vector<2x8x8xf32> to vector<2x8xf32>
    %276 = vector.shape_cast %275 : vector<2x8xf32> to vector<2x8x1xf32>
    %277 = vector.broadcast %276 : vector<2x8x1xf32> to vector<2x8x8xf32>
    %278 = arith.subf %274, %277 : vector<2x8x8xf32>
    %279 = math.exp %278 : vector<2x8x8xf32>
    %cst_118 = arith.constant dense<0.000000e+00> : vector<2x8xf32>
    %280 = vector.multi_reduction <add>, %279, %cst_118 [2] : vector<2x8x8xf32> to vector<2x8xf32>
    %281 = vector.shape_cast %280 : vector<2x8xf32> to vector<2x8x1xf32>
    %282 = tpu.reciprocal %281 {approx = true} : vector<2x8x1xf32> -> vector<2x8x1xf32>
    %283 = vector.broadcast %282 : vector<2x8x1xf32> to vector<2x8x8xf32>
    %284 = arith.mulf %279, %283 : vector<2x8x8xf32>
    %cst_119 = arith.constant dense<0.000000e+00> : vector<2x8x16xf32>
    %285 = tpu.matmul %284, %270, %cst_119 {dimension_numbers = #tpu.dot_dimension_numbers<[2], [1], [1], [2], [0, 0, 0, 1, 1, 2], [0], [0]>} : vector<2x8x8xf32>, vector<2x8x16xf32>, vector<2x8x16xf32> -> vector<2x8x16xf32>
    %286 = tpu.concatenate %264, %285 in 2 : vector<2x8x16xf32>, vector<2x8x16xf32> -> vector<2x8x32xf32>
    %287 = vector.shape_cast %286 : vector<2x8x32xf32> to vector<16x32xf32>
    %288 = vector.extract_strided_slice %229 {offsets = [0, 384], sizes = [32, 32], strides = [1, 1]} : vector<32x512xf32> to vector<32x32xf32>
    %cst_120 = arith.constant dense<0.000000e+00> : vector<16x32xf32>
    %289 = tpu.matmul %287, %288, %cst_120 {dimension_numbers = #tpu.dot_dimension_numbers<[1], [0], [0], [1], [0, 0, 1, 1], [], []>} : vector<16x32xf32>, vector<32x32xf32>, vector<16x32xf32> -> vector<16x32xf32>
    %c15 = arith.constant 15 : index
    %c0_121 = arith.constant 0 : index
    %290 = vector.load %arg5[%c15, %c0_121] : memref<88x128xf32, #tpu.memory_space<vmem>>, vector<1x32xf32>
    %291 = vector.broadcast %290 : vector<1x32xf32> to vector<16x32xf32>
    %292 = arith.addf %289, %291 : vector<16x32xf32>
    %293 = arith.addf %227, %292 : vector<16x32xf32>
    %c16 = arith.constant 16 : index
    %c0_122 = arith.constant 0 : index
    %294 = vector.load %arg5[%c16, %c0_122] : memref<88x128xf32, #tpu.memory_space<vmem>>, vector<1x32xf32>
    %c17 = arith.constant 17 : index
    %c0_123 = arith.constant 0 : index
    %295 = vector.load %arg5[%c17, %c0_123] : memref<88x128xf32, #tpu.memory_space<vmem>>, vector<1x32xf32>
    %cst_124 = arith.constant dense<0.000000e+00> : vector<16xf32>
    %296 = vector.multi_reduction <add>, %293, %cst_124 [1] : vector<16x32xf32> to vector<16xf32>
    %297 = vector.shape_cast %296 : vector<16xf32> to vector<16x1xf32>
    %cst_125 = arith.constant 3.200000e+01 : f32
    %298 = vector.broadcast %cst_125 : f32 to vector<16x1xf32>
    %299 = arith.divf %297, %298 : vector<16x1xf32>
    %300 = vector.broadcast %299 : vector<16x1xf32> to vector<16x32xf32>
    %301 = arith.subf %293, %300 : vector<16x32xf32>
    %302 = arith.mulf %301, %301 : vector<16x32xf32>
    %cst_126 = arith.constant dense<0.000000e+00> : vector<16xf32>
    %303 = vector.multi_reduction <add>, %302, %cst_126 [1] : vector<16x32xf32> to vector<16xf32>
    %304 = vector.shape_cast %303 : vector<16xf32> to vector<16x1xf32>
    %cst_127 = arith.constant 3.200000e+01 : f32
    %305 = vector.broadcast %cst_127 : f32 to vector<16x1xf32>
    %306 = arith.divf %304, %305 : vector<16x1xf32>
    %307 = vector.broadcast %299 : vector<16x1xf32> to vector<16x32xf32>
    %308 = arith.subf %293, %307 : vector<16x32xf32>
    %cst_128 = arith.constant 9.99999996E-13 : f32
    %309 = vector.broadcast %cst_128 : f32 to vector<16x1xf32>
    %310 = arith.addf %306, %309 : vector<16x1xf32>
    %311 = math.rsqrt %310 : vector<16x1xf32>
    %312 = vector.broadcast %311 : vector<16x1xf32> to vector<16x32xf32>
    %313 = arith.mulf %308, %312 : vector<16x32xf32>
    %314 = vector.broadcast %294 : vector<1x32xf32> to vector<16x32xf32>
    %315 = arith.mulf %313, %314 : vector<16x32xf32>
    %316 = vector.broadcast %295 : vector<1x32xf32> to vector<16x32xf32>
    %317 = arith.addf %315, %316 : vector<16x32xf32>
    %c1_129 = arith.constant 1 : index
    %c0_130 = arith.constant 0 : index
    %c0_131 = arith.constant 0 : index
    %318 = vector.load %arg4[%c1_129, %c0_130, %c0_131] : memref<2x96x128xf32, #tpu.memory_space<vmem>>, vector<1x96x128xf32>
    %319 = vector.shape_cast %318 : vector<1x96x128xf32> to vector<96x128xf32>
    %320 = vector.extract_strided_slice %319 {offsets = [0, 0], sizes = [32, 64], strides = [1, 1]} : vector<96x128xf32> to vector<32x64xf32>
    %cst_132 = arith.constant dense<0.000000e+00> : vector<16x64xf32>
    %321 = tpu.matmul %317, %320, %cst_132 {dimension_numbers = #tpu.dot_dimension_numbers<[1], [0], [0], [1], [0, 0, 1, 1], [], []>} : vector<16x32xf32>, vector<32x64xf32>, vector<16x64xf32> -> vector<16x64xf32>
    %c18 = arith.constant 18 : index
    %c0_133 = arith.constant 0 : index
    %322 = vector.load %arg5[%c18, %c0_133] : memref<88x128xf32, #tpu.memory_space<vmem>>, vector<1x64xf32>
    %323 = vector.broadcast %322 : vector<1x64xf32> to vector<16x64xf32>
    %324 = arith.addf %321, %323 : vector<16x64xf32>
    %cst_134 = arith.constant 5.000000e-01 : f32
    %325 = vector.broadcast %cst_134 : f32 to vector<16x64xf32>
    %326 = arith.mulf %325, %324 : vector<16x64xf32>
    %cst_135 = arith.constant 4.471500e-02 : f32
    %327 = vector.broadcast %cst_135 : f32 to vector<16x64xf32>
    %328 = arith.mulf %327, %324 : vector<16x64xf32>
    %329 = arith.mulf %328, %324 : vector<16x64xf32>
    %330 = arith.mulf %329, %324 : vector<16x64xf32>
    %331 = arith.addf %324, %330 : vector<16x64xf32>
    %cst_136 = arith.constant 0.797884583 : f32
    %332 = vector.broadcast %cst_136 : f32 to vector<16x64xf32>
    %333 = arith.mulf %332, %331 : vector<16x64xf32>
    %334 = math.tanh %333 : vector<16x64xf32>
    %cst_137 = arith.constant 1.000000e+00 : f32
    %335 = vector.broadcast %cst_137 : f32 to vector<16x64xf32>
    %336 = arith.addf %335, %334 : vector<16x64xf32>
    %337 = arith.mulf %326, %336 : vector<16x64xf32>
    %338 = vector.extract_strided_slice %319 {offsets = [32, 0], sizes = [64, 32], strides = [1, 1]} : vector<96x128xf32> to vector<64x32xf32>
    %cst_138 = arith.constant dense<0.000000e+00> : vector<16x32xf32>
    %339 = tpu.matmul %337, %338, %cst_138 {dimension_numbers = #tpu.dot_dimension_numbers<[1], [0], [0], [1], [0, 0, 1, 1], [], []>} : vector<16x64xf32>, vector<64x32xf32>, vector<16x32xf32> -> vector<16x32xf32>
    %c19 = arith.constant 19 : index
    %c0_139 = arith.constant 0 : index
    %340 = vector.load %arg5[%c19, %c0_139] : memref<88x128xf32, #tpu.memory_space<vmem>>, vector<1x32xf32>
    %341 = vector.broadcast %340 : vector<1x32xf32> to vector<16x32xf32>
    %342 = arith.addf %339, %341 : vector<16x32xf32>
    %343 = arith.addf %317, %342 : vector<16x32xf32>
    %c20 = arith.constant 20 : index
    %c0_140 = arith.constant 0 : index
    %344 = vector.load %arg5[%c20, %c0_140] : memref<88x128xf32, #tpu.memory_space<vmem>>, vector<1x32xf32>
    %c21 = arith.constant 21 : index
    %c0_141 = arith.constant 0 : index
    %345 = vector.load %arg5[%c21, %c0_141] : memref<88x128xf32, #tpu.memory_space<vmem>>, vector<1x32xf32>
    %cst_142 = arith.constant dense<0.000000e+00> : vector<16xf32>
    %346 = vector.multi_reduction <add>, %343, %cst_142 [1] : vector<16x32xf32> to vector<16xf32>
    %347 = vector.shape_cast %346 : vector<16xf32> to vector<16x1xf32>
    %cst_143 = arith.constant 3.200000e+01 : f32
    %348 = vector.broadcast %cst_143 : f32 to vector<16x1xf32>
    %349 = arith.divf %347, %348 : vector<16x1xf32>
    %350 = vector.broadcast %349 : vector<16x1xf32> to vector<16x32xf32>
    %351 = arith.subf %343, %350 : vector<16x32xf32>
    %352 = arith.mulf %351, %351 : vector<16x32xf32>
    %cst_144 = arith.constant dense<0.000000e+00> : vector<16xf32>
    %353 = vector.multi_reduction <add>, %352, %cst_144 [1] : vector<16x32xf32> to vector<16xf32>
    %354 = vector.shape_cast %353 : vector<16xf32> to vector<16x1xf32>
    %cst_145 = arith.constant 3.200000e+01 : f32
    %355 = vector.broadcast %cst_145 : f32 to vector<16x1xf32>
    %356 = arith.divf %354, %355 : vector<16x1xf32>
    %357 = vector.broadcast %349 : vector<16x1xf32> to vector<16x32xf32>
    %358 = arith.subf %343, %357 : vector<16x32xf32>
    %cst_146 = arith.constant 9.99999996E-13 : f32
    %359 = vector.broadcast %cst_146 : f32 to vector<16x1xf32>
    %360 = arith.addf %356, %359 : vector<16x1xf32>
    %361 = math.rsqrt %360 : vector<16x1xf32>
    %362 = vector.broadcast %361 : vector<16x1xf32> to vector<16x32xf32>
    %363 = arith.mulf %358, %362 : vector<16x32xf32>
    %364 = vector.broadcast %344 : vector<1x32xf32> to vector<16x32xf32>
    %365 = arith.mulf %363, %364 : vector<16x32xf32>
    %366 = vector.broadcast %345 : vector<1x32xf32> to vector<16x32xf32>
    %367 = arith.addf %365, %366 : vector<16x32xf32>
    %368 = vector.shape_cast %367 : vector<16x32xf32> to vector<2x8x32xf32>
    %369 = vector.extract_strided_slice %368 {offsets = [0, 0, 0], sizes = [2, 1, 32], strides = [1, 1, 1]} : vector<2x8x32xf32> to vector<2x1x32xf32>
    %370 = vector.shape_cast %369 : vector<2x1x32xf32> to vector<2x32xf32>
    %c24 = arith.constant 24 : index
    %c0_147 = arith.constant 0 : index
    %371 = vector.load %arg5[%c24, %c0_147] : memref<88x128xf32, #tpu.memory_space<vmem>>, vector<32x32xf32>
    %cst_148 = arith.constant dense<0.000000e+00> : vector<2x32xf32>
    %372 = tpu.matmul %370, %371, %cst_148 {dimension_numbers = #tpu.dot_dimension_numbers<[1], [0], [0], [1], [0, 0, 1, 1], [], []>} : vector<2x32xf32>, vector<32x32xf32>, vector<2x32xf32> -> vector<2x32xf32>
    %c22 = arith.constant 22 : index
    %c0_149 = arith.constant 0 : index
    %373 = vector.load %arg5[%c22, %c0_149] : memref<88x128xf32, #tpu.memory_space<vmem>>, vector<1x32xf32>
    %374 = vector.broadcast %373 : vector<1x32xf32> to vector<2x32xf32>
    %375 = arith.addf %372, %374 : vector<2x32xf32>
    %376 = math.tanh %375 : vector<2x32xf32>
    %c56 = arith.constant 56 : index
    %c0_150 = arith.constant 0 : index
    %377 = vector.load %arg5[%c56, %c0_150] : memref<88x128xf32, #tpu.memory_space<vmem>>, vector<32x128xf32>
    %cst_151 = arith.constant dense<0.000000e+00> : vector<2x128xf32>
    %378 = tpu.matmul %376, %377, %cst_151 {dimension_numbers = #tpu.dot_dimension_numbers<[1], [0], [0], [1], [0, 0, 1, 1], [], []>} : vector<2x32xf32>, vector<32x128xf32>, vector<2x128xf32> -> vector<2x128xf32>
    %c23 = arith.constant 23 : index
    %c0_152 = arith.constant 0 : index
    %379 = vector.load %arg5[%c23, %c0_152] : memref<88x128xf32, #tpu.memory_space<vmem>>, vector<1x128xf32>
    %380 = vector.broadcast %379 : vector<1x128xf32> to vector<2x128xf32>
    %381 = arith.addf %378, %380 : vector<2x128xf32>
    %c0_153 = arith.constant 0 : index
    %c0_154 = arith.constant 0 : index
    %382 = vector.load %arg6[%c0_153, %c0_154] : memref<2x128xf32, #tpu.memory_space<vmem>>, vector<2x128xf32>
    tpu.vector_store %arg6[%c0_153, %c0_154], %381 {strides = array<i32>} : memref<2x128xf32, #tpu.memory_space<vmem>>, vector<2x128xf32>,
    return
  }
}

</mosaic_0001>

<llo_original>
// kernel: sentiment_classifier_forward.1
$region0: #{sentiment_classifier_forward.1}
  #allocation0 [shape = 'u32[]', space=smem, size = 0x4, offset = 0x4, fixed_abs, tag = 'smem constant byte address 0x4 - core index']
  #allocation1 [shape = 'u32[144,128]{1,0:T(1,128)}', space=vmem, size = 0x12000, scoped, tag = 'internal scratch']
  %s0 = inlined_call_operand.vmem [shape: s32[2,8], index: 0, kind: input, shape index: {}]
  %s1 = inlined_call_operand.vmem [shape: s32[2,8], index: 1, kind: input, shape index: {}]
  %s2 = inlined_call_operand.vmem [shape: f32[120,32], index: 2, kind: input, shape index: {}]
  %s3 = inlined_call_operand.hbm [shape: f32[2,32,512], index: 3, kind: input, shape index: {}]
  %s4 = inlined_call_operand.hbm [shape: f32[2,96,128], index: 4, kind: input, shape index: {}]
  %s5 = inlined_call_operand.vmem [shape: f32[88,128], index: 5, kind: input, shape index: {}]
  %s6 = inlined_call_operand.hbm [shape: f32[2,128], index: 6, kind: output, shape index: {}]
  %s7 = sld [smem:[#allocation0]]
  $region46: #{sentiment_classifier_forward.1} parent=0
    _
  %s9 = ssub.s32 1, %s7
  %s10 = scalar_select 0, %s9, %s7
  $region1: #{sentiment_classifier_forward.1} parent=0
    #allocation2 [shape = 'u8[1024]{0}', space=smem, size = 0x400, scoped, tag = 'input window, operand 0, single buffered']
    #allocation3 [shape = 's32[1]{0}', space=sflag, size = 0x4, scoped, tag = 'scoped memory for sentiment_classifier_forward.1']
    #allocation4 [shape = 's32[1]{0}', space=sflag, size = 0x4, scoped, tag = 'scoped memory for sentiment_classifier_forward.1']
    #allocation5 [shape = 's32[1]{0}', space=sflag, size = 0x4, scoped, tag = 'scoped memory for sentiment_classifier_forward.1']
    #allocation6 [shape = 'u8[131072]{0}', space=vmem, size = 0x20000, scoped, tag = 'input window, operand 3, single buffered']
    #allocation7 [shape = 'u8[98304]{0}', space=vmem, size = 0x18000, scoped, tag = 'input window, operand 4, single buffered']
    #allocation8 [shape = 's32[1]{0}', space=sflag, size = 0x4, scoped, tag = 'scoped memory for sentiment_classifier_forward.1']
    #allocation9 [shape = 'u8[1024]{0}', space=vmem, size = 0x400, scoped, tag = 'output window, operand 0, single buffered']
    %11 = vsyncpa [#allocation5], 0
    %12 = vsyncpa [#allocation3], 0
    %13 = vsyncpa [#allocation8], 0
    %14 = vsyncpa [#allocation4], 0
    // Predicated region
    $region2: #{sentiment_classifier_forward.1} parent=1 // pred_check
      _
    $region3: #{sentiment_classifier_forward.1} parent=1 // pred_check_branch
      %16 = sbr.rel (0) target = $region5
    $region4: #{sentiment_classifier_forward.1} parent=1 // pred_region
      %s18 = ssub.s32 32, 32
      %19 = vsyncadd [#allocation5], %s18
      %s21 = sshll.u32 %s0, 4
      %s22 = int_to_ptr.vmem [resolvable:$true] %s21
      %24 = dma.vmem_to_smem %s22, 32, [#allocation2], [#allocation5]
    $region5: #{sentiment_classifier_forward.1} parent=1 // pred_fallthru
      _
    // Predicated region
    $region6: #{sentiment_classifier_forward.1} parent=1 // pred_check
      _
    $region7: #{sentiment_classifier_forward.1} parent=1 // pred_check_branch
      %26 = sbr.rel (0) target = $region9
    $region8: #{sentiment_classifier_forward.1} parent=1 // pred_region
      _
    $region9: #{sentiment_classifier_forward.1} parent=1 // pred_fallthru
      _
    // Predicated region
    $region10: #{sentiment_classifier_forward.1} parent=1 // pred_check
      _
    $region11: #{sentiment_classifier_forward.1} parent=1 // pred_check_branch
      %28 = sbr.rel (0) target = $region13
    $region12: #{sentiment_classifier_forward.1} parent=1 // pred_region
      _
    $region13: #{sentiment_classifier_forward.1} parent=1 // pred_fallthru
      _
    // Predicated region
    $region14: #{sentiment_classifier_forward.1} parent=1 // pred_check
      _
    $region15: #{sentiment_classifier_forward.1} parent=1 // pred_check_branch
      %30 = sbr.rel (0) target = $region17
    $region16: #{sentiment_classifier_forward.1} parent=1 // pred_region
      %s32 = ssub.s32 4096, 4096
      %33 = vsyncadd [#allocation3], %s32
      %s34 = sshll.u32 [#allocation6], 4
      %s35 = int_to_ptr.vmem [resolvable:$true] %s34
      %40 = dma.hbm_to_vmem [thread:$0]  %s3, 4096, %s35, [#allocation3], 512, 512, 32
    $region17: #{sentiment_classifier_forward.1} parent=1 // pred_fallthru
      _
    // Predicated region
    $region18: #{sentiment_classifier_forward.1} parent=1 // pred_check
      _
    $region19: #{sentiment_classifier_forward.1} parent=1 // pred_check_branch
      %42 = sbr.rel (0) target = $region21
    $region20: #{sentiment_classifier_forward.1} parent=1 // pred_region
      %s44 = ssub.s32 3072, 3072
      %45 = vsyncadd [#allocation8], %s44
      %s46 = sshll.u32 [#allocation7], 4
      %s47 = int_to_ptr.vmem [resolvable:$true] %s46
      %52 = dma.hbm_to_vmem [thread:$0]  %s4, 3072, %s47, [#allocation8], 128, 128, 8
    $region21: #{sentiment_classifier_forward.1} parent=1 // pred_fallthru
      _
    // Predicated region
    $region22: #{sentiment_classifier_forward.1} parent=1 // pred_check
      _
    $region23: #{sentiment_classifier_forward.1} parent=1 // pred_check_branch
      %54 = sbr.rel (0) target = $region25
    $region24: #{sentiment_classifier_forward.1} parent=1 // pred_region
      _
    $region25: #{sentiment_classifier_forward.1} parent=1 // pred_fallthru
      _
    // Predicated region
    $region26: #{sentiment_classifier_forward.1} parent=1 // pred_check
      _
    $region27: #{sentiment_classifier_forward.1} parent=1 // pred_check_branch
      %56 = sbr.rel (0) target = $region29
    $region28: #{sentiment_classifier_forward.1} parent=1 // pred_region
      %57 = dma.done [#allocation5], 32
    $region29: #{sentiment_classifier_forward.1} parent=1 // pred_fallthru
      _
    // Predicated region
    $region30: #{sentiment_classifier_forward.1} parent=1 // pred_check
      _
    $region31: #{sentiment_classifier_forward.1} parent=1 // pred_check_branch
      %59 = sbr.rel (0) target = $region33
    $region32: #{sentiment_classifier_forward.1} parent=1 // pred_region
      %60 = dma.done [#allocation3], 4096
    $region33: #{sentiment_classifier_forward.1} parent=1 // pred_fallthru
      _
    // Predicated region
    $region34: #{sentiment_classifier_forward.1} parent=1 // pred_check
      _
    $region35: #{sentiment_classifier_forward.1} parent=1 // pred_check_branch
      %62 = sbr.rel (0) target = $region37
    $region36: #{sentiment_classifier_forward.1} parent=1 // pred_region
      %63 = dma.done [#allocation8], 3072
    $region37: #{sentiment_classifier_forward.1} parent=1 // pred_fallthru
      _
    %64 = sfence
    %s65 = sld [smem:[#allocation2]]
    %s66 = scalar_lea.vmem %s2, %s65
    %v67 = vld [vmem:[%s66] sm:$0x1]
    %s68 = sld [smem:[#allocation2 + $0x1]]
    %s69 = scalar_lea.vmem %s2, %s68
    %v70 = vld [vmem:[%s69] sm:$0x1]
    %s71 = sld [smem:[#allocation2 + $0x2]]
    %s72 = scalar_lea.vmem %s2, %s71
    %v73 = vld [vmem:[%s72] sm:$0x1]
    %s74 = sld [smem:[#allocation2 + $0x3]]
    %s75 = scalar_lea.vmem %s2, %s74
    %v76 = vld [vmem:[%s75] sm:$0x1]
    %s77 = sld [smem:[#allocation2 + $0x4]]
    %s78 = scalar_lea.vmem %s2, %s77
    %v79 = vld [vmem:[%s78] sm:$0x1]
    %s80 = sld [smem:[#allocation2 + $0x5]]
    %s81 = scalar_lea.vmem %s2, %s80
    %v82 = vld [vmem:[%s81] sm:$0x1]
    %s83 = sld [smem:[#allocation2 + $0x6]]
    %s84 = scalar_lea.vmem %s2, %s83
    %v85 = vld [vmem:[%s84] sm:$0x1]
    %s86 = sld [smem:[#allocation2 + $0x7]]
    %s87 = scalar_lea.vmem %s2, %s86
    %v88 = vld [vmem:[%s87] sm:$0x1]
    %s89 = sld [smem:[#allocation2 + $0x80]]
    %s90 = scalar_lea.vmem %s2, %s89
    %v91 = vld [vmem:[%s90] sm:$0x1]
    %s92 = sld [smem:[#allocation2 + $0x81]]
    %s93 = scalar_lea.vmem %s2, %s92
    %v94 = vld [vmem:[%s93] sm:$0x1]
    %s95 = sld [smem:[#allocation2 + $0x82]]
    %s96 = scalar_lea.vmem %s2, %s95
    %v97 = vld [vmem:[%s96] sm:$0x1]
    %s98 = sld [smem:[#allocation2 + $0x83]]
    %s99 = scalar_lea.vmem %s2, %s98
    %v100 = vld [vmem:[%s99] sm:$0x1]
    %s101 = sld [smem:[#allocation2 + $0x84]]
    %s102 = scalar_lea.vmem %s2, %s101
    %v103 = vld [vmem:[%s102] sm:$0x1]
    %s104 = sld [smem:[#allocation2 + $0x85]]
    %s105 = scalar_lea.vmem %s2, %s104
    %v106 = vld [vmem:[%s105] sm:$0x1]
    %s107 = sld [smem:[#allocation2 + $0x86]]
    %s108 = scalar_lea.vmem %s2, %s107
    %v109 = vld [vmem:[%s108] sm:$0x1]
    %s110 = sld [smem:[#allocation2 + $0x87]]
    %s111 = scalar_lea.vmem %s2, %s110
    %v112 = vld [vmem:[%s111] sm:$0x1]
    %v114 = vrot.slane %v70, 7
    %v117 = vrot.slane %v73, 6
    %v120 = vrot.slane %v76, 5
    %v123 = vrot.slane %v79, 4
    %v126 = vrot.slane %v82, 3
    %v129 = vrot.slane %v85, 2
    %v132 = vrot.slane %v88, 1
    %v135 = vrot.slane %v94, 7
    %v138 = vrot.slane %v97, 6
    %v141 = vrot.slane %v100, 5
    %v144 = vrot.slane %v103, 4
    %v147 = vrot.slane %v106, 3
    %v150 = vrot.slane %v109, 2
    %v153 = vrot.slane %v112, 1
    %vm155 = vcmask 1040384
    %v156 = vsel %vm155, %v67, %v114
    %vm157 = vcmask 1041408
    %v158 = vsel %vm157, %v156, %v117
    %vm159 = vcmask 1042432
    %v160 = vsel %vm159, %v158, %v120
    %vm161 = vcmask 1043456
    %v162 = vsel %vm161, %v160, %v123
    %vm163 = vcmask 1044480
    %v164 = vsel %vm163, %v162, %v126
    %vm165 = vcmask 1045504
    %v166 = vsel %vm165, %v164, %v129
    %vm167 = vcmask 1046528
    %v168 = vsel %vm167, %v166, %v132
    %v169 = vsel %vm155, %v91, %v135
    %v170 = vsel %vm157, %v169, %v138
    %v171 = vsel %vm159, %v170, %v141
    %v172 = vsel %vm161, %v171, %v144
    %v173 = vsel %vm163, %v172, %v147
    %v174 = vsel %vm165, %v173, %v150
    %v175 = vsel %vm167, %v174, %v153
    %v176 = vld [vmem:[%s2 + $0x68] sm:$0xff]
    %v177 = vadd.f32 %v168, %v176
    %v178 = vadd.f32 %v175, %v176
    %v179 = vld [vmem:[%s5] sm:$0x1]
    %v180 = vld [vmem:[%s5 + $0x1] sm:$0x1]
    %vm181 = vcmask 261120
    %v182 = vsel %vm181, %v177, 0.0
    %183 = vadd.xlane.f32.xlu0 %v182
    %v184 = vpop.xlane.xlu0 %183
    %v185 = vsel %vm181, %v178, 0.0
    %186 = vadd.xlane.f32.xlu0 %v185
    %v187 = vpop.xlane.xlu0 %186
    %v188 = vrcp.pop 32.0
    %v189 = vmul.f32 %v184, %v188
    %v190 = vmul.f32 %v187, %v188
    %v191 = vsub.f32 %v177, %v189
    %v192 = vsub.f32 %v178, %v190
    %v193 = vmul.f32 %v191, %v191
    %v194 = vmul.f32 %v192, %v192
    %v195 = vsel %vm181, %v193, 0.0
    %196 = vadd.xlane.f32.xlu0 %v195
    %v197 = vpop.xlane.xlu0 %196
    %v198 = vsel %vm181, %v194, 0.0
    %199 = vadd.xlane.f32.xlu0 %v198
    %v200 = vpop.xlane.xlu0 %199
    %v201 = vmul.f32 %v197, %v188
    %v202 = vmul.f32 %v200, %v188
    %v203 = vadd.f32 %v201, 1e-12
    %v204 = vadd.f32 %v202, 1e-12
    %v205 = vrsqrt.pop %v203
    %v206 = vrsqrt.pop %v204
    %v207 = vmul.f32 %v191, %v205
    %v208 = vmul.f32 %v192, %v206
    %v209 = vlaneseq
    %v210 = vshrl.u32 %v209, 7
    %v211 = vsub.s32 0, %v210
    %v212 = vrot.slane %v179, %v211
    %v213 = vmul.f32 %v207, %v212
    %v214 = vmul.f32 %v208, %v212
    %v215 = vlaneseq
    %v216 = vshrl.u32 %v215, 7
    %v217 = vsub.s32 0, %v216
    %v218 = vrot.slane %v180, %v217
    %v219 = vadd.f32 %v213, %v218
    %v220 = vadd.f32 %v214, %v218
    %v221 = vld [vmem:[%s1] sm:$0x3]
    %v222 = vcvt.s32.f32 %v221
    %v223 = vsub.f32 1.0, %v222
    %v224 = vmul.f32 %v223, -10000.0
    %v227 = vunpack.c.l.s4 1966171168
    %v228 = vunpack.c.0.s8 %v227
    %v229 = vlaneseq
    %v230 = vshrl.u32 %v229, 7
    %v231 = vsub.s32 %v228, %v230
    %v232 = vrot.slane %v224, %v231
    %v233 = vcombine.high %v232, %v232
    %v235 = vunpack.c.l.s4 1966171168
    %v236 = vunpack.c.0.s8 %v235
    %v237 = vlaneseq
    %v238 = vshrl.u32 %v237, 7
    %v239 = vsub.s32 %v236, %v238
    %v240 = vrot.slane %v232, %v239
    %v242 = vunpack.c.l.s4 1966171168
    %v243 = vunpack.c.0.s8 %v242
    %v244 = vlaneseq
    %v245 = vshrl.u32 %v244, 7
    %v246 = vsub.s32 %v243, %v245
    %v247 = vrot.slane %v233, %v246
    %v248 = vlaneseq
    %v249 = vshrl.u32 %v248, 7
    %v250 = vsub.s32 0, %v249
    %v251 = vrot.slane %v240, %v250
    %v252 = vlaneseq
    %v253 = vshrl.u32 %v252, 7
    %v254 = vsub.s32 0, %v253
    %v255 = vrot.slane %v247, %v254
    %v258 = vld [vmem:[#allocation6] sm:$0xff]
    %v259 = vld [vmem:[#allocation6 + $0x8] sm:$0xff]
    %v260 = vld [vmem:[#allocation6 + $0x10] sm:$0xff]
    %v261 = vld [vmem:[#allocation6 + $0x18] sm:$0xff]
    %v262 = vld [vmem:[#allocation6 + $0x20] sm:$0xff]
    %v263 = vld [vmem:[#allocation6 + $0x28] sm:$0xff]
    %v264 = vld [vmem:[#allocation6 + $0x30] sm:$0xff]
    %v265 = vld [vmem:[#allocation6 + $0x38] sm:$0xff]
    %v266 = vld [vmem:[#allocation6 + $0x40] sm:$0xff]
    %v267 = vld [vmem:[#allocation6 + $0x48] sm:$0xff]
    %v268 = vld [vmem:[#allocation6 + $0x50] sm:$0xff]
    %v269 = vld [vmem:[#allocation6 + $0x58] sm:$0xff]
    %v270 = vld [vmem:[#allocation6 + $0x60] sm:$0xff]
    %v271 = vld [vmem:[#allocation6 + $0x68] sm:$0xff]
    %v272 = vld [vmem:[#allocation6 + $0x70] sm:$0xff]
    %v273 = vld [vmem:[#allocation6 + $0x78] sm:$0xff]
    %v275 = vsel %vm181, %v219, 0
    %v278 = vsel %vm181, %v220, 0
    %280 = vmatprep.subr.mxu0 0.0
    %281 = vmatpush1.msra.mxu0 0.0
    %282 = vmatprep.subr.mxu0 0.0
    %283 = vmatpush1.msra.mxu0 0.0
    %284 = vmatprep.subr.mxu0 0.0
    %285 = vmatpush1.msra.mxu0 0.0
    %286 = vmatprep.subr.mxu0 0.0
    %287 = vmatpush1.msra.mxu0 0.0
    %288 = vmatprep.subr.mxu0 0.0
    %289 = vmatpush1.msra.mxu0 0.0
    %290 = vmatprep.subr.mxu0 0.0
    %291 = vmatpush1.msra.mxu0 0.0
    %292 = vmatprep.subr.mxu0 0.0
    %293 = vmatpush1.msra.mxu0 0.0
    %294 = vmatprep.subr.mxu0 0.0
    %295 = vmatpush1.msra.mxu0 0.0
    %296 = vmatprep.subr.mxu0 0.0
    %297 = vmatpush1.msra.mxu0 0.0
    %298 = vmatprep.subr.mxu0 0.0
    %299 = vmatpush1.msra.mxu0 0.0
    %300 = vmatprep.subr.mxu0 0.0
    %301 = vmatpush1.msra.mxu0 0.0
    %302 = vmatprep.subr.mxu0 0.0
    %303 = vmatpush1.msra.mxu0 0.0
    %304 = vmatprep.subr.mxu0 %v271
    %305 = vmatpush1.msra.mxu0 %v270
    %306 = vmatprep.subr.mxu0 %v267
    %307 = vmatpush1.msra.mxu0 %v266
    %308 = vmatprep.subr.mxu0 %v263
    %309 = vmatpush1.msra.mxu0 %v262
    %310 = vmatprep.subr.mxu0 %v259
    %311 = vmatpush1.msra.mxu0 %v258
    %312 = vmatprep.subr.mxu0 0.0
    %313 = vmatpush2.msra.mxu0 0.0
    %314 = vmatprep.subr.mxu0 0.0
    %315 = vmatpush2.msra.mxu0 0.0
    %316 = vmatprep.subr.mxu0 0.0
    %317 = vmatpush2.msra.mxu0 0.0
    %318 = vmatprep.subr.mxu0 0.0
    %319 = vmatpush2.msra.mxu0 0.0
    %320 = vmatprep.subr.mxu0 0.0
    %321 = vmatpush2.msra.mxu0 0.0
    %322 = vmatprep.subr.mxu0 0.0
    %323 = vmatpush2.msra.mxu0 0.0
    %324 = vmatprep.subr.mxu0 0.0
    %325 = vmatpush2.msra.mxu0 0.0
    %326 = vmatprep.subr.mxu0 0.0
    %327 = vmatpush2.msra.mxu0 0.0
    %328 = vmatprep.subr.mxu0 0.0
    %329 = vmatpush2.msra.mxu0 0.0
    %330 = vmatprep.subr.mxu0 0.0
    %331 = vmatpush2.msra.mxu0 0.0
    %332 = vmatprep.subr.mxu0 0.0
    %333 = vmatpush2.msra.mxu0 0.0
    %334 = vmatprep.subr.mxu0 0.0
    %335 = vmatpush2.msra.mxu0 0.0
    %336 = vmatprep.subr.mxu0 0.0
    %337 = vmatpush2.msra.mxu0 0.0
    %338 = vmatprep.subr.mxu0 0.0
    %339 = vmatpush2.msra.mxu0 0.0
    %340 = vmatprep.subr.mxu0 0.0
    %341 = vmatpush2.msra.mxu0 0.0
    %342 = vmatprep.subr.mxu0 0.0
    %343 = vmatpush2.msra.mxu0 0.0
    %344 = vmatprep.mubr.f32.mxu0 0.0
    %345 = vmatmul.mubr.f32.gmra.mxu0 %v275
    %v346 = vpop.f32.mrf.mxu0
    %v347 = vadd.f32 0.0, %v346
    %v348 = vpop.f32.mrf.mxu0
    %v349 = vadd.f32 0.0, %v348
    %350 = vmatprep.mubr.f32.mxu0 0.0
    %351 = vmatmul.mubr.f32.gmra.mxu0 %v278
    %v352 = vpop.f32.mrf.mxu0
    %v353 = vadd.f32 0.0, %v352
    %v354 = vpop.f32.mrf.mxu0
    %v355 = vadd.f32 0.0, %v354
    %356 = vdwg.mxu0
    %357 = vmatprep.subr.mxu0 0.0
    %358 = vmatpush1.msra.mxu0 0.0
    %359 = vmatprep.subr.mxu0 0.0
    %360 = vmatpush1.msra.mxu0 0.0
    %361 = vmatprep.subr.mxu0 0.0
    %362 = vmatpush1.msra.mxu0 0.0
    %363 = vmatprep.subr.mxu0 0.0
    %364 = vmatpush1.msra.mxu0 0.0
    %365 = vmatprep.subr.mxu0 0.0
    %366 = vmatpush1.msra.mxu0 0.0
    %367 = vmatprep.subr.mxu0 0.0
    %368 = vmatpush1.msra.mxu0 0.0
    %369 = vmatprep.subr.mxu0 0.0
    %370 = vmatpush1.msra.mxu0 0.0
    %371 = vmatprep.subr.mxu0 0.0
    %372 = vmatpush1.msra.mxu0 0.0
    %373 = vmatprep.subr.mxu0 0.0
    %374 = vmatpush1.msra.mxu0 0.0
    %375 = vmatprep.subr.mxu0 0.0
    %376 = vmatpush1.msra.mxu0 0.0
    %377 = vmatprep.subr.mxu0 0.0
    %378 = vmatpush1.msra.mxu0 0.0
    %379 = vmatprep.subr.mxu0 0.0
    %380 = vmatpush1.msra.mxu0 0.0
    %381 = vmatprep.subr.mxu0 0.0
    %382 = vmatpush1.msra.mxu0 %v272
    %383 = vmatprep.subr.mxu0 0.0
    %384 = vmatpush1.msra.mxu0 %v268
    %385 = vmatprep.subr.mxu0 0.0
    %386 = vmatpush1.msra.mxu0 %v264
    %387 = vmatprep.subr.mxu0 0.0
    %388 = vmatpush1.msra.mxu0 %v260
    %389 = vmatprep.subr.mxu0 0.0
    %390 = vmatpush2.msra.mxu0 0.0
    %391 = vmatprep.subr.mxu0 0.0
    %392 = vmatpush2.msra.mxu0 0.0
    %393 = vmatprep.subr.mxu0 0.0
    %394 = vmatpush2.msra.mxu0 0.0
    %395 = vmatprep.subr.mxu0 0.0
    %396 = vmatpush2.msra.mxu0 0.0
    %397 = vmatprep.subr.mxu0 0.0
    %398 = vmatpush2.msra.mxu0 0.0
    %399 = vmatprep.subr.mxu0 0.0
    %400 = vmatpush2.msra.mxu0 0.0
    %401 = vmatprep.subr.mxu0 0.0
    %402 = vmatpush2.msra.mxu0 0.0
    %403 = vmatprep.subr.mxu0 0.0
    %404 = vmatpush2.msra.mxu0 0.0
    %405 = vmatprep.subr.mxu0 0.0
    %406 = vmatpush2.msra.mxu0 0.0
    %407 = vmatprep.subr.mxu0 0.0
    %408 = vmatpush2.msra.mxu0 0.0
    %409 = vmatprep.subr.mxu0 0.0
    %410 = vmatpush2.msra.mxu0 0.0
    %411 = vmatprep.subr.mxu0 0.0
    %412 = vmatpush2.msra.mxu0 0.0
    %413 = vmatprep.subr.mxu0 0.0
    %414 = vmatpush2.msra.mxu0 0.0
    %415 = vmatprep.subr.mxu0 0.0
    %416 = vmatpush2.msra.mxu0 0.0
    %417 = vmatprep.subr.mxu0 0.0
    %418 = vmatpush2.msra.mxu0 0.0
    %419 = vmatprep.subr.mxu0 0.0
    %420 = vmatpush2.msra.mxu0 0.0
    %421 = vmatprep.mubr.f32.mxu0 0.0
    %422 = vmatmul.mubr.f32.gmra.mxu0 %v275
    %v423 = vpop.f32.mrf.mxu0
    %v424 = vadd.f32 0.0, %v423
    %v425 = vpop.f32.mrf.mxu0
    %426 = vmatprep.mubr.f32.mxu0 0.0
    %427 = vmatmul.mubr.f32.gmra.mxu0 %v278
    %v428 = vpop.f32.mrf.mxu0
    %v429 = vadd.f32 0.0, %v428
    %v430 = vpop.f32.mrf.mxu0
    %431 = vdwg.mxu0
    %v432 = vld [vmem:[%s5 + $0x2] sm:$0x1]
    %v433 = vlaneseq
    %v434 = vshrl.u32 %v433, 7
    %v435 = vsub.s32 0, %v434
    %v436 = vrot.slane %v432, %v435
    %v437 = vadd.f32 %v347, %v436
    %v438 = vadd.f32 %v353, %v436
    %v439 = vld [vmem:[%s5 + $0x3] sm:$0x1]
    %v440 = vlaneseq
    %v441 = vshrl.u32 %v440, 7
    %v442 = vsub.s32 0, %v441
    %v443 = vrot.slane %v439, %v442
    %v444 = vadd.f32 %v349, %v443
    %v445 = vadd.f32 %v355, %v443
    %v446 = vld [vmem:[%s5 + $0x4] sm:$0x1]
    %v447 = vlaneseq
    %v448 = vshrl.u32 %v447, 7
    %v449 = vsub.s32 0, %v448
    %v450 = vrot.slane %v446, %v449
    %v451 = vadd.f32 %v424, %v450
    %v452 = vadd.f32 %v429, %v450
    %vm453 = vcmask 130048
    %v455 = vsel %vm453, %v437, 0
    %v458 = vsel %vm453, %v444, 0
    %460 = vmatprep.subr.mxu0 0.0
    %461 = vmatpush1.xpose.msra.mxu0 0.0
    %462 = vmatprep.subr.mxu0 0.0
    %463 = vmatpush1.xpose.msra.mxu0 0.0
    %464 = vmatprep.subr.mxu0 0.0
    %465 = vmatpush1.xpose.msra.mxu0 0.0
    %466 = vmatprep.subr.mxu0 0.0
    %467 = vmatpush1.xpose.msra.mxu0 0.0
    %468 = vmatprep.subr.mxu0 0.0
    %469 = vmatpush1.xpose.msra.mxu0 0.0
    %470 = vmatprep.subr.mxu0 0.0
    %471 = vmatpush1.xpose.msra.mxu0 0.0
    %472 = vmatprep.subr.mxu0 0.0
    %473 = vmatpush1.xpose.msra.mxu0 0.0
    %474 = vmatprep.subr.mxu0 0.0
    %475 = vmatpush1.xpose.msra.mxu0 0.0
    %476 = vmatprep.subr.mxu0 0.0
    %477 = vmatpush1.xpose.msra.mxu0 0.0
    %478 = vmatprep.subr.mxu0 0.0
    %479 = vmatpush1.xpose.msra.mxu0 0.0
    %480 = vmatprep.subr.mxu0 0.0
    %481 = vmatpush1.xpose.msra.mxu0 0.0
    %482 = vmatprep.subr.mxu0 0.0
    %483 = vmatpush1.xpose.msra.mxu0 0.0
    %484 = vmatprep.subr.mxu0 0.0
    %485 = vmatpush1.xpose.msra.mxu0 0.0
    %486 = vmatprep.subr.mxu0 0.0
    %487 = vmatpush1.xpose.msra.mxu0 0.0
    %488 = vmatprep.subr.mxu0 0.0
    %489 = vmatpush1.xpose.msra.mxu0 0.0
    %490 = vmatprep.subr.mxu0 0.0
    %491 = vmatpush1.xpose.msra.mxu0 %v458
    %492 = vmatprep.subr.mxu0 0.0
    %493 = vmatpush2.xpose.msra.mxu0 0.0
    %494 = vmatprep.subr.mxu0 0.0
    %495 = vmatpush2.xpose.msra.mxu0 0.0
    %496 = vmatprep.subr.mxu0 0.0
    %497 = vmatpush2.xpose.msra.mxu0 0.0
    %498 = vmatprep.subr.mxu0 0.0
    %499 = vmatpush2.xpose.msra.mxu0 0.0
    %500 = vmatprep.subr.mxu0 0.0
    %501 = vmatpush2.xpose.msra.mxu0 0.0
    %502 = vmatprep.subr.mxu0 0.0
    %503 = vmatpush2.xpose.msra.mxu0 0.0
    %504 = vmatprep.subr.mxu0 0.0
    %505 = vmatpush2.xpose.msra.mxu0 0.0
    %506 = vmatprep.subr.mxu0 0.0
    %507 = vmatpush2.xpose.msra.mxu0 0.0
    %508 = vmatprep.subr.mxu0 0.0
    %509 = vmatpush2.xpose.msra.mxu0 0.0
    %510 = vmatprep.subr.mxu0 0.0
    %511 = vmatpush2.xpose.msra.mxu0 0.0
    %512 = vmatprep.subr.mxu0 0.0
    %513 = vmatpush2.xpose.msra.mxu0 0.0
    %514 = vmatprep.subr.mxu0 0.0
    %515 = vmatpush2.xpose.msra.mxu0 0.0
    %516 = vmatprep.subr.mxu0 0.0
    %517 = vmatpush2.xpose.msra.mxu0 0.0
    %518 = vmatprep.subr.mxu0 0.0
    %519 = vmatpush2.xpose.msra.mxu0 0.0
    %520 = vmatprep.subr.mxu0 0.0
    %521 = vmatpush2.xpose.msra.mxu0 0.0
    %522 = vmatprep.subr.mxu0 0.0
    %523 = vmatpush2.xpose.msra.mxu0 0.0
    %524 = vmatprep.mubr.f32.mxu0 0.0
    %525 = vmatmul.mubr.f32.gmra.mxu0 %v455
    %v526 = vpop.f32.mrf.mxu0
    %v527 = vadd.f32 0.0, %v526
    %v528 = vpop.f32.mrf.mxu0
    %529 = vdwg.mxu0
    %v531 = vsel %vm453, %v438, 0
    %v534 = vsel %vm453, %v445, 0
    %536 = vmatprep.subr.mxu0 0.0
    %537 = vmatpush1.xpose.msra.mxu0 0.0
    %538 = vmatprep.subr.mxu0 0.0
    %539 = vmatpush1.xpose.msra.mxu0 0.0
    %540 = vmatprep.subr.mxu0 0.0
    %541 = vmatpush1.xpose.msra.mxu0 0.0
    %542 = vmatprep.subr.mxu0 0.0
    %543 = vmatpush1.xpose.msra.mxu0 0.0
    %544 = vmatprep.subr.mxu0 0.0
    %545 = vmatpush1.xpose.msra.mxu0 0.0
    %546 = vmatprep.subr.mxu0 0.0
    %547 = vmatpush1.xpose.msra.mxu0 0.0
    %548 = vmatprep.subr.mxu0 0.0
    %549 = vmatpush1.xpose.msra.mxu0 0.0
    %550 = vmatprep.subr.mxu0 0.0
    %551 = vmatpush1.xpose.msra.mxu0 0.0
    %552 = vmatprep.subr.mxu0 0.0
    %553 = vmatpush1.xpose.msra.mxu0 0.0
    %554 = vmatprep.subr.mxu0 0.0
    %555 = vmatpush1.xpose.msra.mxu0 0.0
    %556 = vmatprep.subr.mxu0 0.0
    %557 = vmatpush1.xpose.msra.mxu0 0.0
    %558 = vmatprep.subr.mxu0 0.0
    %559 = vmatpush1.xpose.msra.mxu0 0.0
    %560 = vmatprep.subr.mxu0 0.0
    %561 = vmatpush1.xpose.msra.mxu0 0.0
    %562 = vmatprep.subr.mxu0 0.0
    %563 = vmatpush1.xpose.msra.mxu0 0.0
    %564 = vmatprep.subr.mxu0 0.0
    %565 = vmatpush1.xpose.msra.mxu0 0.0
    %566 = vmatprep.subr.mxu0 0.0
    %567 = vmatpush1.xpose.msra.mxu0 %v534
    %568 = vmatprep.subr.mxu0 0.0
    %569 = vmatpush2.xpose.msra.mxu0 0.0
    %570 = vmatprep.subr.mxu0 0.0
    %571 = vmatpush2.xpose.msra.mxu0 0.0
    %572 = vmatprep.subr.mxu0 0.0
    %573 = vmatpush2.xpose.msra.mxu0 0.0
    %574 = vmatprep.subr.mxu0 0.0
    %575 = vmatpush2.xpose.msra.mxu0 0.0
    %576 = vmatprep.subr.mxu0 0.0
    %577 = vmatpush2.xpose.msra.mxu0 0.0
    %578 = vmatprep.subr.mxu0 0.0
    %579 = vmatpush2.xpose.msra.mxu0 0.0
    %580 = vmatprep.subr.mxu0 0.0
    %581 = vmatpush2.xpose.msra.mxu0 0.0
    %582 = vmatprep.subr.mxu0 0.0
    %583 = vmatpush2.xpose.msra.mxu0 0.0
    %584 = vmatprep.subr.mxu0 0.0
    %585 = vmatpush2.xpose.msra.mxu0 0.0
    %586 = vmatprep.subr.mxu0 0.0
    %587 = vmatpush2.xpose.msra.mxu0 0.0
    %588 = vmatprep.subr.mxu0 0.0
    %589 = vmatpush2.xpose.msra.mxu0 0.0
    %590 = vmatprep.subr.mxu0 0.0
    %591 = vmatpush2.xpose.msra.mxu0 0.0
    %592 = vmatprep.subr.mxu0 0.0
    %593 = vmatpush2.xpose.msra.mxu0 0.0
    %594 = vmatprep.subr.mxu0 0.0
    %595 = vmatpush2.xpose.msra.mxu0 0.0
    %596 = vmatprep.subr.mxu0 0.0
    %597 = vmatpush2.xpose.msra.mxu0 0.0
    %598 = vmatprep.subr.mxu0 0.0
    %599 = vmatpush2.xpose.msra.mxu0 0.0
    %600 = vmatprep.mubr.f32.mxu0 0.0
    %601 = vmatmul.mubr.f32.gmra.mxu0 %v531
    %v602 = vpop.f32.mrf.mxu0
    %v603 = vadd.f32 0.0, %v602
    %v604 = vpop.f32.mrf.mxu0
    %605 = vdwg.mxu0
    %v606 = vmul.f32 %v527, 0.25
    %v607 = vmul.f32 %v603, 0.25
    %v608 = vadd.f32 %v606, %v251
    %v609 = vadd.f32 %v607, %v255
    %vm610 = vcmask 64512
    %v611 = vsel %vm610, %v608, -inf
    %612 = vmax.xlane.f32.xlu0 %v611
    %v613 = vpop.xlane.xlu0 %612
    %v614 = vsel %vm610, %v609, -inf
    %615 = vmax.xlane.f32.xlu0 %v614
    %v616 = vpop.xlane.xlu0 %615
    %v617 = vsub.f32 %v608, %v613
    %v618 = vsub.f32 %v609, %v616
    %v619 = vmul.f32 %v617, 1.442695
    %v620 = vpow.pop %v619
    %v621 = vmul.f32 %v618, 1.442695
    %v622 = vpow.pop %v621
    %v623 = vsel %vm610, %v620, 0.0
    %624 = vadd.xlane.f32.xlu0 %v623
    %v625 = vpop.xlane.xlu0 %624
    %v626 = vsel %vm610, %v622, 0.0
    %627 = vadd.xlane.f32.xlu0 %v626
    %v628 = vpop.xlane.xlu0 %627
    %v629 = vrcp.pop %v625
    %v630 = vrcp.pop %v628
    %v631 = vmul.f32 %v620, %v629
    %v632 = vmul.f32 %v622, %v630
    %v634 = vsel %vm610, %v631, 0
    %636 = vmatprep.subr.mxu0 0.0
    %637 = vmatpush1.msra.mxu0 0.0
    %638 = vmatprep.subr.mxu0 0.0
    %639 = vmatpush1.msra.mxu0 0.0
    %640 = vmatprep.subr.mxu0 0.0
    %641 = vmatpush1.msra.mxu0 0.0
    %642 = vmatprep.subr.mxu0 0.0
    %643 = vmatpush1.msra.mxu0 0.0
    %644 = vmatprep.subr.mxu0 0.0
    %645 = vmatpush1.msra.mxu0 0.0
    %646 = vmatprep.subr.mxu0 0.0
    %647 = vmatpush1.msra.mxu0 0.0
    %648 = vmatprep.subr.mxu0 0.0
    %649 = vmatpush1.msra.mxu0 0.0
    %650 = vmatprep.subr.mxu0 0.0
    %651 = vmatpush1.msra.mxu0 0.0
    %652 = vmatprep.subr.mxu0 0.0
    %653 = vmatpush1.msra.mxu0 0.0
    %654 = vmatprep.subr.mxu0 0.0
    %655 = vmatpush1.msra.mxu0 0.0
    %656 = vmatprep.subr.mxu0 0.0
    %657 = vmatpush1.msra.mxu0 0.0
    %658 = vmatprep.subr.mxu0 0.0
    %659 = vmatpush1.msra.mxu0 0.0
    %660 = vmatprep.subr.mxu0 0.0
    %661 = vmatpush1.msra.mxu0 0.0
    %662 = vmatprep.subr.mxu0 0.0
    %663 = vmatpush1.msra.mxu0 0.0
    %664 = vmatprep.subr.mxu0 0.0
    %665 = vmatpush1.msra.mxu0 0.0
    %666 = vmatprep.subr.mxu0 0.0
    %667 = vmatpush1.msra.mxu0 %v451
    %668 = vmatprep.subr.mxu0 0.0
    %669 = vmatpush2.msra.mxu0 0.0
    %670 = vmatprep.subr.mxu0 0.0
    %671 = vmatpush2.msra.mxu0 0.0
    %672 = vmatprep.subr.mxu0 0.0
    %673 = vmatpush2.msra.mxu0 0.0
    %674 = vmatprep.subr.mxu0 0.0
    %675 = vmatpush2.msra.mxu0 0.0
    %676 = vmatprep.subr.mxu0 0.0
    %677 = vmatpush2.msra.mxu0 0.0
    %678 = vmatprep.subr.mxu0 0.0
    %679 = vmatpush2.msra.mxu0 0.0
    %680 = vmatprep.subr.mxu0 0.0
    %681 = vmatpush2.msra.mxu0 0.0
    %682 = vmatprep.subr.mxu0 0.0
    %683 = vmatpush2.msra.mxu0 0.0
    %684 = vmatprep.subr.mxu0 0.0
    %685 = vmatpush2.msra.mxu0 0.0
    %686 = vmatprep.subr.mxu0 0.0
    %687 = vmatpush2.msra.mxu0 0.0
    %688 = vmatprep.subr.mxu0 0.0
    %689 = vmatpush2.msra.mxu0 0.0
    %690 = vmatprep.subr.mxu0 0.0
    %691 = vmatpush2.msra.mxu0 0.0
    %692 = vmatprep.subr.mxu0 0.0
    %693 = vmatpush2.msra.mxu0 0.0
    %694 = vmatprep.subr.mxu0 0.0
    %695 = vmatpush2.msra.mxu0 0.0
    %696 = vmatprep.subr.mxu0 0.0
    %697 = vmatpush2.msra.mxu0 0.0
    %698 = vmatprep.subr.mxu0 0.0
    %699 = vmatpush2.msra.mxu0 0.0
    %700 = vmatprep.mubr.f32.mxu0 0.0
    %701 = vmatmul.mubr.f32.gmra.mxu0 %v634
    %v702 = vpop.f32.mrf.mxu0
    %v703 = vadd.f32 0.0, %v702
    %v704 = vpop.f32.mrf.mxu0
    %705 = vdwg.mxu0
    %v707 = vsel %vm610, %v632, 0
    %709 = vmatprep.subr.mxu0 0.0
    %710 = vmatpush1.msra.mxu0 0.0
    %711 = vmatprep.subr.mxu0 0.0
    %712 = vmatpush1.msra.mxu0 0.0
    %713 = vmatprep.subr.mxu0 0.0
    %714 = vmatpush1.msra.mxu0 0.0
    %715 = vmatprep.subr.mxu0 0.0
    %716 = vmatpush1.msra.mxu0 0.0
    %717 = vmatprep.subr.mxu0 0.0
    %718 = vmatpush1.msra.mxu0 0.0
    %719 = vmatprep.subr.mxu0 0.0
    %720 = vmatpush1.msra.mxu0 0.0
    %721 = vmatprep.subr.mxu0 0.0
    %722 = vmatpush1.msra.mxu0 0.0
    %723 = vmatprep.subr.mxu0 0.0
    %724 = vmatpush1.msra.mxu0 0.0
    %725 = vmatprep.subr.mxu0 0.0
    %726 = vmatpush1.msra.mxu0 0.0
    %727 = vmatprep.subr.mxu0 0.0
    %728 = vmatpush1.msra.mxu0 0.0
    %729 = vmatprep.subr.mxu0 0.0
    %730 = vmatpush1.msra.mxu0 0.0
    %731 = vmatprep.subr.mxu0 0.0
    %732 = vmatpush1.msra.mxu0 0.0
    %733 = vmatprep.subr.mxu0 0.0
    %734 = vmatpush1.msra.mxu0 0.0
    %735 = vmatprep.subr.mxu0 0.0
    %736 = vmatpush1.msra.mxu0 0.0
    %737 = vmatprep.subr.mxu0 0.0
    %738 = vmatpush1.msra.mxu0 0.0
    %739 = vmatprep.subr.mxu0 0.0
    %740 = vmatpush1.msra.mxu0 %v452
    %741 = vmatprep.subr.mxu0 0.0
    %742 = vmatpush2.msra.mxu0 0.0
    %743 = vmatprep.subr.mxu0 0.0
    %744 = vmatpush2.msra.mxu0 0.0
    %745 = vmatprep.subr.mxu0 0.0
    %746 = vmatpush2.msra.mxu0 0.0
    %747 = vmatprep.subr.mxu0 0.0
    %748 = vmatpush2.msra.mxu0 0.0
    %749 = vmatprep.subr.mxu0 0.0
    %750 = vmatpush2.msra.mxu0 0.0
    %751 = vmatprep.subr.mxu0 0.0
    %752 = vmatpush2.msra.mxu0 0.0
    %753 = vmatprep.subr.mxu0 0.0
    %754 = vmatpush2.msra.mxu0 0.0
    %755 = vmatprep.subr.mxu0 0.0
    %756 = vmatpush2.msra.mxu0 0.0
    %757 = vmatprep.subr.mxu0 0.0
    %758 = vmatpush2.msra.mxu0 0.0
    %759 = vmatprep.subr.mxu0 0.0
    %760 = vmatpush2.msra.mxu0 0.0
    %761 = vmatprep.subr.mxu0 0.0
    %762 = vmatpush2.msra.mxu0 0.0
    %763 = vmatprep.subr.mxu0 0.0
    %764 = vmatpush2.msra.mxu0 0.0
    %765 = vmatprep.subr.mxu0 0.0
    %766 = vmatpush2.msra.mxu0 0.0
    %767 = vmatprep.subr.mxu0 0.0
    %768 = vmatpush2.msra.mxu0 0.0
    %769 = vmatprep.subr.mxu0 0.0
    %770 = vmatpush2.msra.mxu0 0.0
    %771 = vmatprep.subr.mxu0 0.0
    %772 = vmatpush2.msra.mxu0 0.0
    %773 = vmatprep.mubr.f32.mxu0 0.0
    %774 = vmatmul.mubr.f32.gmra.mxu0 %v707
    %v775 = vpop.f32.mrf.mxu0
    %v776 = vadd.f32 0.0, %v775
    %v777 = vpop.f32.mrf.mxu0
    %778 = vdwg.mxu0
    %779 = vrot.lane.b32.xlu0 %v437, 112
    %v780 = vpop.permute.xlu0 %779
    %781 = vrot.lane.b32.xlu0 %v444, 112
    %v782 = vpop.permute.xlu0 %781
    %v783 = vsel %vm453, %v780, 0
    %v785 = vsel %vm453, %v782, 0
    %787 = vmatprep.subr.mxu0 0.0
    %788 = vmatpush1.xpose.msra.mxu0 0.0
    %789 = vmatprep.subr.mxu0 0.0
    %790 = vmatpush1.xpose.msra.mxu0 0.0
    %791 = vmatprep.subr.mxu0 0.0
    %792 = vmatpush1.xpose.msra.mxu0 0.0
    %793 = vmatprep.subr.mxu0 0.0
    %794 = vmatpush1.xpose.msra.mxu0 0.0
    %795 = vmatprep.subr.mxu0 0.0
    %796 = vmatpush1.xpose.msra.mxu0 0.0
    %797 = vmatprep.subr.mxu0 0.0
    %798 = vmatpush1.xpose.msra.mxu0 0.0
    %799 = vmatprep.subr.mxu0 0.0
    %800 = vmatpush1.xpose.msra.mxu0 0.0
    %801 = vmatprep.subr.mxu0 0.0
    %802 = vmatpush1.xpose.msra.mxu0 0.0
    %803 = vmatprep.subr.mxu0 0.0
    %804 = vmatpush1.xpose.msra.mxu0 0.0
    %805 = vmatprep.subr.mxu0 0.0
    %806 = vmatpush1.xpose.msra.mxu0 0.0
    %807 = vmatprep.subr.mxu0 0.0
    %808 = vmatpush1.xpose.msra.mxu0 0.0
    %809 = vmatprep.subr.mxu0 0.0
    %810 = vmatpush1.xpose.msra.mxu0 0.0
    %811 = vmatprep.subr.mxu0 0.0
    %812 = vmatpush1.xpose.msra.mxu0 0.0
    %813 = vmatprep.subr.mxu0 0.0
    %814 = vmatpush1.xpose.msra.mxu0 0.0
    %815 = vmatprep.subr.mxu0 0.0
    %816 = vmatpush1.xpose.msra.mxu0 0.0
    %817 = vmatprep.subr.mxu0 0.0
    %818 = vmatpush1.xpose.msra.mxu0 %v785
    %819 = vmatprep.subr.mxu0 0.0
    %820 = vmatpush2.xpose.msra.mxu0 0.0
    %821 = vmatprep.subr.mxu0 0.0
    %822 = vmatpush2.xpose.msra.mxu0 0.0
    %823 = vmatprep.subr.mxu0 0.0
    %824 = vmatpush2.xpose.msra.mxu0 0.0
    %825 = vmatprep.subr.mxu0 0.0
    %826 = vmatpush2.xpose.msra.mxu0 0.0
    %827 = vmatprep.subr.mxu0 0.0
    %828 = vmatpush2.xpose.msra.mxu0 0.0
    %829 = vmatprep.subr.mxu0 0.0
    %830 = vmatpush2.xpose.msra.mxu0 0.0
    %831 = vmatprep.subr.mxu0 0.0
    %832 = vmatpush2.xpose.msra.mxu0 0.0
    %833 = vmatprep.subr.mxu0 0.0
    %834 = vmatpush2.xpose.msra.mxu0 0.0
    %835 = vmatprep.subr.mxu0 0.0
    %836 = vmatpush2.xpose.msra.mxu0 0.0
    %837 = vmatprep.subr.mxu0 0.0
    %838 = vmatpush2.xpose.msra.mxu0 0.0
    %839 = vmatprep.subr.mxu0 0.0
    %840 = vmatpush2.xpose.msra.mxu0 0.0
    %841 = vmatprep.subr.mxu0 0.0
    %842 = vmatpush2.xpose.msra.mxu0 0.0
    %843 = vmatprep.subr.mxu0 0.0
    %844 = vmatpush2.xpose.msra.mxu0 0.0
    %845 = vmatprep.subr.mxu0 0.0
    %846 = vmatpush2.xpose.msra.mxu0 0.0
    %847 = vmatprep.subr.mxu0 0.0
    %848 = vmatpush2.xpose.msra.mxu0 0.0
    %849 = vmatprep.subr.mxu0 0.0
    %850 = vmatpush2.xpose.msra.mxu0 0.0
    %851 = vmatprep.mubr.f32.mxu0 0.0
    %852 = vmatmul.mubr.f32.gmra.mxu0 %v783
    %v853 = vpop.f32.mrf.mxu0
    %v854 = vadd.f32 0.0, %v853
    %v855 = vpop.f32.mrf.mxu0
    %856 = vdwg.mxu0
    %857 = vrot.lane.b32.xlu0 %v438, 112
    %v858 = vpop.permute.xlu0 %857
    %859 = vrot.lane.b32.xlu0 %v445, 112
    %v860 = vpop.permute.xlu0 %859
    %v861 = vsel %vm453, %v858, 0
    %v863 = vsel %vm453, %v860, 0
    %865 = vmatprep.subr.mxu0 0.0
    %866 = vmatpush1.xpose.msra.mxu0 0.0
    %867 = vmatprep.subr.mxu0 0.0
    %868 = vmatpush1.xpose.msra.mxu0 0.0
    %869 = vmatprep.subr.mxu0 0.0
    %870 = vmatpush1.xpose.msra.mxu0 0.0
    %871 = vmatprep.subr.mxu0 0.0
    %872 = vmatpush1.xpose.msra.mxu0 0.0
    %873 = vmatprep.subr.mxu0 0.0
    %874 = vmatpush1.xpose.msra.mxu0 0.0
    %875 = vmatprep.subr.mxu0 0.0
    %876 = vmatpush1.xpose.msra.mxu0 0.0
    %877 = vmatprep.subr.mxu0 0.0
    %878 = vmatpush1.xpose.msra.mxu0 0.0
    %879 = vmatprep.subr.mxu0 0.0
    %880 = vmatpush1.xpose.msra.mxu0 0.0
    %881 = vmatprep.subr.mxu0 0.0
    %882 = vmatpush1.xpose.msra.mxu0 0.0
    %883 = vmatprep.subr.mxu0 0.0
    %884 = vmatpush1.xpose.msra.mxu0 0.0
    %885 = vmatprep.subr.mxu0 0.0
    %886 = vmatpush1.xpose.msra.mxu0 0.0
    %887 = vmatprep.subr.mxu0 0.0
    %888 = vmatpush1.xpose.msra.mxu0 0.0
    %889 = vmatprep.subr.mxu0 0.0
    %890 = vmatpush1.xpose.msra.mxu0 0.0
    %891 = vmatprep.subr.mxu0 0.0
    %892 = vmatpush1.xpose.msra.mxu0 0.0
    %893 = vmatprep.subr.mxu0 0.0
    %894 = vmatpush1.xpose.msra.mxu0 0.0
    %895 = vmatprep.subr.mxu0 0.0
    %896 = vmatpush1.xpose.msra.mxu0 %v863
    %897 = vmatprep.subr.mxu0 0.0
    %898 = vmatpush2.xpose.msra.mxu0 0.0
    %899 = vmatprep.subr.mxu0 0.0
    %900 = vmatpush2.xpose.msra.mxu0 0.0
    %901 = vmatprep.subr.mxu0 0.0
    %902 = vmatpush2.xpose.msra.mxu0 0.0
    %903 = vmatprep.subr.mxu0 0.0
    %904 = vmatpush2.xpose.msra.mxu0 0.0
    %905 = vmatprep.subr.mxu0 0.0
    %906 = vmatpush2.xpose.msra.mxu0 0.0
    %907 = vmatprep.subr.mxu0 0.0
    %908 = vmatpush2.xpose.msra.mxu0 0.0
    %909 = vmatprep.subr.mxu0 0.0
    %910 = vmatpush2.xpose.msra.mxu0 0.0
    %911 = vmatprep.subr.mxu0 0.0
    %912 = vmatpush2.xpose.msra.mxu0 0.0
    %913 = vmatprep.subr.mxu0 0.0
    %914 = vmatpush2.xpose.msra.mxu0 0.0
    %915 = vmatprep.subr.mxu0 0.0
    %916 = vmatpush2.xpose.msra.mxu0 0.0
    %917 = vmatprep.subr.mxu0 0.0
    %918 = vmatpush2.xpose.msra.mxu0 0.0
    %919 = vmatprep.subr.mxu0 0.0
    %920 = vmatpush2.xpose.msra.mxu0 0.0
    %921 = vmatprep.subr.mxu0 0.0
    %922 = vmatpush2.xpose.msra.mxu0 0.0
    %923 = vmatprep.subr.mxu0 0.0
    %924 = vmatpush2.xpose.msra.mxu0 0.0
    %925 = vmatprep.subr.mxu0 0.0
    %926 = vmatpush2.xpose.msra.mxu0 0.0
    %927 = vmatprep.subr.mxu0 0.0
    %928 = vmatpush2.xpose.msra.mxu0 0.0
    %929 = vmatprep.mubr.f32.mxu0 0.0
    %930 = vmatmul.mubr.f32.gmra.mxu0 %v861
    %v931 = vpop.f32.mrf.mxu0
    %v932 = vadd.f32 0.0, %v931
    %v933 = vpop.f32.mrf.mxu0
    %934 = vdwg.mxu0
    %v935 = vmul.f32 %v854, 0.25
    %v936 = vmul.f32 %v932, 0.25
    %v937 = vadd.f32 %v935, %v251
    %v938 = vadd.f32 %v936, %v255
    %v939 = vsel %vm610, %v937, -inf
    %940 = vmax.xlane.f32.xlu0 %v939
    %v941 = vpop.xlane.xlu0 %940
    %v942 = vsel %vm610, %v938, -inf
    %943 = vmax.xlane.f32.xlu0 %v942
    %v944 = vpop.xlane.xlu0 %943
    %v945 = vsub.f32 %v937, %v941
    %v946 = vsub.f32 %v938, %v944
    %v947 = vmul.f32 %v945, 1.442695
    %v948 = vpow.pop %v947
    %v949 = vmul.f32 %v946, 1.442695
    %v950 = vpow.pop %v949
    %v951 = vsel %vm610, %v948, 0.0
    %952 = vadd.xlane.f32.xlu0 %v951
    %v953 = vpop.xlane.xlu0 %952
    %v954 = vsel %vm610, %v950, 0.0
    %955 = vadd.xlane.f32.xlu0 %v954
    %v956 = vpop.xlane.xlu0 %955
    %v957 = vrcp.pop %v953
    %v958 = vrcp.pop %v956
    %v959 = vmul.f32 %v948, %v957
    %v960 = vmul.f32 %v950, %v958
    %962 = vrot.lane.b32.xlu0 %v451, 112
    %v963 = vpop.permute.xlu0 %962
    %v966 = vsel %vm610, %v959, 0
    %968 = vmatprep.subr.mxu0 0.0
    %969 = vmatpush1.msra.mxu0 0.0
    %970 = vmatprep.subr.mxu0 0.0
    %971 = vmatpush1.msra.mxu0 0.0
    %972 = vmatprep.subr.mxu0 0.0
    %973 = vmatpush1.msra.mxu0 0.0
    %974 = vmatprep.subr.mxu0 0.0
    %975 = vmatpush1.msra.mxu0 0.0
    %976 = vmatprep.subr.mxu0 0.0
    %977 = vmatpush1.msra.mxu0 0.0
    %978 = vmatprep.subr.mxu0 0.0
    %979 = vmatpush1.msra.mxu0 0.0
    %980 = vmatprep.subr.mxu0 0.0
    %981 = vmatpush1.msra.mxu0 0.0
    %982 = vmatprep.subr.mxu0 0.0
    %983 = vmatpush1.msra.mxu0 0.0
    %984 = vmatprep.subr.mxu0 0.0
    %985 = vmatpush1.msra.mxu0 0.0
    %986 = vmatprep.subr.mxu0 0.0
    %987 = vmatpush1.msra.mxu0 0.0
    %988 = vmatprep.subr.mxu0 0.0
    %989 = vmatpush1.msra.mxu0 0.0
    %990 = vmatprep.subr.mxu0 0.0
    %991 = vmatpush1.msra.mxu0 0.0
    %992 = vmatprep.subr.mxu0 0.0
    %993 = vmatpush1.msra.mxu0 0.0
    %994 = vmatprep.subr.mxu0 0.0
    %995 = vmatpush1.msra.mxu0 0.0
    %996 = vmatprep.subr.mxu0 0.0
    %997 = vmatpush1.msra.mxu0 0.0
    %998 = vmatprep.subr.mxu0 0.0
    %999 = vmatpush1.msra.mxu0 %v963
    %1000 = vmatprep.subr.mxu0 0.0
    %1001 = vmatpush2.msra.mxu0 0.0
    %1002 = vmatprep.subr.mxu0 0.0
    %1003 = vmatpush2.msra.mxu0 0.0
    %1004 = vmatprep.subr.mxu0 0.0
    %1005 = vmatpush2.msra.mxu0 0.0
    %1006 = vmatprep.subr.mxu0 0.0
    %1007 = vmatpush2.msra.mxu0 0.0
    %1008 = vmatprep.subr.mxu0 0.0
    %1009 = vmatpush2.msra.mxu0 0.0
    %1010 = vmatprep.subr.mxu0 0.0
    %1011 = vmatpush2.msra.mxu0 0.0
    %1012 = vmatprep.subr.mxu0 0.0
    %1013 = vmatpush2.msra.mxu0 0.0
    %1014 = vmatprep.subr.mxu0 0.0
    %1015 = vmatpush2.msra.mxu0 0.0
    %1016 = vmatprep.subr.mxu0 0.0
    %1017 = vmatpush2.msra.mxu0 0.0
    %1018 = vmatprep.subr.mxu0 0.0
    %1019 = vmatpush2.msra.mxu0 0.0
    %1020 = vmatprep.subr.mxu0 0.0
    %1021 = vmatpush2.msra.mxu0 0.0
    %1022 = vmatprep.subr.mxu0 0.0
    %1023 = vmatpush2.msra.mxu0 0.0
    %1024 = vmatprep.subr.mxu0 0.0
    %1025 = vmatpush2.msra.mxu0 0.0
    %1026 = vmatprep.subr.mxu0 0.0
    %1027 = vmatpush2.msra.mxu0 0.0
    %1028 = vmatprep.subr.mxu0 0.0
    %1029 = vmatpush2.msra.mxu0 0.0
    %1030 = vmatprep.subr.mxu0 0.0
    %1031 = vmatpush2.msra.mxu0 0.0
    %1032 = vmatprep.mubr.f32.mxu0 0.0
    %1033 = vmatmul.mubr.f32.gmra.mxu0 %v966
    %v1034 = vpop.f32.mrf.mxu0
    %v1035 = vadd.f32 0.0, %v1034
    %v1036 = vpop.f32.mrf.mxu0
    %1037 = vdwg.mxu0
    %1039 = vrot.lane.b32.xlu0 %v452, 112
    %v1040 = vpop.permute.xlu0 %1039
    %v1043 = vsel %vm610, %v960, 0
    %1045 = vmatprep.subr.mxu0 0.0
    %1046 = vmatpush1.msra.mxu0 0.0
    %1047 = vmatprep.subr.mxu0 0.0
    %1048 = vmatpush1.msra.mxu0 0.0
    %1049 = vmatprep.subr.mxu0 0.0
    %1050 = vmatpush1.msra.mxu0 0.0
    %1051 = vmatprep.subr.mxu0 0.0
    %1052 = vmatpush1.msra.mxu0 0.0
    %1053 = vmatprep.subr.mxu0 0.0
    %1054 = vmatpush1.msra.mxu0 0.0
    %1055 = vmatprep.subr.mxu0 0.0
    %1056 = vmatpush1.msra.mxu0 0.0
    %1057 = vmatprep.subr.mxu0 0.0
    %1058 = vmatpush1.msra.mxu0 0.0
    %1059 = vmatprep.subr.mxu0 0.0
    %1060 = vmatpush1.msra.mxu0 0.0
    %1061 = vmatprep.subr.mxu0 0.0
    %1062 = vmatpush1.msra.mxu0 0.0
    %1063 = vmatprep.subr.mxu0 0.0
    %1064 = vmatpush1.msra.mxu0 0.0
    %1065 = vmatprep.subr.mxu0 0.0
    %1066 = vmatpush1.msra.mxu0 0.0
    %1067 = vmatprep.subr.mxu0 0.0
    %1068 = vmatpush1.msra.mxu0 0.0
    %1069 = vmatprep.subr.mxu0 0.0
    %1070 = vmatpush1.msra.mxu0 0.0
    %1071 = vmatprep.subr.mxu0 0.0
    %1072 = vmatpush1.msra.mxu0 0.0
    %1073 = vmatprep.subr.mxu0 0.0
    %1074 = vmatpush1.msra.mxu0 0.0
    %1075 = vmatprep.subr.mxu0 0.0
    %1076 = vmatpush1.msra.mxu0 %v1040
    %1077 = vmatprep.subr.mxu0 0.0
    %1078 = vmatpush2.msra.mxu0 0.0
    %1079 = vmatprep.subr.mxu0 0.0
    %1080 = vmatpush2.msra.mxu0 0.0
    %1081 = vmatprep.subr.mxu0 0.0
    %1082 = vmatpush2.msra.mxu0 0.0
    %1083 = vmatprep.subr.mxu0 0.0
    %1084 = vmatpush2.msra.mxu0 0.0
    %1085 = vmatprep.subr.mxu0 0.0
    %1086 = vmatpush2.msra.mxu0 0.0
    %1087 = vmatprep.subr.mxu0 0.0
    %1088 = vmatpush2.msra.mxu0 0.0
    %1089 = vmatprep.subr.mxu0 0.0
    %1090 = vmatpush2.msra.mxu0 0.0
    %1091 = vmatprep.subr.mxu0 0.0
    %1092 = vmatpush2.msra.mxu0 0.0
    %1093 = vmatprep.subr.mxu0 0.0
    %1094 = vmatpush2.msra.mxu0 0.0
    %1095 = vmatprep.subr.mxu0 0.0
    %1096 = vmatpush2.msra.mxu0 0.0
    %1097 = vmatprep.subr.mxu0 0.0
    %1098 = vmatpush2.msra.mxu0 0.0
    %1099 = vmatprep.subr.mxu0 0.0
    %1100 = vmatpush2.msra.mxu0 0.0
    %1101 = vmatprep.subr.mxu0 0.0
    %1102 = vmatpush2.msra.mxu0 0.0
    %1103 = vmatprep.subr.mxu0 0.0
    %1104 = vmatpush2.msra.mxu0 0.0
    %1105 = vmatprep.subr.mxu0 0.0
    %1106 = vmatpush2.msra.mxu0 0.0
    %1107 = vmatprep.subr.mxu0 0.0
    %1108 = vmatpush2.msra.mxu0 0.0
    %1109 = vmatprep.mubr.f32.mxu0 0.0
    %1110 = vmatmul.mubr.f32.gmra.mxu0 %v1043
    %v1111 = vpop.f32.mrf.mxu0
    %v1112 = vadd.f32 0.0, %v1111
    %v1113 = vpop.f32.mrf.mxu0
    %1114 = vdwg.mxu0
    %1117 = vrot.lane.b32.xlu0 %v1035, 16
    %v1118 = vpop.permute.xlu0 %1117
    %1119 = vrot.lane.b32.xlu0 %v1112, 16
    %v1120 = vpop.permute.xlu0 %1119
    %v1123 = vsel %vm453, %v703, %v1118
    %v1124 = vsel %vm453, %v776, %v1120
    %v1125 = vld [vmem:[%s5 + $0x5] sm:$0x1]
    %v1126 = vlaneseq
    %v1127 = vshrl.u32 %v1126, 7
    %v1128 = vsub.s32 0, %v1127
    %v1129 = vrot.slane %v1125, %v1128
    %v1131 = vsel %vm181, %v1123, 0
    %v1134 = vsel %vm181, %v1124, 0
    %1136 = vmatprep.subr.mxu0 0.0
    %1137 = vmatpush1.msra.mxu0 0.0
    %1138 = vmatprep.subr.mxu0 0.0
    %1139 = vmatpush1.msra.mxu0 0.0
    %1140 = vmatprep.subr.mxu0 0.0
    %1141 = vmatpush1.msra.mxu0 0.0
    %1142 = vmatprep.subr.mxu0 0.0
    %1143 = vmatpush1.msra.mxu0 0.0
    %1144 = vmatprep.subr.mxu0 0.0
    %1145 = vmatpush1.msra.mxu0 0.0
    %1146 = vmatprep.subr.mxu0 0.0
    %1147 = vmatpush1.msra.mxu0 0.0
    %1148 = vmatprep.subr.mxu0 0.0
    %1149 = vmatpush1.msra.mxu0 0.0
    %1150 = vmatprep.subr.mxu0 0.0
    %1151 = vmatpush1.msra.mxu0 0.0
    %1152 = vmatprep.subr.mxu0 0.0
    %1153 = vmatpush1.msra.mxu0 0.0
    %1154 = vmatprep.subr.mxu0 0.0
    %1155 = vmatpush1.msra.mxu0 0.0
    %1156 = vmatprep.subr.mxu0 0.0
    %1157 = vmatpush1.msra.mxu0 0.0
    %1158 = vmatprep.subr.mxu0 0.0
    %1159 = vmatpush1.msra.mxu0 0.0
    %1160 = vmatprep.subr.mxu0 0.0
    %1161 = vmatpush1.msra.mxu0 %v273
    %1162 = vmatprep.subr.mxu0 0.0
    %1163 = vmatpush1.msra.mxu0 %v269
    %1164 = vmatprep.subr.mxu0 0.0
    %1165 = vmatpush1.msra.mxu0 %v265
    %1166 = vmatprep.subr.mxu0 0.0
    %1167 = vmatpush1.msra.mxu0 %v261
    %1168 = vmatprep.subr.mxu0 0.0
    %1169 = vmatpush2.msra.mxu0 0.0
    %1170 = vmatprep.subr.mxu0 0.0
    %1171 = vmatpush2.msra.mxu0 0.0
    %1172 = vmatprep.subr.mxu0 0.0
    %1173 = vmatpush2.msra.mxu0 0.0
    %1174 = vmatprep.subr.mxu0 0.0
    %1175 = vmatpush2.msra.mxu0 0.0
    %1176 = vmatprep.subr.mxu0 0.0
    %1177 = vmatpush2.msra.mxu0 0.0
    %1178 = vmatprep.subr.mxu0 0.0
    %1179 = vmatpush2.msra.mxu0 0.0
    %1180 = vmatprep.subr.mxu0 0.0
    %1181 = vmatpush2.msra.mxu0 0.0
    %1182 = vmatprep.subr.mxu0 0.0
    %1183 = vmatpush2.msra.mxu0 0.0
    %1184 = vmatprep.subr.mxu0 0.0
    %1185 = vmatpush2.msra.mxu0 0.0
    %1186 = vmatprep.subr.mxu0 0.0
    %1187 = vmatpush2.msra.mxu0 0.0
    %1188 = vmatprep.subr.mxu0 0.0
    %1189 = vmatpush2.msra.mxu0 0.0
    %1190 = vmatprep.subr.mxu0 0.0
    %1191 = vmatpush2.msra.mxu0 0.0
    %1192 = vmatprep.subr.mxu0 0.0
    %1193 = vmatpush2.msra.mxu0 0.0
    %1194 = vmatprep.subr.mxu0 0.0
    %1195 = vmatpush2.msra.mxu0 0.0
    %1196 = vmatprep.subr.mxu0 0.0
    %1197 = vmatpush2.msra.mxu0 0.0
    %1198 = vmatprep.subr.mxu0 0.0
    %1199 = vmatpush2.msra.mxu0 0.0
    %1200 = vmatprep.mubr.f32.mxu0 0.0
    %1201 = vmatmul.mubr.f32.gmra.mxu0 %v1131
    %v1202 = vpop.f32.mrf.mxu0
    %v1203 = vadd.f32 %v1129, %v1202
    %v1204 = vpop.f32.mrf.mxu0
    %1205 = vmatprep.mubr.f32.mxu0 0.0
    %1206 = vmatmul.mubr.f32.gmra.mxu0 %v1134
    %v1207 = vpop.f32.mrf.mxu0
    %v1208 = vadd.f32 %v1129, %v1207
    %v1209 = vpop.f32.mrf.mxu0
    %1210 = vdwg.mxu0
    %v1211 = vadd.f32 %v219, %v1203
    %v1212 = vadd.f32 %v220, %v1208
    %v1213 = vld [vmem:[%s5 + $0x6] sm:$0x1]
    %v1214 = vld [vmem:[%s5 + $0x7] sm:$0x1]
    %v1215 = vsel %vm181, %v1211, 0.0
    %1216 = vadd.xlane.f32.xlu0 %v1215
    %v1217 = vpop.xlane.xlu0 %1216
    %v1218 = vsel %vm181, %v1212, 0.0
    %1219 = vadd.xlane.f32.xlu0 %v1218
    %v1220 = vpop.xlane.xlu0 %1219
    %v1221 = vmul.f32 %v1217, %v188
    %v1222 = vmul.f32 %v1220, %v188
    %v1223 = vsub.f32 %v1211, %v1221
    %v1224 = vsub.f32 %v1212, %v1222
    %v1225 = vmul.f32 %v1223, %v1223
    %v1226 = vmul.f32 %v1224, %v1224
    %v1227 = vsel %vm181, %v1225, 0.0
    %1228 = vadd.xlane.f32.xlu0 %v1227
    %v1229 = vpop.xlane.xlu0 %1228
    %v1230 = vsel %vm181, %v1226, 0.0
    %1231 = vadd.xlane.f32.xlu0 %v1230
    %v1232 = vpop.xlane.xlu0 %1231
    %v1233 = vmul.f32 %v1229, %v188
    %v1234 = vmul.f32 %v1232, %v188
    %v1235 = vadd.f32 %v1233, 1e-12
    %v1236 = vadd.f32 %v1234, 1e-12
    %v1237 = vrsqrt.pop %v1235
    %v1238 = vrsqrt.pop %v1236
    %v1239 = vmul.f32 %v1223, %v1237
    %v1240 = vmul.f32 %v1224, %v1238
    %v1241 = vlaneseq
    %v1242 = vshrl.u32 %v1241, 7
    %v1243 = vsub.s32 0, %v1242
    %v1244 = vrot.slane %v1213, %v1243
    %v1245 = vmul.f32 %v1239, %v1244
    %v1246 = vmul.f32 %v1240, %v1244
    %v1247 = vlaneseq
    %v1248 = vshrl.u32 %v1247, 7
    %v1249 = vsub.s32 0, %v1248
    %v1250 = vrot.slane %v1214, %v1249
    %v1251 = vadd.f32 %v1245, %v1250
    %v1252 = vadd.f32 %v1246, %v1250
    %v1253 = vld [vmem:[#allocation7] sm:$0xff]
    %v1254 = vld [vmem:[#allocation7 + $0x8] sm:$0xff]
    %v1255 = vld [vmem:[#allocation7 + $0x10] sm:$0xff]
    %v1256 = vld [vmem:[#allocation7 + $0x18] sm:$0xff]
    %v1257 = vld [vmem:[#allocation7 + $0x20] sm:$0xff]
    %v1258 = vld [vmem:[#allocation7 + $0x28] sm:$0xff]
    %v1259 = vld [vmem:[#allocation7 + $0x30] sm:$0xff]
    %v1260 = vld [vmem:[#allocation7 + $0x38] sm:$0xff]
    %v1261 = vld [vmem:[#allocation7 + $0x40] sm:$0xff]
    %v1262 = vld [vmem:[#allocation7 + $0x48] sm:$0xff]
    %v1263 = vld [vmem:[#allocation7 + $0x50] sm:$0xff]
    %v1264 = vld [vmem:[#allocation7 + $0x58] sm:$0xff]
    %v1265 = vld [vmem:[%s5 + $0x8] sm:$0x1]
    %v1266 = vlaneseq
    %v1267 = vshrl.u32 %v1266, 7
    %v1268 = vsub.s32 0, %v1267
    %v1269 = vrot.slane %v1265, %v1268
    %v1271 = vsel %vm181, %v1251, 0
    %v1274 = vsel %vm181, %v1252, 0
    %1276 = vmatprep.subr.mxu0 0.0
    %1277 = vmatpush1.msra.mxu0 0.0
    %1278 = vmatprep.subr.mxu0 0.0
    %1279 = vmatpush1.msra.mxu0 0.0
    %1280 = vmatprep.subr.mxu0 0.0
    %1281 = vmatpush1.msra.mxu0 0.0
    %1282 = vmatprep.subr.mxu0 0.0
    %1283 = vmatpush1.msra.mxu0 0.0
    %1284 = vmatprep.subr.mxu0 0.0
    %1285 = vmatpush1.msra.mxu0 0.0
    %1286 = vmatprep.subr.mxu0 0.0
    %1287 = vmatpush1.msra.mxu0 0.0
    %1288 = vmatprep.subr.mxu0 0.0
    %1289 = vmatpush1.msra.mxu0 0.0
    %1290 = vmatprep.subr.mxu0 0.0
    %1291 = vmatpush1.msra.mxu0 0.0
    %1292 = vmatprep.subr.mxu0 0.0
    %1293 = vmatpush1.msra.mxu0 0.0
    %1294 = vmatprep.subr.mxu0 0.0
    %1295 = vmatpush1.msra.mxu0 0.0
    %1296 = vmatprep.subr.mxu0 0.0
    %1297 = vmatpush1.msra.mxu0 0.0
    %1298 = vmatprep.subr.mxu0 0.0
    %1299 = vmatpush1.msra.mxu0 0.0
    %1300 = vmatprep.subr.mxu0 0.0
    %1301 = vmatpush1.msra.mxu0 %v1256
    %1302 = vmatprep.subr.mxu0 0.0
    %1303 = vmatpush1.msra.mxu0 %v1255
    %1304 = vmatprep.subr.mxu0 0.0
    %1305 = vmatpush1.msra.mxu0 %v1254
    %1306 = vmatprep.subr.mxu0 0.0
    %1307 = vmatpush1.msra.mxu0 %v1253
    %1308 = vmatprep.subr.mxu0 0.0
    %1309 = vmatpush2.msra.mxu0 0.0
    %1310 = vmatprep.subr.mxu0 0.0
    %1311 = vmatpush2.msra.mxu0 0.0
    %1312 = vmatprep.subr.mxu0 0.0
    %1313 = vmatpush2.msra.mxu0 0.0
    %1314 = vmatprep.subr.mxu0 0.0
    %1315 = vmatpush2.msra.mxu0 0.0
    %1316 = vmatprep.subr.mxu0 0.0
    %1317 = vmatpush2.msra.mxu0 0.0
    %1318 = vmatprep.subr.mxu0 0.0
    %1319 = vmatpush2.msra.mxu0 0.0
    %1320 = vmatprep.subr.mxu0 0.0
    %1321 = vmatpush2.msra.mxu0 0.0
    %1322 = vmatprep.subr.mxu0 0.0
    %1323 = vmatpush2.msra.mxu0 0.0
    %1324 = vmatprep.subr.mxu0 0.0
    %1325 = vmatpush2.msra.mxu0 0.0
    %1326 = vmatprep.subr.mxu0 0.0
    %1327 = vmatpush2.msra.mxu0 0.0
    %1328 = vmatprep.subr.mxu0 0.0
    %1329 = vmatpush2.msra.mxu0 0.0
    %1330 = vmatprep.subr.mxu0 0.0
    %1331 = vmatpush2.msra.mxu0 0.0
    %1332 = vmatprep.subr.mxu0 0.0
    %1333 = vmatpush2.msra.mxu0 0.0
    %1334 = vmatprep.subr.mxu0 0.0
    %1335 = vmatpush2.msra.mxu0 0.0
    %1336 = vmatprep.subr.mxu0 0.0
    %1337 = vmatpush2.msra.mxu0 0.0
    %1338 = vmatprep.subr.mxu0 0.0
    %1339 = vmatpush2.msra.mxu0 0.0
    %1340 = vmatprep.mubr.f32.mxu0 0.0
    %1341 = vmatmul.mubr.f32.gmra.mxu0 %v1271
    %v1342 = vpop.f32.mrf.mxu0
    %v1343 = vadd.f32 %v1269, %v1342
    %v1344 = vpop.f32.mrf.mxu0
    %1345 = vmatprep.mubr.f32.mxu0 0.0
    %1346 = vmatmul.mubr.f32.gmra.mxu0 %v1274
    %v1347 = vpop.f32.mrf.mxu0
    %v1348 = vadd.f32 %v1269, %v1347
    %v1349 = vpop.f32.mrf.mxu0
    %1350 = vdwg.mxu0
    %v1351 = vmul.f32 %v1343, 0.5
    %v1352 = vmul.f32 %v1348, 0.5
    %v1353 = vmul.f32 %v1343, 0.044715
    %v1354 = vmul.f32 %v1348, 0.044715
    %v1355 = vmul.f32 %v1353, %v1343
    %v1356 = vmul.f32 %v1354, %v1348
    %v1357 = vmul.f32 %v1355, %v1343
    %v1358 = vmul.f32 %v1356, %v1348
    %v1359 = vadd.f32 %v1343, %v1357
    %v1360 = vadd.f32 %v1348, %v1358
    %v1361 = vmul.f32 %v1359, 0.7978846
    %v1362 = vmul.f32 %v1360, 0.7978846
    %v1363 = vtanh.pop %v1361
    %v1364 = vtanh.pop %v1362
    %v1365 = vadd.f32 %v1363, 1.0
    %v1366 = vadd.f32 %v1364, 1.0
    %v1367 = vmul.f32 %v1351, %v1365
    %v1368 = vmul.f32 %v1352, %v1366
    %v1369 = vld [vmem:[%s5 + $0x9] sm:$0x1]
    %v1370 = vlaneseq
    %v1371 = vshrl.u32 %v1370, 7
    %v1372 = vsub.s32 0, %v1371
    %v1373 = vrot.slane %v1369, %v1372
    %vm1374 = vcmask 523264
    %v1376 = vsel %vm1374, %v1367, 0
    %v1379 = vsel %vm1374, %v1368, 0
    %1381 = vmatprep.subr.mxu0 0.0
    %1382 = vmatpush1.msra.mxu0 0.0
    %1383 = vmatprep.subr.mxu0 0.0
    %1384 = vmatpush1.msra.mxu0 0.0
    %1385 = vmatprep.subr.mxu0 0.0
    %1386 = vmatpush1.msra.mxu0 0.0
    %1387 = vmatprep.subr.mxu0 0.0
    %1388 = vmatpush1.msra.mxu0 0.0
    %1389 = vmatprep.subr.mxu0 0.0
    %1390 = vmatpush1.msra.mxu0 0.0
    %1391 = vmatprep.subr.mxu0 0.0
    %1392 = vmatpush1.msra.mxu0 0.0
    %1393 = vmatprep.subr.mxu0 0.0
    %1394 = vmatpush1.msra.mxu0 0.0
    %1395 = vmatprep.subr.mxu0 0.0
    %1396 = vmatpush1.msra.mxu0 0.0
    %1397 = vmatprep.subr.mxu0 0.0
    %1398 = vmatpush1.msra.mxu0 %v1264
    %1399 = vmatprep.subr.mxu0 0.0
    %1400 = vmatpush1.msra.mxu0 %v1263
    %1401 = vmatprep.subr.mxu0 0.0
    %1402 = vmatpush1.msra.mxu0 %v1262
    %1403 = vmatprep.subr.mxu0 0.0
    %1404 = vmatpush1.msra.mxu0 %v1261
    %1405 = vmatprep.subr.mxu0 0.0
    %1406 = vmatpush1.msra.mxu0 %v1260
    %1407 = vmatprep.subr.mxu0 0.0
    %1408 = vmatpush1.msra.mxu0 %v1259
    %1409 = vmatprep.subr.mxu0 0.0
    %1410 = vmatpush1.msra.mxu0 %v1258
    %1411 = vmatprep.subr.mxu0 0.0
    %1412 = vmatpush1.msra.mxu0 %v1257
    %1413 = vmatprep.subr.mxu0 0.0
    %1414 = vmatpush2.msra.mxu0 0.0
    %1415 = vmatprep.subr.mxu0 0.0
    %1416 = vmatpush2.msra.mxu0 0.0
    %1417 = vmatprep.subr.mxu0 0.0
    %1418 = vmatpush2.msra.mxu0 0.0
    %1419 = vmatprep.subr.mxu0 0.0
    %1420 = vmatpush2.msra.mxu0 0.0
    %1421 = vmatprep.subr.mxu0 0.0
    %1422 = vmatpush2.msra.mxu0 0.0
    %1423 = vmatprep.subr.mxu0 0.0
    %1424 = vmatpush2.msra.mxu0 0.0
    %1425 = vmatprep.subr.mxu0 0.0
    %1426 = vmatpush2.msra.mxu0 0.0
    %1427 = vmatprep.subr.mxu0 0.0
    %1428 = vmatpush2.msra.mxu0 0.0
    %1429 = vmatprep.subr.mxu0 0.0
    %1430 = vmatpush2.msra.mxu0 0.0
    %1431 = vmatprep.subr.mxu0 0.0
    %1432 = vmatpush2.msra.mxu0 0.0
    %1433 = vmatprep.subr.mxu0 0.0
    %1434 = vmatpush2.msra.mxu0 0.0
    %1435 = vmatprep.subr.mxu0 0.0
    %1436 = vmatpush2.msra.mxu0 0.0
    %1437 = vmatprep.subr.mxu0 0.0
    %1438 = vmatpush2.msra.mxu0 0.0
    %1439 = vmatprep.subr.mxu0 0.0
    %1440 = vmatpush2.msra.mxu0 0.0
    %1441 = vmatprep.subr.mxu0 0.0
    %1442 = vmatpush2.msra.mxu0 0.0
    %1443 = vmatprep.subr.mxu0 0.0
    %1444 = vmatpush2.msra.mxu0 0.0
    %1445 = vmatprep.mubr.f32.mxu0 0.0
    %1446 = vmatmul.mubr.f32.gmra.mxu0 %v1376
    %v1447 = vpop.f32.mrf.mxu0
    %v1448 = vadd.f32 %v1373, %v1447
    %v1449 = vpop.f32.mrf.mxu0
    %1450 = vmatprep.mubr.f32.mxu0 0.0
    %1451 = vmatmul.mubr.f32.gmra.mxu0 %v1379
    %v1452 = vpop.f32.mrf.mxu0
    %v1453 = vadd.f32 %v1373, %v1452
    %v1454 = vpop.f32.mrf.mxu0
    %1455 = vdwg.mxu0
    %v1456 = vadd.f32 %v1251, %v1448
    %v1457 = vadd.f32 %v1252, %v1453
    %v1458 = vld [vmem:[%s5 + $0xa] sm:$0x1]
    %v1459 = vld [vmem:[%s5 + $0xb] sm:$0x1]
    %v1460 = vsel %vm181, %v1456, 0.0
    %1461 = vadd.xlane.f32.xlu0 %v1460
    %v1462 = vpop.xlane.xlu0 %1461
    %v1463 = vsel %vm181, %v1457, 0.0
    %1464 = vadd.xlane.f32.xlu0 %v1463
    %v1465 = vpop.xlane.xlu0 %1464
    %v1466 = vmul.f32 %v1462, %v188
    %v1467 = vmul.f32 %v1465, %v188
    %v1468 = vsub.f32 %v1456, %v1466
    %v1469 = vsub.f32 %v1457, %v1467
    %v1470 = vmul.f32 %v1468, %v1468
    %v1471 = vmul.f32 %v1469, %v1469
    %v1472 = vsel %vm181, %v1470, 0.0
    %1473 = vadd.xlane.f32.xlu0 %v1472
    %v1474 = vpop.xlane.xlu0 %1473
    %v1475 = vsel %vm181, %v1471, 0.0
    %1476 = vadd.xlane.f32.xlu0 %v1475
    %v1477 = vpop.xlane.xlu0 %1476
    %v1478 = vmul.f32 %v1474, %v188
    %v1479 = vmul.f32 %v1477, %v188
    %v1480 = vadd.f32 %v1478, 1e-12
    %v1481 = vadd.f32 %v1479, 1e-12
    %v1482 = vrsqrt.pop %v1480
    %v1483 = vrsqrt.pop %v1481
    %v1484 = vmul.f32 %v1468, %v1482
    %v1485 = vmul.f32 %v1469, %v1483
    %v1486 = vlaneseq
    %v1487 = vshrl.u32 %v1486, 7
    %v1488 = vsub.s32 0, %v1487
    %v1489 = vrot.slane %v1458, %v1488
    %v1490 = vmul.f32 %v1484, %v1489
    %v1491 = vmul.f32 %v1485, %v1489
    %v1492 = vlaneseq
    %v1493 = vshrl.u32 %v1492, 7
    %v1494 = vsub.s32 0, %v1493
    %v1495 = vrot.slane %v1459, %v1494
    %v1496 = vadd.f32 %v1490, %v1495
    %v1497 = vadd.f32 %v1491, %v1495
    %s1498 = scalar_lea.vmem [#allocation6], 128
    %v1499 = vld [vmem:[%s1498] sm:$0xff]
    %v1500 = vld [vmem:[%s1498 + $0x8] sm:$0xff]
    %v1501 = vld [vmem:[%s1498 + $0x10] sm:$0xff]
    %v1502 = vld [vmem:[%s1498 + $0x18] sm:$0xff]
    %v1503 = vld [vmem:[%s1498 + $0x20] sm:$0xff]
    %v1504 = vld [vmem:[%s1498 + $0x28] sm:$0xff]
    %v1505 = vld [vmem:[%s1498 + $0x30] sm:$0xff]
    %v1506 = vld [vmem:[%s1498 + $0x38] sm:$0xff]
    %v1507 = vld [vmem:[%s1498 + $0x40] sm:$0xff]
    %v1508 = vld [vmem:[%s1498 + $0x48] sm:$0xff]
    %v1509 = vld [vmem:[%s1498 + $0x50] sm:$0xff]
    %v1510 = vld [vmem:[%s1498 + $0x58] sm:$0xff]
    %v1511 = vld [vmem:[%s1498 + $0x60] sm:$0xff]
    %v1512 = vld [vmem:[%s1498 + $0x68] sm:$0xff]
    %v1513 = vld [vmem:[%s1498 + $0x70] sm:$0xff]
    %v1514 = vld [vmem:[%s1498 + $0x78] sm:$0xff]
    %v1516 = vsel %vm181, %v1496, 0
    %v1519 = vsel %vm181, %v1497, 0
    %1521 = vmatprep.subr.mxu0 0.0
    %1522 = vmatpush1.msra.mxu0 0.0
    %1523 = vmatprep.subr.mxu0 0.0
    %1524 = vmatpush1.msra.mxu0 0.0
    %1525 = vmatprep.subr.mxu0 0.0
    %1526 = vmatpush1.msra.mxu0 0.0
    %1527 = vmatprep.subr.mxu0 0.0
    %1528 = vmatpush1.msra.mxu0 0.0
    %1529 = vmatprep.subr.mxu0 0.0
    %1530 = vmatpush1.msra.mxu0 0.0
    %1531 = vmatprep.subr.mxu0 0.0
    %1532 = vmatpush1.msra.mxu0 0.0
    %1533 = vmatprep.subr.mxu0 0.0
    %1534 = vmatpush1.msra.mxu0 0.0
    %1535 = vmatprep.subr.mxu0 0.0
    %1536 = vmatpush1.msra.mxu0 0.0
    %1537 = vmatprep.subr.mxu0 0.0
    %1538 = vmatpush1.msra.mxu0 0.0
    %1539 = vmatprep.subr.mxu0 0.0
    %1540 = vmatpush1.msra.mxu0 0.0
    %1541 = vmatprep.subr.mxu0 0.0
    %1542 = vmatpush1.msra.mxu0 0.0
    %1543 = vmatprep.subr.mxu0 0.0
    %1544 = vmatpush1.msra.mxu0 0.0
    %1545 = vmatprep.subr.mxu0 %v1512
    %1546 = vmatpush1.msra.mxu0 %v1511
    %1547 = vmatprep.subr.mxu0 %v1508
    %1548 = vmatpush1.msra.mxu0 %v1507
    %1549 = vmatprep.subr.mxu0 %v1504
    %1550 = vmatpush1.msra.mxu0 %v1503
    %1551 = vmatprep.subr.mxu0 %v1500
    %1552 = vmatpush1.msra.mxu0 %v1499
    %1553 = vmatprep.subr.mxu0 0.0
    %1554 = vmatpush2.msra.mxu0 0.0
    %1555 = vmatprep.subr.mxu0 0.0
    %1556 = vmatpush2.msra.mxu0 0.0
    %1557 = vmatprep.subr.mxu0 0.0
    %1558 = vmatpush2.msra.mxu0 0.0
    %1559 = vmatprep.subr.mxu0 0.0
    %1560 = vmatpush2.msra.mxu0 0.0
    %1561 = vmatprep.subr.mxu0 0.0
    %1562 = vmatpush2.msra.mxu0 0.0
    %1563 = vmatprep.subr.mxu0 0.0
    %1564 = vmatpush2.msra.mxu0 0.0
    %1565 = vmatprep.subr.mxu0 0.0
    %1566 = vmatpush2.msra.mxu0 0.0
    %1567 = vmatprep.subr.mxu0 0.0
    %1568 = vmatpush2.msra.mxu0 0.0
    %1569 = vmatprep.subr.mxu0 0.0
    %1570 = vmatpush2.msra.mxu0 0.0
    %1571 = vmatprep.subr.mxu0 0.0
    %1572 = vmatpush2.msra.mxu0 0.0
    %1573 = vmatprep.subr.mxu0 0.0
    %1574 = vmatpush2.msra.mxu0 0.0
    %1575 = vmatprep.subr.mxu0 0.0
    %1576 = vmatpush2.msra.mxu0 0.0
    %1577 = vmatprep.subr.mxu0 0.0
    %1578 = vmatpush2.msra.mxu0 0.0
    %1579 = vmatprep.subr.mxu0 0.0
    %1580 = vmatpush2.msra.mxu0 0.0
    %1581 = vmatprep.subr.mxu0 0.0
    %1582 = vmatpush2.msra.mxu0 0.0
    %1583 = vmatprep.subr.mxu0 0.0
    %1584 = vmatpush2.msra.mxu0 0.0
    %1585 = vmatprep.mubr.f32.mxu0 0.0
    %1586 = vmatmul.mubr.f32.gmra.mxu0 %v1516
    %v1587 = vpop.f32.mrf.mxu0
    %v1588 = vadd.f32 0.0, %v1587
    %v1589 = vpop.f32.mrf.mxu0
    %v1590 = vadd.f32 0.0, %v1589
    %1591 = vmatprep.mubr.f32.mxu0 0.0
    %1592 = vmatmul.mubr.f32.gmra.mxu0 %v1519
    %v1593 = vpop.f32.mrf.mxu0
    %v1594 = vadd.f32 0.0, %v1593
    %v1595 = vpop.f32.mrf.mxu0
    %v1596 = vadd.f32 0.0, %v1595
    %1597 = vdwg.mxu0
    %1598 = vmatprep.subr.mxu0 0.0
    %1599 = vmatpush1.msra.mxu0 0.0
    %1600 = vmatprep.subr.mxu0 0.0
    %1601 = vmatpush1.msra.mxu0 0.0
    %1602 = vmatprep.subr.mxu0 0.0
    %1603 = vmatpush1.msra.mxu0 0.0
    %1604 = vmatprep.subr.mxu0 0.0
    %1605 = vmatpush1.msra.mxu0 0.0
    %1606 = vmatprep.subr.mxu0 0.0
    %1607 = vmatpush1.msra.mxu0 0.0
    %1608 = vmatprep.subr.mxu0 0.0
    %1609 = vmatpush1.msra.mxu0 0.0
    %1610 = vmatprep.subr.mxu0 0.0
    %1611 = vmatpush1.msra.mxu0 0.0
    %1612 = vmatprep.subr.mxu0 0.0
    %1613 = vmatpush1.msra.mxu0 0.0
    %1614 = vmatprep.subr.mxu0 0.0
    %1615 = vmatpush1.msra.mxu0 0.0
    %1616 = vmatprep.subr.mxu0 0.0
    %1617 = vmatpush1.msra.mxu0 0.0
    %1618 = vmatprep.subr.mxu0 0.0
    %1619 = vmatpush1.msra.mxu0 0.0
    %1620 = vmatprep.subr.mxu0 0.0
    %1621 = vmatpush1.msra.mxu0 0.0
    %1622 = vmatprep.subr.mxu0 0.0
    %1623 = vmatpush1.msra.mxu0 %v1513
    %1624 = vmatprep.subr.mxu0 0.0
    %1625 = vmatpush1.msra.mxu0 %v1509
    %1626 = vmatprep.subr.mxu0 0.0
    %1627 = vmatpush1.msra.mxu0 %v1505
    %1628 = vmatprep.subr.mxu0 0.0
    %1629 = vmatpush1.msra.mxu0 %v1501
    %1630 = vmatprep.subr.mxu0 0.0
    %1631 = vmatpush2.msra.mxu0 0.0
    %1632 = vmatprep.subr.mxu0 0.0
    %1633 = vmatpush2.msra.mxu0 0.0
    %1634 = vmatprep.subr.mxu0 0.0
    %1635 = vmatpush2.msra.mxu0 0.0
    %1636 = vmatprep.subr.mxu0 0.0
    %1637 = vmatpush2.msra.mxu0 0.0
    %1638 = vmatprep.subr.mxu0 0.0
    %1639 = vmatpush2.msra.mxu0 0.0
    %1640 = vmatprep.subr.mxu0 0.0
    %1641 = vmatpush2.msra.mxu0 0.0
    %1642 = vmatprep.subr.mxu0 0.0
    %1643 = vmatpush2.msra.mxu0 0.0
    %1644 = vmatprep.subr.mxu0 0.0
    %1645 = vmatpush2.msra.mxu0 0.0
    %1646 = vmatprep.subr.mxu0 0.0
    %1647 = vmatpush2.msra.mxu0 0.0
    %1648 = vmatprep.subr.mxu0 0.0
    %1649 = vmatpush2.msra.mxu0 0.0
    %1650 = vmatprep.subr.mxu0 0.0
    %1651 = vmatpush2.msra.mxu0 0.0
    %1652 = vmatprep.subr.mxu0 0.0
    %1653 = vmatpush2.msra.mxu0 0.0
    %1654 = vmatprep.subr.mxu0 0.0
    %1655 = vmatpush2.msra.mxu0 0.0
    %1656 = vmatprep.subr.mxu0 0.0
    %1657 = vmatpush2.msra.mxu0 0.0
    %1658 = vmatprep.subr.mxu0 0.0
    %1659 = vmatpush2.msra.mxu0 0.0
    %1660 = vmatprep.subr.mxu0 0.0
    %1661 = vmatpush2.msra.mxu0 0.0
    %1662 = vmatprep.mubr.f32.mxu0 0.0
    %1663 = vmatmul.mubr.f32.gmra.mxu0 %v1516
    %v1664 = vpop.f32.mrf.mxu0
    %v1665 = vadd.f32 0.0, %v1664
    %v1666 = vpop.f32.mrf.mxu0
    %1667 = vmatprep.mubr.f32.mxu0 0.0
    %1668 = vmatmul.mubr.f32.gmra.mxu0 %v1519
    %v1669 = vpop.f32.mrf.mxu0
    %v1670 = vadd.f32 0.0, %v1669
    %v1671 = vpop.f32.mrf.mxu0
    %1672 = vdwg.mxu0
    %v1673 = vld [vmem:[%s5 + $0xc] sm:$0x1]
    %v1674 = vlaneseq
    %v1675 = vshrl.u32 %v1674, 7
    %v1676 = vsub.s32 0, %v1675
    %v1677 = vrot.slane %v1673, %v1676
    %v1678 = vadd.f32 %v1588, %v1677
    %v1679 = vadd.f32 %v1594, %v1677
    %v1680 = vld [vmem:[%s5 + $0xd] sm:$0x1]
    %v1681 = vlaneseq
    %v1682 = vshrl.u32 %v1681, 7
    %v1683 = vsub.s32 0, %v1682
    %v1684 = vrot.slane %v1680, %v1683
    %v1685 = vadd.f32 %v1590, %v1684
    %v1686 = vadd.f32 %v1596, %v1684
    %v1687 = vld [vmem:[%s5 + $0xe] sm:$0x1]
    %v1688 = vlaneseq
    %v1689 = vshrl.u32 %v1688, 7
    %v1690 = vsub.s32 0, %v1689
    %v1691 = vrot.slane %v1687, %v1690
    %v1692 = vadd.f32 %v1665, %v1691
    %v1693 = vadd.f32 %v1670, %v1691
    %v1695 = vsel %vm453, %v1678, 0
    %v1698 = vsel %vm453, %v1685, 0
    %1700 = vmatprep.subr.mxu0 0.0
    %1701 = vmatpush1.xpose.msra.mxu0 0.0
    %1702 = vmatprep.subr.mxu0 0.0
    %1703 = vmatpush1.xpose.msra.mxu0 0.0
    %1704 = vmatprep.subr.mxu0 0.0
    %1705 = vmatpush1.xpose.msra.mxu0 0.0
    %1706 = vmatprep.subr.mxu0 0.0
    %1707 = vmatpush1.xpose.msra.mxu0 0.0
    %1708 = vmatprep.subr.mxu0 0.0
    %1709 = vmatpush1.xpose.msra.mxu0 0.0
    %1710 = vmatprep.subr.mxu0 0.0
    %1711 = vmatpush1.xpose.msra.mxu0 0.0
    %1712 = vmatprep.subr.mxu0 0.0
    %1713 = vmatpush1.xpose.msra.mxu0 0.0
    %1714 = vmatprep.subr.mxu0 0.0
    %1715 = vmatpush1.xpose.msra.mxu0 0.0
    %1716 = vmatprep.subr.mxu0 0.0
    %1717 = vmatpush1.xpose.msra.mxu0 0.0
    %1718 = vmatprep.subr.mxu0 0.0
    %1719 = vmatpush1.xpose.msra.mxu0 0.0
    %1720 = vmatprep.subr.mxu0 0.0
    %1721 = vmatpush1.xpose.msra.mxu0 0.0
    %1722 = vmatprep.subr.mxu0 0.0
    %1723 = vmatpush1.xpose.msra.mxu0 0.0
    %1724 = vmatprep.subr.mxu0 0.0
    %1725 = vmatpush1.xpose.msra.mxu0 0.0
    %1726 = vmatprep.subr.mxu0 0.0
    %1727 = vmatpush1.xpose.msra.mxu0 0.0
    %1728 = vmatprep.subr.mxu0 0.0
    %1729 = vmatpush1.xpose.msra.mxu0 0.0
    %1730 = vmatprep.subr.mxu0 0.0
    %1731 = vmatpush1.xpose.msra.mxu0 %v1698
    %1732 = vmatprep.subr.mxu0 0.0
    %1733 = vmatpush2.xpose.msra.mxu0 0.0
    %1734 = vmatprep.subr.mxu0 0.0
    %1735 = vmatpush2.xpose.msra.mxu0 0.0
    %1736 = vmatprep.subr.mxu0 0.0
    %1737 = vmatpush2.xpose.msra.mxu0 0.0
    %1738 = vmatprep.subr.mxu0 0.0
    %1739 = vmatpush2.xpose.msra.mxu0 0.0
    %1740 = vmatprep.subr.mxu0 0.0
    %1741 = vmatpush2.xpose.msra.mxu0 0.0
    %1742 = vmatprep.subr.mxu0 0.0
    %1743 = vmatpush2.xpose.msra.mxu0 0.0
    %1744 = vmatprep.subr.mxu0 0.0
    %1745 = vmatpush2.xpose.msra.mxu0 0.0
    %1746 = vmatprep.subr.mxu0 0.0
    %1747 = vmatpush2.xpose.msra.mxu0 0.0
    %1748 = vmatprep.subr.mxu0 0.0
    %1749 = vmatpush2.xpose.msra.mxu0 0.0
    %1750 = vmatprep.subr.mxu0 0.0
    %1751 = vmatpush2.xpose.msra.mxu0 0.0
    %1752 = vmatprep.subr.mxu0 0.0
    %1753 = vmatpush2.xpose.msra.mxu0 0.0
    %1754 = vmatprep.subr.mxu0 0.0
    %1755 = vmatpush2.xpose.msra.mxu0 0.0
    %1756 = vmatprep.subr.mxu0 0.0
    %1757 = vmatpush2.xpose.msra.mxu0 0.0
    %1758 = vmatprep.subr.mxu0 0.0
    %1759 = vmatpush2.xpose.msra.mxu0 0.0
    %1760 = vmatprep.subr.mxu0 0.0
    %1761 = vmatpush2.xpose.msra.mxu0 0.0
    %1762 = vmatprep.subr.mxu0 0.0
    %1763 = vmatpush2.xpose.msra.mxu0 0.0
    %1764 = vmatprep.mubr.f32.mxu0 0.0
    %1765 = vmatmul.mubr.f32.gmra.mxu0 %v1695
    %v1766 = vpop.f32.mrf.mxu0
    %v1767 = vadd.f32 0.0, %v1766
    %v1768 = vpop.f32.mrf.mxu0
    %1769 = vdwg.mxu0
    %v1771 = vsel %vm453, %v1679, 0
    %v1774 = vsel %vm453, %v1686, 0
    %1776 = vmatprep.subr.mxu0 0.0
    %1777 = vmatpush1.xpose.msra.mxu0 0.0
    %1778 = vmatprep.subr.mxu0 0.0
    %1779 = vmatpush1.xpose.msra.mxu0 0.0
    %1780 = vmatprep.subr.mxu0 0.0
    %1781 = vmatpush1.xpose.msra.mxu0 0.0
    %1782 = vmatprep.subr.mxu0 0.0
    %1783 = vmatpush1.xpose.msra.mxu0 0.0
    %1784 = vmatprep.subr.mxu0 0.0
    %1785 = vmatpush1.xpose.msra.mxu0 0.0
    %1786 = vmatprep.subr.mxu0 0.0
    %1787 = vmatpush1.xpose.msra.mxu0 0.0
    %1788 = vmatprep.subr.mxu0 0.0
    %1789 = vmatpush1.xpose.msra.mxu0 0.0
    %1790 = vmatprep.subr.mxu0 0.0
    %1791 = vmatpush1.xpose.msra.mxu0 0.0
    %1792 = vmatprep.subr.mxu0 0.0
    %1793 = vmatpush1.xpose.msra.mxu0 0.0
    %1794 = vmatprep.subr.mxu0 0.0
    %1795 = vmatpush1.xpose.msra.mxu0 0.0
    %1796 = vmatprep.subr.mxu0 0.0
    %1797 = vmatpush1.xpose.msra.mxu0 0.0
    %1798 = vmatprep.subr.mxu0 0.0
    %1799 = vmatpush1.xpose.msra.mxu0 0.0
    %1800 = vmatprep.subr.mxu0 0.0
    %1801 = vmatpush1.xpose.msra.mxu0 0.0
    %1802 = vmatprep.subr.mxu0 0.0
    %1803 = vmatpush1.xpose.msra.mxu0 0.0
    %1804 = vmatprep.subr.mxu0 0.0
    %1805 = vmatpush1.xpose.msra.mxu0 0.0
    %1806 = vmatprep.subr.mxu0 0.0
    %1807 = vmatpush1.xpose.msra.mxu0 %v1774
    %1808 = vmatprep.subr.mxu0 0.0
    %1809 = vmatpush2.xpose.msra.mxu0 0.0
    %1810 = vmatprep.subr.mxu0 0.0
    %1811 = vmatpush2.xpose.msra.mxu0 0.0
    %1812 = vmatprep.subr.mxu0 0.0
    %1813 = vmatpush2.xpose.msra.mxu0 0.0
    %1814 = vmatprep.subr.mxu0 0.0
    %1815 = vmatpush2.xpose.msra.mxu0 0.0
    %1816 = vmatprep.subr.mxu0 0.0
    %1817 = vmatpush2.xpose.msra.mxu0 0.0
    %1818 = vmatprep.subr.mxu0 0.0
    %1819 = vmatpush2.xpose.msra.mxu0 0.0
    %1820 = vmatprep.subr.mxu0 0.0
    %1821 = vmatpush2.xpose.msra.mxu0 0.0
    %1822 = vmatprep.subr.mxu0 0.0
    %1823 = vmatpush2.xpose.msra.mxu0 0.0
    %1824 = vmatprep.subr.mxu0 0.0
    %1825 = vmatpush2.xpose.msra.mxu0 0.0
    %1826 = vmatprep.subr.mxu0 0.0
    %1827 = vmatpush2.xpose.msra.mxu0 0.0
    %1828 = vmatprep.subr.mxu0 0.0
    %1829 = vmatpush2.xpose.msra.mxu0 0.0
    %1830 = vmatprep.subr.mxu0 0.0
    %1831 = vmatpush2.xpose.msra.mxu0 0.0
    %1832 = vmatprep.subr.mxu0 0.0
    %1833 = vmatpush2.xpose.msra.mxu0 0.0
    %1834 = vmatprep.subr.mxu0 0.0
    %1835 = vmatpush2.xpose.msra.mxu0 0.0
    %1836 = vmatprep.subr.mxu0 0.0
    %1837 = vmatpush2.xpose.msra.mxu0 0.0
    %1838 = vmatprep.subr.mxu0 0.0
    %1839 = vmatpush2.xpose.msra.mxu0 0.0
    %1840 = vmatprep.mubr.f32.mxu0 0.0
    %1841 = vmatmul.mubr.f32.gmra.mxu0 %v1771
    %v1842 = vpop.f32.mrf.mxu0
    %v1843 = vadd.f32 0.0, %v1842
    %v1844 = vpop.f32.mrf.mxu0
    %1845 = vdwg.mxu0
    %v1846 = vmul.f32 %v1767, 0.25
    %v1847 = vmul.f32 %v1843, 0.25
    %v1848 = vadd.f32 %v1846, %v251
    %v1849 = vadd.f32 %v1847, %v255
    %v1850 = vsel %vm610, %v1848, -inf
    %1851 = vmax.xlane.f32.xlu0 %v1850
    %v1852 = vpop.xlane.xlu0 %1851
    %v1853 = vsel %vm610, %v1849, -inf
    %1854 = vmax.xlane.f32.xlu0 %v1853
    %v1855 = vpop.xlane.xlu0 %1854
    %v1856 = vsub.f32 %v1848, %v1852
    %v1857 = vsub.f32 %v1849, %v1855
    %v1858 = vmul.f32 %v1856, 1.442695
    %v1859 = vpow.pop %v1858
    %v1860 = vmul.f32 %v1857, 1.442695
    %v1861 = vpow.pop %v1860
    %v1862 = vsel %vm610, %v1859, 0.0
    %1863 = vadd.xlane.f32.xlu0 %v1862
    %v1864 = vpop.xlane.xlu0 %1863
    %v1865 = vsel %vm610, %v1861, 0.0
    %1866 = vadd.xlane.f32.xlu0 %v1865
    %v1867 = vpop.xlane.xlu0 %1866
    %v1868 = vrcp.pop %v1864
    %v1869 = vrcp.pop %v1867
    %v1870 = vmul.f32 %v1859, %v1868
    %v1871 = vmul.f32 %v1861, %v1869
    %v1873 = vsel %vm610, %v1870, 0
    %1875 = vmatprep.subr.mxu0 0.0
    %1876 = vmatpush1.msra.mxu0 0.0
    %1877 = vmatprep.subr.mxu0 0.0
    %1878 = vmatpush1.msra.mxu0 0.0
    %1879 = vmatprep.subr.mxu0 0.0
    %1880 = vmatpush1.msra.mxu0 0.0
    %1881 = vmatprep.subr.mxu0 0.0
    %1882 = vmatpush1.msra.mxu0 0.0
    %1883 = vmatprep.subr.mxu0 0.0
    %1884 = vmatpush1.msra.mxu0 0.0
    %1885 = vmatprep.subr.mxu0 0.0
    %1886 = vmatpush1.msra.mxu0 0.0
    %1887 = vmatprep.subr.mxu0 0.0
    %1888 = vmatpush1.msra.mxu0 0.0
    %1889 = vmatprep.subr.mxu0 0.0
    %1890 = vmatpush1.msra.mxu0 0.0
    %1891 = vmatprep.subr.mxu0 0.0
    %1892 = vmatpush1.msra.mxu0 0.0
    %1893 = vmatprep.subr.mxu0 0.0
    %1894 = vmatpush1.msra.mxu0 0.0
    %1895 = vmatprep.subr.mxu0 0.0
    %1896 = vmatpush1.msra.mxu0 0.0
    %1897 = vmatprep.subr.mxu0 0.0
    %1898 = vmatpush1.msra.mxu0 0.0
    %1899 = vmatprep.subr.mxu0 0.0
    %1900 = vmatpush1.msra.mxu0 0.0
    %1901 = vmatprep.subr.mxu0 0.0
    %1902 = vmatpush1.msra.mxu0 0.0
    %1903 = vmatprep.subr.mxu0 0.0
    %1904 = vmatpush1.msra.mxu0 0.0
    %1905 = vmatprep.subr.mxu0 0.0
    %1906 = vmatpush1.msra.mxu0 %v1692
    %1907 = vmatprep.subr.mxu0 0.0
    %1908 = vmatpush2.msra.mxu0 0.0
    %1909 = vmatprep.subr.mxu0 0.0
    %1910 = vmatpush2.msra.mxu0 0.0
    %1911 = vmatprep.subr.mxu0 0.0
    %1912 = vmatpush2.msra.mxu0 0.0
    %1913 = vmatprep.subr.mxu0 0.0
    %1914 = vmatpush2.msra.mxu0 0.0
    %1915 = vmatprep.subr.mxu0 0.0
    %1916 = vmatpush2.msra.mxu0 0.0
    %1917 = vmatprep.subr.mxu0 0.0
    %1918 = vmatpush2.msra.mxu0 0.0
    %1919 = vmatprep.subr.mxu0 0.0
    %1920 = vmatpush2.msra.mxu0 0.0
    %1921 = vmatprep.subr.mxu0 0.0
    %1922 = vmatpush2.msra.mxu0 0.0
    %1923 = vmatprep.subr.mxu0 0.0
    %1924 = vmatpush2.msra.mxu0 0.0
    %1925 = vmatprep.subr.mxu0 0.0
    %1926 = vmatpush2.msra.mxu0 0.0
    %1927 = vmatprep.subr.mxu0 0.0
    %1928 = vmatpush2.msra.mxu0 0.0
    %1929 = vmatprep.subr.mxu0 0.0
    %1930 = vmatpush2.msra.mxu0 0.0
    %1931 = vmatprep.subr.mxu0 0.0
    %1932 = vmatpush2.msra.mxu0 0.0
    %1933 = vmatprep.subr.mxu0 0.0
    %1934 = vmatpush2.msra.mxu0 0.0
    %1935 = vmatprep.subr.mxu0 0.0
    %1936 = vmatpush2.msra.mxu0 0.0
    %1937 = vmatprep.subr.mxu0 0.0
    %1938 = vmatpush2.msra.mxu0 0.0
    %1939 = vmatprep.mubr.f32.mxu0 0.0
    %1940 = vmatmul.mubr.f32.gmra.mxu0 %v1873
    %v1941 = vpop.f32.mrf.mxu0
    %v1942 = vadd.f32 0.0, %v1941
    %v1943 = vpop.f32.mrf.mxu0
    %1944 = vdwg.mxu0
    %v1946 = vsel %vm610, %v1871, 0
    %1948 = vmatprep.subr.mxu0 0.0
    %1949 = vmatpush1.msra.mxu0 0.0
    %1950 = vmatprep.subr.mxu0 0.0
    %1951 = vmatpush1.msra.mxu0 0.0
    %1952 = vmatprep.subr.mxu0 0.0
    %1953 = vmatpush1.msra.mxu0 0.0
    %1954 = vmatprep.subr.mxu0 0.0
    %1955 = vmatpush1.msra.mxu0 0.0
    %1956 = vmatprep.subr.mxu0 0.0
    %1957 = vmatpush1.msra.mxu0 0.0
    %1958 = vmatprep.subr.mxu0 0.0
    %1959 = vmatpush1.msra.mxu0 0.0
    %1960 = vmatprep.subr.mxu0 0.0
    %1961 = vmatpush1.msra.mxu0 0.0
    %1962 = vmatprep.subr.mxu0 0.0
    %1963 = vmatpush1.msra.mxu0 0.0
    %1964 = vmatprep.subr.mxu0 0.0
    %1965 = vmatpush1.msra.mxu0 0.0
    %1966 = vmatprep.subr.mxu0 0.0
    %1967 = vmatpush1.msra.mxu0 0.0
    %1968 = vmatprep.subr.mxu0 0.0
    %1969 = vmatpush1.msra.mxu0 0.0
    %1970 = vmatprep.subr.mxu0 0.0
    %1971 = vmatpush1.msra.mxu0 0.0
    %1972 = vmatprep.subr.mxu0 0.0
    %1973 = vmatpush1.msra.mxu0 0.0
    %1974 = vmatprep.subr.mxu0 0.0
    %1975 = vmatpush1.msra.mxu0 0.0
    %1976 = vmatprep.subr.mxu0 0.0
    %1977 = vmatpush1.msra.mxu0 0.0
    %1978 = vmatprep.subr.mxu0 0.0
    %1979 = vmatpush1.msra.mxu0 %v1693
    %1980 = vmatprep.subr.mxu0 0.0
    %1981 = vmatpush2.msra.mxu0 0.0
    %1982 = vmatprep.subr.mxu0 0.0
    %1983 = vmatpush2.msra.mxu0 0.0
    %1984 = vmatprep.subr.mxu0 0.0
    %1985 = vmatpush2.msra.mxu0 0.0
    %1986 = vmatprep.subr.mxu0 0.0
    %1987 = vmatpush2.msra.mxu0 0.0
    %1988 = vmatprep.subr.mxu0 0.0
    %1989 = vmatpush2.msra.mxu0 0.0
    %1990 = vmatprep.subr.mxu0 0.0
    %1991 = vmatpush2.msra.mxu0 0.0
    %1992 = vmatprep.subr.mxu0 0.0
    %1993 = vmatpush2.msra.mxu0 0.0
    %1994 = vmatprep.subr.mxu0 0.0
    %1995 = vmatpush2.msra.mxu0 0.0
    %1996 = vmatprep.subr.mxu0 0.0
    %1997 = vmatpush2.msra.mxu0 0.0
    %1998 = vmatprep.subr.mxu0 0.0
    %1999 = vmatpush2.msra.mxu0 0.0
    %2000 = vmatprep.subr.mxu0 0.0
    %2001 = vmatpush2.msra.mxu0 0.0
    %2002 = vmatprep.subr.mxu0 0.0
    %2003 = vmatpush2.msra.mxu0 0.0
    %2004 = vmatprep.subr.mxu0 0.0
    %2005 = vmatpush2.msra.mxu0 0.0
    %2006 = vmatprep.subr.mxu0 0.0
    %2007 = vmatpush2.msra.mxu0 0.0
    %2008 = vmatprep.subr.mxu0 0.0
    %2009 = vmatpush2.msra.mxu0 0.0
    %2010 = vmatprep.subr.mxu0 0.0
    %2011 = vmatpush2.msra.mxu0 0.0
    %2012 = vmatprep.mubr.f32.mxu0 0.0
    %2013 = vmatmul.mubr.f32.gmra.mxu0 %v1946
    %v2014 = vpop.f32.mrf.mxu0
    %v2015 = vadd.f32 0.0, %v2014
    %v2016 = vpop.f32.mrf.mxu0
    %2017 = vdwg.mxu0
    %2018 = vrot.lane.b32.xlu0 %v1678, 112
    %v2019 = vpop.permute.xlu0 %2018
    %2020 = vrot.lane.b32.xlu0 %v1685, 112
    %v2021 = vpop.permute.xlu0 %2020
    %v2022 = vsel %vm453, %v2019, 0
    %v2024 = vsel %vm453, %v2021, 0
    %2026 = vmatprep.subr.mxu0 0.0
    %2027 = vmatpush1.xpose.msra.mxu0 0.0
    %2028 = vmatprep.subr.mxu0 0.0
    %2029 = vmatpush1.xpose.msra.mxu0 0.0
    %2030 = vmatprep.subr.mxu0 0.0
    %2031 = vmatpush1.xpose.msra.mxu0 0.0
    %2032 = vmatprep.subr.mxu0 0.0
    %2033 = vmatpush1.xpose.msra.mxu0 0.0
    %2034 = vmatprep.subr.mxu0 0.0
    %2035 = vmatpush1.xpose.msra.mxu0 0.0
    %2036 = vmatprep.subr.mxu0 0.0
    %2037 = vmatpush1.xpose.msra.mxu0 0.0
    %2038 = vmatprep.subr.mxu0 0.0
    %2039 = vmatpush1.xpose.msra.mxu0 0.0
    %2040 = vmatprep.subr.mxu0 0.0
    %2041 = vmatpush1.xpose.msra.mxu0 0.0
    %2042 = vmatprep.subr.mxu0 0.0
    %2043 = vmatpush1.xpose.msra.mxu0 0.0
    %2044 = vmatprep.subr.mxu0 0.0
    %2045 = vmatpush1.xpose.msra.mxu0 0.0
    %2046 = vmatprep.subr.mxu0 0.0
    %2047 = vmatpush1.xpose.msra.mxu0 0.0
    %2048 = vmatprep.subr.mxu0 0.0
    %2049 = vmatpush1.xpose.msra.mxu0 0.0
    %2050 = vmatprep.subr.mxu0 0.0
    %2051 = vmatpush1.xpose.msra.mxu0 0.0
    %2052 = vmatprep.subr.mxu0 0.0
    %2053 = vmatpush1.xpose.msra.mxu0 0.0
    %2054 = vmatprep.subr.mxu0 0.0
    %2055 = vmatpush1.xpose.msra.mxu0 0.0
    %2056 = vmatprep.subr.mxu0 0.0
    %2057 = vmatpush1.xpose.msra.mxu0 %v2024
    %2058 = vmatprep.subr.mxu0 0.0
    %2059 = vmatpush2.xpose.msra.mxu0 0.0
    %2060 = vmatprep.subr.mxu0 0.0
    %2061 = vmatpush2.xpose.msra.mxu0 0.0
    %2062 = vmatprep.subr.mxu0 0.0
    %2063 = vmatpush2.xpose.msra.mxu0 0.0
    %2064 = vmatprep.subr.mxu0 0.0
    %2065 = vmatpush2.xpose.msra.mxu0 0.0
    %2066 = vmatprep.subr.mxu0 0.0
    %2067 = vmatpush2.xpose.msra.mxu0 0.0
    %2068 = vmatprep.subr.mxu0 0.0
    %2069 = vmatpush2.xpose.msra.mxu0 0.0
    %2070 = vmatprep.subr.mxu0 0.0
    %2071 = vmatpush2.xpose.msra.mxu0 0.0
    %2072 = vmatprep.subr.mxu0 0.0
    %2073 = vmatpush2.xpose.msra.mxu0 0.0
    %2074 = vmatprep.subr.mxu0 0.0
    %2075 = vmatpush2.xpose.msra.mxu0 0.0
    %2076 = vmatprep.subr.mxu0 0.0
    %2077 = vmatpush2.xpose.msra.mxu0 0.0
    %2078 = vmatprep.subr.mxu0 0.0
    %2079 = vmatpush2.xpose.msra.mxu0 0.0
    %2080 = vmatprep.subr.mxu0 0.0
    %2081 = vmatpush2.xpose.msra.mxu0 0.0
    %2082 = vmatprep.subr.mxu0 0.0
    %2083 = vmatpush2.xpose.msra.mxu0 0.0
    %2084 = vmatprep.subr.mxu0 0.0
    %2085 = vmatpush2.xpose.msra.mxu0 0.0
    %2086 = vmatprep.subr.mxu0 0.0
    %2087 = vmatpush2.xpose.msra.mxu0 0.0
    %2088 = vmatprep.subr.mxu0 0.0
    %2089 = vmatpush2.xpose.msra.mxu0 0.0
    %2090 = vmatprep.mubr.f32.mxu0 0.0
    %2091 = vmatmul.mubr.f32.gmra.mxu0 %v2022
    %v2092 = vpop.f32.mrf.mxu0
    %v2093 = vadd.f32 0.0, %v2092
    %v2094 = vpop.f32.mrf.mxu0
    %2095 = vdwg.mxu0
    %2096 = vrot.lane.b32.xlu0 %v1679, 112
    %v2097 = vpop.permute.xlu0 %2096
    %2098 = vrot.lane.b32.xlu0 %v1686, 112
    %v2099 = vpop.permute.xlu0 %2098
    %v2100 = vsel %vm453, %v2097, 0
    %v2102 = vsel %vm453, %v2099, 0
    %2104 = vmatprep.subr.mxu0 0.0
    %2105 = vmatpush1.xpose.msra.mxu0 0.0
    %2106 = vmatprep.subr.mxu0 0.0
    %2107 = vmatpush1.xpose.msra.mxu0 0.0
    %2108 = vmatprep.subr.mxu0 0.0
    %2109 = vmatpush1.xpose.msra.mxu0 0.0
    %2110 = vmatprep.subr.mxu0 0.0
    %2111 = vmatpush1.xpose.msra.mxu0 0.0
    %2112 = vmatprep.subr.mxu0 0.0
    %2113 = vmatpush1.xpose.msra.mxu0 0.0
    %2114 = vmatprep.subr.mxu0 0.0
    %2115 = vmatpush1.xpose.msra.mxu0 0.0
    %2116 = vmatprep.subr.mxu0 0.0
    %2117 = vmatpush1.xpose.msra.mxu0 0.0
    %2118 = vmatprep.subr.mxu0 0.0
    %2119 = vmatpush1.xpose.msra.mxu0 0.0
    %2120 = vmatprep.subr.mxu0 0.0
    %2121 = vmatpush1.xpose.msra.mxu0 0.0
    %2122 = vmatprep.subr.mxu0 0.0
    %2123 = vmatpush1.xpose.msra.mxu0 0.0
    %2124 = vmatprep.subr.mxu0 0.0
    %2125 = vmatpush1.xpose.msra.mxu0 0.0
    %2126 = vmatprep.subr.mxu0 0.0
    %2127 = vmatpush1.xpose.msra.mxu0 0.0
    %2128 = vmatprep.subr.mxu0 0.0
    %2129 = vmatpush1.xpose.msra.mxu0 0.0
    %2130 = vmatprep.subr.mxu0 0.0
    %2131 = vmatpush1.xpose.msra.mxu0 0.0
    %2132 = vmatprep.subr.mxu0 0.0
    %2133 = vmatpush1.xpose.msra.mxu0 0.0
    %2134 = vmatprep.subr.mxu0 0.0
    %2135 = vmatpush1.xpose.msra.mxu0 %v2102
    %2136 = vmatprep.subr.mxu0 0.0
    %2137 = vmatpush2.xpose.msra.mxu0 0.0
    %2138 = vmatprep.subr.mxu0 0.0
    %2139 = vmatpush2.xpose.msra.mxu0 0.0
    %2140 = vmatprep.subr.mxu0 0.0
    %2141 = vmatpush2.xpose.msra.mxu0 0.0
    %2142 = vmatprep.subr.mxu0 0.0
    %2143 = vmatpush2.xpose.msra.mxu0 0.0
    %2144 = vmatprep.subr.mxu0 0.0
    %2145 = vmatpush2.xpose.msra.mxu0 0.0
    %2146 = vmatprep.subr.mxu0 0.0
    %2147 = vmatpush2.xpose.msra.mxu0 0.0
    %2148 = vmatprep.subr.mxu0 0.0
    %2149 = vmatpush2.xpose.msra.mxu0 0.0
    %2150 = vmatprep.subr.mxu0 0.0
    %2151 = vmatpush2.xpose.msra.mxu0 0.0
    %2152 = vmatprep.subr.mxu0 0.0
    %2153 = vmatpush2.xpose.msra.mxu0 0.0
    %2154 = vmatprep.subr.mxu0 0.0
    %2155 = vmatpush2.xpose.msra.mxu0 0.0
    %2156 = vmatprep.subr.mxu0 0.0
    %2157 = vmatpush2.xpose.msra.mxu0 0.0
    %2158 = vmatprep.subr.mxu0 0.0
    %2159 = vmatpush2.xpose.msra.mxu0 0.0
    %2160 = vmatprep.subr.mxu0 0.0
    %2161 = vmatpush2.xpose.msra.mxu0 0.0
    %2162 = vmatprep.subr.mxu0 0.0
    %2163 = vmatpush2.xpose.msra.mxu0 0.0
    %2164 = vmatprep.subr.mxu0 0.0
    %2165 = vmatpush2.xpose.msra.mxu0 0.0
    %2166 = vmatprep.subr.mxu0 0.0
    %2167 = vmatpush2.xpose.msra.mxu0 0.0
    %2168 = vmatprep.mubr.f32.mxu0 0.0
    %2169 = vmatmul.mubr.f32.gmra.mxu0 %v2100
    %v2170 = vpop.f32.mrf.mxu0
    %v2171 = vadd.f32 0.0, %v2170
    %v2172 = vpop.f32.mrf.mxu0
    %2173 = vdwg.mxu0
    %v2174 = vmul.f32 %v2093, 0.25
    %v2175 = vmul.f32 %v2171, 0.25
    %v2176 = vadd.f32 %v2174, %v251
    %v2177 = vadd.f32 %v2175, %v255
    %v2178 = vsel %vm610, %v2176, -inf
    %2179 = vmax.xlane.f32.xlu0 %v2178
    %v2180 = vpop.xlane.xlu0 %2179
    %v2181 = vsel %vm610, %v2177, -inf
    %2182 = vmax.xlane.f32.xlu0 %v2181
    %v2183 = vpop.xlane.xlu0 %2182
    %v2184 = vsub.f32 %v2176, %v2180
    %v2185 = vsub.f32 %v2177, %v2183
    %v2186 = vmul.f32 %v2184, 1.442695
    %v2187 = vpow.pop %v2186
    %v2188 = vmul.f32 %v2185, 1.442695
    %v2189 = vpow.pop %v2188
    %v2190 = vsel %vm610, %v2187, 0.0
    %2191 = vadd.xlane.f32.xlu0 %v2190
    %v2192 = vpop.xlane.xlu0 %2191
    %v2193 = vsel %vm610, %v2189, 0.0
    %2194 = vadd.xlane.f32.xlu0 %v2193
    %v2195 = vpop.xlane.xlu0 %2194
    %v2196 = vrcp.pop %v2192
    %v2197 = vrcp.pop %v2195
    %v2198 = vmul.f32 %v2187, %v2196
    %v2199 = vmul.f32 %v2189, %v2197
    %2201 = vrot.lane.b32.xlu0 %v1692, 112
    %v2202 = vpop.permute.xlu0 %2201
    %v2205 = vsel %vm610, %v2198, 0
    %2207 = vmatprep.subr.mxu0 0.0
    %2208 = vmatpush1.msra.mxu0 0.0
    %2209 = vmatprep.subr.mxu0 0.0
    %2210 = vmatpush1.msra.mxu0 0.0
    %2211 = vmatprep.subr.mxu0 0.0
    %2212 = vmatpush1.msra.mxu0 0.0
    %2213 = vmatprep.subr.mxu0 0.0
    %2214 = vmatpush1.msra.mxu0 0.0
    %2215 = vmatprep.subr.mxu0 0.0
    %2216 = vmatpush1.msra.mxu0 0.0
    %2217 = vmatprep.subr.mxu0 0.0
    %2218 = vmatpush1.msra.mxu0 0.0
    %2219 = vmatprep.subr.mxu0 0.0
    %2220 = vmatpush1.msra.mxu0 0.0
    %2221 = vmatprep.subr.mxu0 0.0
    %2222 = vmatpush1.msra.mxu0 0.0
    %2223 = vmatprep.subr.mxu0 0.0
    %2224 = vmatpush1.msra.mxu0 0.0
    %2225 = vmatprep.subr.mxu0 0.0
    %2226 = vmatpush1.msra.mxu0 0.0
    %2227 = vmatprep.subr.mxu0 0.0
    %2228 = vmatpush1.msra.mxu0 0.0
    %2229 = vmatprep.subr.mxu0 0.0
    %2230 = vmatpush1.msra.mxu0 0.0
    %2231 = vmatprep.subr.mxu0 0.0
    %2232 = vmatpush1.msra.mxu0 0.0
    %2233 = vmatprep.subr.mxu0 0.0
    %2234 = vmatpush1.msra.mxu0 0.0
    %2235 = vmatprep.subr.mxu0 0.0
    %2236 = vmatpush1.msra.mxu0 0.0
    %2237 = vmatprep.subr.mxu0 0.0
    %2238 = vmatpush1.msra.mxu0 %v2202
    %2239 = vmatprep.subr.mxu0 0.0
    %2240 = vmatpush2.msra.mxu0 0.0
    %2241 = vmatprep.subr.mxu0 0.0
    %2242 = vmatpush2.msra.mxu0 0.0
    %2243 = vmatprep.subr.mxu0 0.0
    %2244 = vmatpush2.msra.mxu0 0.0
    %2245 = vmatprep.subr.mxu0 0.0
    %2246 = vmatpush2.msra.mxu0 0.0
    %2247 = vmatprep.subr.mxu0 0.0
    %2248 = vmatpush2.msra.mxu0 0.0
    %2249 = vmatprep.subr.mxu0 0.0
    %2250 = vmatpush2.msra.mxu0 0.0
    %2251 = vmatprep.subr.mxu0 0.0
    %2252 = vmatpush2.msra.mxu0 0.0
    %2253 = vmatprep.subr.mxu0 0.0
    %2254 = vmatpush2.msra.mxu0 0.0
    %2255 = vmatprep.subr.mxu0 0.0
    %2256 = vmatpush2.msra.mxu0 0.0
    %2257 = vmatprep.subr.mxu0 0.0
    %2258 = vmatpush2.msra.mxu0 0.0
    %2259 = vmatprep.subr.mxu0 0.0
    %2260 = vmatpush2.msra.mxu0 0.0
    %2261 = vmatprep.subr.mxu0 0.0
    %2262 = vmatpush2.msra.mxu0 0.0
    %2263 = vmatprep.subr.mxu0 0.0
    %2264 = vmatpush2.msra.mxu0 0.0
    %2265 = vmatprep.subr.mxu0 0.0
    %2266 = vmatpush2.msra.mxu0 0.0
    %2267 = vmatprep.subr.mxu0 0.0
    %2268 = vmatpush2.msra.mxu0 0.0
    %2269 = vmatprep.subr.mxu0 0.0
    %2270 = vmatpush2.msra.mxu0 0.0
    %2271 = vmatprep.mubr.f32.mxu0 0.0
    %2272 = vmatmul.mubr.f32.gmra.mxu0 %v2205
    %v2273 = vpop.f32.mrf.mxu0
    %v2274 = vadd.f32 0.0, %v2273
    %v2275 = vpop.f32.mrf.mxu0
    %2276 = vdwg.mxu0
    %2278 = vrot.lane.b32.xlu0 %v1693, 112
    %v2279 = vpop.permute.xlu0 %2278
    %v2282 = vsel %vm610, %v2199, 0
    %2284 = vmatprep.subr.mxu0 0.0
    %2285 = vmatpush1.msra.mxu0 0.0
    %2286 = vmatprep.subr.mxu0 0.0
    %2287 = vmatpush1.msra.mxu0 0.0
    %2288 = vmatprep.subr.mxu0 0.0
    %2289 = vmatpush1.msra.mxu0 0.0
    %2290 = vmatprep.subr.mxu0 0.0
    %2291 = vmatpush1.msra.mxu0 0.0
    %2292 = vmatprep.subr.mxu0 0.0
    %2293 = vmatpush1.msra.mxu0 0.0
    %2294 = vmatprep.subr.mxu0 0.0
    %2295 = vmatpush1.msra.mxu0 0.0
    %2296 = vmatprep.subr.mxu0 0.0
    %2297 = vmatpush1.msra.mxu0 0.0
    %2298 = vmatprep.subr.mxu0 0.0
    %2299 = vmatpush1.msra.mxu0 0.0
    %2300 = vmatprep.subr.mxu0 0.0
    %2301 = vmatpush1.msra.mxu0 0.0
    %2302 = vmatprep.subr.mxu0 0.0
    %2303 = vmatpush1.msra.mxu0 0.0
    %2304 = vmatprep.subr.mxu0 0.0
    %2305 = vmatpush1.msra.mxu0 0.0
    %2306 = vmatprep.subr.mxu0 0.0
    %2307 = vmatpush1.msra.mxu0 0.0
    %2308 = vmatprep.subr.mxu0 0.0
    %2309 = vmatpush1.msra.mxu0 0.0
    %2310 = vmatprep.subr.mxu0 0.0
    %2311 = vmatpush1.msra.mxu0 0.0
    %2312 = vmatprep.subr.mxu0 0.0
    %2313 = vmatpush1.msra.mxu0 0.0
    %2314 = vmatprep.subr.mxu0 0.0
    %2315 = vmatpush1.msra.mxu0 %v2279
    %2316 = vmatprep.subr.mxu0 0.0
    %2317 = vmatpush2.msra.mxu0 0.0
    %2318 = vmatprep.subr.mxu0 0.0
    %2319 = vmatpush2.msra.mxu0 0.0
    %2320 = vmatprep.subr.mxu0 0.0
    %2321 = vmatpush2.msra.mxu0 0.0
    %2322 = vmatprep.subr.mxu0 0.0
    %2323 = vmatpush2.msra.mxu0 0.0
    %2324 = vmatprep.subr.mxu0 0.0
    %2325 = vmatpush2.msra.mxu0 0.0
    %2326 = vmatprep.subr.mxu0 0.0
    %2327 = vmatpush2.msra.mxu0 0.0
    %2328 = vmatprep.subr.mxu0 0.0
    %2329 = vmatpush2.msra.mxu0 0.0
    %2330 = vmatprep.subr.mxu0 0.0
    %2331 = vmatpush2.msra.mxu0 0.0
    %2332 = vmatprep.subr.mxu0 0.0
    %2333 = vmatpush2.msra.mxu0 0.0
    %2334 = vmatprep.subr.mxu0 0.0
    %2335 = vmatpush2.msra.mxu0 0.0
    %2336 = vmatprep.subr.mxu0 0.0
    %2337 = vmatpush2.msra.mxu0 0.0
    %2338 = vmatprep.subr.mxu0 0.0
    %2339 = vmatpush2.msra.mxu0 0.0
    %2340 = vmatprep.subr.mxu0 0.0
    %2341 = vmatpush2.msra.mxu0 0.0
    %2342 = vmatprep.subr.mxu0 0.0
    %2343 = vmatpush2.msra.mxu0 0.0
    %2344 = vmatprep.subr.mxu0 0.0
    %2345 = vmatpush2.msra.mxu0 0.0
    %2346 = vmatprep.subr.mxu0 0.0
    %2347 = vmatpush2.msra.mxu0 0.0
    %2348 = vmatprep.mubr.f32.mxu0 0.0
    %2349 = vmatmul.mubr.f32.gmra.mxu0 %v2282
    %v2350 = vpop.f32.mrf.mxu0
    %v2351 = vadd.f32 0.0, %v2350
    %v2352 = vpop.f32.mrf.mxu0
    %2353 = vdwg.mxu0
    %2356 = vrot.lane.b32.xlu0 %v2274, 16
    %v2357 = vpop.permute.xlu0 %2356
    %2358 = vrot.lane.b32.xlu0 %v2351, 16
    %v2359 = vpop.permute.xlu0 %2358
    %v2362 = vsel %vm453, %v1942, %v2357
    %v2363 = vsel %vm453, %v2015, %v2359
    %v2364 = vld [vmem:[%s5 + $0xf] sm:$0x1]
    %v2365 = vlaneseq
    %v2366 = vshrl.u32 %v2365, 7
    %v2367 = vsub.s32 0, %v2366
    %v2368 = vrot.slane %v2364, %v2367
    %v2370 = vsel %vm181, %v2362, 0
    %v2373 = vsel %vm181, %v2363, 0
    %2375 = vmatprep.subr.mxu0 0.0
    %2376 = vmatpush1.msra.mxu0 0.0
    %2377 = vmatprep.subr.mxu0 0.0
    %2378 = vmatpush1.msra.mxu0 0.0
    %2379 = vmatprep.subr.mxu0 0.0
    %2380 = vmatpush1.msra.mxu0 0.0
    %2381 = vmatprep.subr.mxu0 0.0
    %2382 = vmatpush1.msra.mxu0 0.0
    %2383 = vmatprep.subr.mxu0 0.0
    %2384 = vmatpush1.msra.mxu0 0.0
    %2385 = vmatprep.subr.mxu0 0.0
    %2386 = vmatpush1.msra.mxu0 0.0
    %2387 = vmatprep.subr.mxu0 0.0
    %2388 = vmatpush1.msra.mxu0 0.0
    %2389 = vmatprep.subr.mxu0 0.0
    %2390 = vmatpush1.msra.mxu0 0.0
    %2391 = vmatprep.subr.mxu0 0.0
    %2392 = vmatpush1.msra.mxu0 0.0
    %2393 = vmatprep.subr.mxu0 0.0
    %2394 = vmatpush1.msra.mxu0 0.0
    %2395 = vmatprep.subr.mxu0 0.0
    %2396 = vmatpush1.msra.mxu0 0.0
    %2397 = vmatprep.subr.mxu0 0.0
    %2398 = vmatpush1.msra.mxu0 0.0
    %2399 = vmatprep.subr.mxu0 0.0
    %2400 = vmatpush1.msra.mxu0 %v1514
    %2401 = vmatprep.subr.mxu0 0.0
    %2402 = vmatpush1.msra.mxu0 %v1510
    %2403 = vmatprep.subr.mxu0 0.0
    %2404 = vmatpush1.msra.mxu0 %v1506
    %2405 = vmatprep.subr.mxu0 0.0
    %2406 = vmatpush1.msra.mxu0 %v1502
    %2407 = vmatprep.subr.mxu0 0.0
    %2408 = vmatpush2.msra.mxu0 0.0
    %2409 = vmatprep.subr.mxu0 0.0
    %2410 = vmatpush2.msra.mxu0 0.0
    %2411 = vmatprep.subr.mxu0 0.0
    %2412 = vmatpush2.msra.mxu0 0.0
    %2413 = vmatprep.subr.mxu0 0.0
    %2414 = vmatpush2.msra.mxu0 0.0
    %2415 = vmatprep.subr.mxu0 0.0
    %2416 = vmatpush2.msra.mxu0 0.0
    %2417 = vmatprep.subr.mxu0 0.0
    %2418 = vmatpush2.msra.mxu0 0.0
    %2419 = vmatprep.subr.mxu0 0.0
    %2420 = vmatpush2.msra.mxu0 0.0
    %2421 = vmatprep.subr.mxu0 0.0
    %2422 = vmatpush2.msra.mxu0 0.0
    %2423 = vmatprep.subr.mxu0 0.0
    %2424 = vmatpush2.msra.mxu0 0.0
    %2425 = vmatprep.subr.mxu0 0.0
    %2426 = vmatpush2.msra.mxu0 0.0
    %2427 = vmatprep.subr.mxu0 0.0
    %2428 = vmatpush2.msra.mxu0 0.0
    %2429 = vmatprep.subr.mxu0 0.0
    %2430 = vmatpush2.msra.mxu0 0.0
    %2431 = vmatprep.subr.mxu0 0.0
    %2432 = vmatpush2.msra.mxu0 0.0
    %2433 = vmatprep.subr.mxu0 0.0
    %2434 = vmatpush2.msra.mxu0 0.0
    %2435 = vmatprep.subr.mxu0 0.0
    %2436 = vmatpush2.msra.mxu0 0.0
    %2437 = vmatprep.subr.mxu0 0.0
    %2438 = vmatpush2.msra.mxu0 0.0
    %2439 = vmatprep.mubr.f32.mxu0 0.0
    %2440 = vmatmul.mubr.f32.gmra.mxu0 %v2370
    %v2441 = vpop.f32.mrf.mxu0
    %v2442 = vadd.f32 %v2368, %v2441
    %v2443 = vpop.f32.mrf.mxu0
    %2444 = vmatprep.mubr.f32.mxu0 0.0
    %2445 = vmatmul.mubr.f32.gmra.mxu0 %v2373
    %v2446 = vpop.f32.mrf.mxu0
    %v2447 = vadd.f32 %v2368, %v2446
    %v2448 = vpop.f32.mrf.mxu0
    %2449 = vdwg.mxu0
    %v2450 = vadd.f32 %v1496, %v2442
    %v2451 = vadd.f32 %v1497, %v2447
    %v2452 = vld [vmem:[%s5 + $0x10] sm:$0x1]
    %v2453 = vld [vmem:[%s5 + $0x11] sm:$0x1]
    %v2454 = vsel %vm181, %v2450, 0.0
    %2455 = vadd.xlane.f32.xlu0 %v2454
    %v2456 = vpop.xlane.xlu0 %2455
    %v2457 = vsel %vm181, %v2451, 0.0
    %2458 = vadd.xlane.f32.xlu0 %v2457
    %v2459 = vpop.xlane.xlu0 %2458
    %v2460 = vmul.f32 %v2456, %v188
    %v2461 = vmul.f32 %v2459, %v188
    %v2462 = vsub.f32 %v2450, %v2460
    %v2463 = vsub.f32 %v2451, %v2461
    %v2464 = vmul.f32 %v2462, %v2462
    %v2465 = vmul.f32 %v2463, %v2463
    %v2466 = vsel %vm181, %v2464, 0.0
    %2467 = vadd.xlane.f32.xlu0 %v2466
    %v2468 = vpop.xlane.xlu0 %2467
    %v2469 = vsel %vm181, %v2465, 0.0
    %2470 = vadd.xlane.f32.xlu0 %v2469
    %v2471 = vpop.xlane.xlu0 %2470
    %v2472 = vmul.f32 %v2468, %v188
    %v2473 = vmul.f32 %v2471, %v188
    %v2474 = vadd.f32 %v2472, 1e-12
    %v2475 = vadd.f32 %v2473, 1e-12
    %v2476 = vrsqrt.pop %v2474
    %v2477 = vrsqrt.pop %v2475
    %v2478 = vmul.f32 %v2462, %v2476
    %v2479 = vmul.f32 %v2463, %v2477
    %v2480 = vlaneseq
    %v2481 = vshrl.u32 %v2480, 7
    %v2482 = vsub.s32 0, %v2481
    %v2483 = vrot.slane %v2452, %v2482
    %v2484 = vmul.f32 %v2478, %v2483
    %v2485 = vmul.f32 %v2479, %v2483
    %v2486 = vlaneseq
    %v2487 = vshrl.u32 %v2486, 7
    %v2488 = vsub.s32 0, %v2487
    %v2489 = vrot.slane %v2453, %v2488
    %v2490 = vadd.f32 %v2484, %v2489
    %v2491 = vadd.f32 %v2485, %v2489
    %s2492 = scalar_lea.vmem [#allocation7], 96
    %v2493 = vld [vmem:[%s2492] sm:$0xff]
    %v2494 = vld [vmem:[%s2492 + $0x8] sm:$0xff]
    %v2495 = vld [vmem:[%s2492 + $0x10] sm:$0xff]
    %v2496 = vld [vmem:[%s2492 + $0x18] sm:$0xff]
    %v2497 = vld [vmem:[%s2492 + $0x20] sm:$0xff]
    %v2498 = vld [vmem:[%s2492 + $0x28] sm:$0xff]
    %v2499 = vld [vmem:[%s2492 + $0x30] sm:$0xff]
    %v2500 = vld [vmem:[%s2492 + $0x38] sm:$0xff]
    %v2501 = vld [vmem:[%s2492 + $0x40] sm:$0xff]
    %v2502 = vld [vmem:[%s2492 + $0x48] sm:$0xff]
    %v2503 = vld [vmem:[%s2492 + $0x50] sm:$0xff]
    %v2504 = vld [vmem:[%s2492 + $0x58] sm:$0xff]
    %v2505 = vld [vmem:[%s5 + $0x12] sm:$0x1]
    %v2506 = vlaneseq
    %v2507 = vshrl.u32 %v2506, 7
    %v2508 = vsub.s32 0, %v2507
    %v2509 = vrot.slane %v2505, %v2508
    %v2511 = vsel %vm181, %v2490, 0
    %v2514 = vsel %vm181, %v2491, 0
    %2516 = vmatprep.subr.mxu0 0.0
    %2517 = vmatpush1.msra.mxu0 0.0
    %2518 = vmatprep.subr.mxu0 0.0
    %2519 = vmatpush1.msra.mxu0 0.0
    %2520 = vmatprep.subr.mxu0 0.0
    %2521 = vmatpush1.msra.mxu0 0.0
    %2522 = vmatprep.subr.mxu0 0.0
    %2523 = vmatpush1.msra.mxu0 0.0
    %2524 = vmatprep.subr.mxu0 0.0
    %2525 = vmatpush1.msra.mxu0 0.0
    %2526 = vmatprep.subr.mxu0 0.0
    %2527 = vmatpush1.msra.mxu0 0.0
    %2528 = vmatprep.subr.mxu0 0.0
    %2529 = vmatpush1.msra.mxu0 0.0
    %2530 = vmatprep.subr.mxu0 0.0
    %2531 = vmatpush1.msra.mxu0 0.0
    %2532 = vmatprep.subr.mxu0 0.0
    %2533 = vmatpush1.msra.mxu0 0.0
    %2534 = vmatprep.subr.mxu0 0.0
    %2535 = vmatpush1.msra.mxu0 0.0
    %2536 = vmatprep.subr.mxu0 0.0
    %2537 = vmatpush1.msra.mxu0 0.0
    %2538 = vmatprep.subr.mxu0 0.0
    %2539 = vmatpush1.msra.mxu0 0.0
    %2540 = vmatprep.subr.mxu0 0.0
    %2541 = vmatpush1.msra.mxu0 %v2496
    %2542 = vmatprep.subr.mxu0 0.0
    %2543 = vmatpush1.msra.mxu0 %v2495
    %2544 = vmatprep.subr.mxu0 0.0
    %2545 = vmatpush1.msra.mxu0 %v2494
    %2546 = vmatprep.subr.mxu0 0.0
    %2547 = vmatpush1.msra.mxu0 %v2493
    %2548 = vmatprep.subr.mxu0 0.0
    %2549 = vmatpush2.msra.mxu0 0.0
    %2550 = vmatprep.subr.mxu0 0.0
    %2551 = vmatpush2.msra.mxu0 0.0
    %2552 = vmatprep.subr.mxu0 0.0
    %2553 = vmatpush2.msra.mxu0 0.0
    %2554 = vmatprep.subr.mxu0 0.0
    %2555 = vmatpush2.msra.mxu0 0.0
    %2556 = vmatprep.subr.mxu0 0.0
    %2557 = vmatpush2.msra.mxu0 0.0
    %2558 = vmatprep.subr.mxu0 0.0
    %2559 = vmatpush2.msra.mxu0 0.0
    %2560 = vmatprep.subr.mxu0 0.0
    %2561 = vmatpush2.msra.mxu0 0.0
    %2562 = vmatprep.subr.mxu0 0.0
    %2563 = vmatpush2.msra.mxu0 0.0
    %2564 = vmatprep.subr.mxu0 0.0
    %2565 = vmatpush2.msra.mxu0 0.0
    %2566 = vmatprep.subr.mxu0 0.0
    %2567 = vmatpush2.msra.mxu0 0.0
    %2568 = vmatprep.subr.mxu0 0.0
    %2569 = vmatpush2.msra.mxu0 0.0
    %2570 = vmatprep.subr.mxu0 0.0
    %2571 = vmatpush2.msra.mxu0 0.0
    %2572 = vmatprep.subr.mxu0 0.0
    %2573 = vmatpush2.msra.mxu0 0.0
    %2574 = vmatprep.subr.mxu0 0.0
    %2575 = vmatpush2.msra.mxu0 0.0
    %2576 = vmatprep.subr.mxu0 0.0
    %2577 = vmatpush2.msra.mxu0 0.0
    %2578 = vmatprep.subr.mxu0 0.0
    %2579 = vmatpush2.msra.mxu0 0.0
    %2580 = vmatprep.mubr.f32.mxu0 0.0
    %2581 = vmatmul.mubr.f32.gmra.mxu0 %v2511
    %v2582 = vpop.f32.mrf.mxu0
    %v2583 = vadd.f32 %v2509, %v2582
    %v2584 = vpop.f32.mrf.mxu0
    %2585 = vmatprep.mubr.f32.mxu0 0.0
    %2586 = vmatmul.mubr.f32.gmra.mxu0 %v2514
    %v2587 = vpop.f32.mrf.mxu0
    %v2588 = vadd.f32 %v2509, %v2587
    %v2589 = vpop.f32.mrf.mxu0
    %2590 = vdwg.mxu0
    %v2591 = vmul.f32 %v2583, 0.5
    %v2592 = vmul.f32 %v2588, 0.5
    %v2593 = vmul.f32 %v2583, 0.044715
    %v2594 = vmul.f32 %v2588, 0.044715
    %v2595 = vmul.f32 %v2593, %v2583
    %v2596 = vmul.f32 %v2594, %v2588
    %v2597 = vmul.f32 %v2595, %v2583
    %v2598 = vmul.f32 %v2596, %v2588
    %v2599 = vadd.f32 %v2583, %v2597
    %v2600 = vadd.f32 %v2588, %v2598
    %v2601 = vmul.f32 %v2599, 0.7978846
    %v2602 = vmul.f32 %v2600, 0.7978846
    %v2603 = vtanh.pop %v2601
    %v2604 = vtanh.pop %v2602
    %v2605 = vadd.f32 %v2603, 1.0
    %v2606 = vadd.f32 %v2604, 1.0
    %v2607 = vmul.f32 %v2591, %v2605
    %v2608 = vmul.f32 %v2592, %v2606
    %v2609 = vld [vmem:[%s5 + $0x13] sm:$0x1]
    %v2610 = vlaneseq
    %v2611 = vshrl.u32 %v2610, 7
    %v2612 = vsub.s32 0, %v2611
    %v2613 = vrot.slane %v2609, %v2612
    %v2615 = vsel %vm1374, %v2607, 0
    %v2618 = vsel %vm1374, %v2608, 0
    %2620 = vmatprep.subr.mxu0 0.0
    %2621 = vmatpush1.msra.mxu0 0.0
    %2622 = vmatprep.subr.mxu0 0.0
    %2623 = vmatpush1.msra.mxu0 0.0
    %2624 = vmatprep.subr.mxu0 0.0
    %2625 = vmatpush1.msra.mxu0 0.0
    %2626 = vmatprep.subr.mxu0 0.0
    %2627 = vmatpush1.msra.mxu0 0.0
    %2628 = vmatprep.subr.mxu0 0.0
    %2629 = vmatpush1.msra.mxu0 0.0
    %2630 = vmatprep.subr.mxu0 0.0
    %2631 = vmatpush1.msra.mxu0 0.0
    %2632 = vmatprep.subr.mxu0 0.0
    %2633 = vmatpush1.msra.mxu0 0.0
    %2634 = vmatprep.subr.mxu0 0.0
    %2635 = vmatpush1.msra.mxu0 0.0
    %2636 = vmatprep.subr.mxu0 0.0
    %2637 = vmatpush1.msra.mxu0 %v2504
    %2638 = vmatprep.subr.mxu0 0.0
    %2639 = vmatpush1.msra.mxu0 %v2503
    %2640 = vmatprep.subr.mxu0 0.0
    %2641 = vmatpush1.msra.mxu0 %v2502
    %2642 = vmatprep.subr.mxu0 0.0
    %2643 = vmatpush1.msra.mxu0 %v2501
    %2644 = vmatprep.subr.mxu0 0.0
    %2645 = vmatpush1.msra.mxu0 %v2500
    %2646 = vmatprep.subr.mxu0 0.0
    %2647 = vmatpush1.msra.mxu0 %v2499
    %2648 = vmatprep.subr.mxu0 0.0
    %2649 = vmatpush1.msra.mxu0 %v2498
    %2650 = vmatprep.subr.mxu0 0.0
    %2651 = vmatpush1.msra.mxu0 %v2497
    %2652 = vmatprep.subr.mxu0 0.0
    %2653 = vmatpush2.msra.mxu0 0.0
    %2654 = vmatprep.subr.mxu0 0.0
    %2655 = vmatpush2.msra.mxu0 0.0
    %2656 = vmatprep.subr.mxu0 0.0
    %2657 = vmatpush2.msra.mxu0 0.0
    %2658 = vmatprep.subr.mxu0 0.0
    %2659 = vmatpush2.msra.mxu0 0.0
    %2660 = vmatprep.subr.mxu0 0.0
    %2661 = vmatpush2.msra.mxu0 0.0
    %2662 = vmatprep.subr.mxu0 0.0
    %2663 = vmatpush2.msra.mxu0 0.0
    %2664 = vmatprep.subr.mxu0 0.0
    %2665 = vmatpush2.msra.mxu0 0.0
    %2666 = vmatprep.subr.mxu0 0.0
    %2667 = vmatpush2.msra.mxu0 0.0
    %2668 = vmatprep.subr.mxu0 0.0
    %2669 = vmatpush2.msra.mxu0 0.0
    %2670 = vmatprep.subr.mxu0 0.0
    %2671 = vmatpush2.msra.mxu0 0.0
    %2672 = vmatprep.subr.mxu0 0.0
    %2673 = vmatpush2.msra.mxu0 0.0
    %2674 = vmatprep.subr.mxu0 0.0
    %2675 = vmatpush2.msra.mxu0 0.0
    %2676 = vmatprep.subr.mxu0 0.0
    %2677 = vmatpush2.msra.mxu0 0.0
    %2678 = vmatprep.subr.mxu0 0.0
    %2679 = vmatpush2.msra.mxu0 0.0
    %2680 = vmatprep.subr.mxu0 0.0
    %2681 = vmatpush2.msra.mxu0 0.0
    %2682 = vmatprep.subr.mxu0 0.0
    %2683 = vmatpush2.msra.mxu0 0.0
    %2684 = vmatprep.mubr.f32.mxu0 0.0
    %2685 = vmatmul.mubr.f32.gmra.mxu0 %v2615
    %v2686 = vpop.f32.mrf.mxu0
    %v2687 = vadd.f32 %v2613, %v2686
    %v2688 = vpop.f32.mrf.mxu0
    %2689 = vmatprep.mubr.f32.mxu0 0.0
    %2690 = vmatmul.mubr.f32.gmra.mxu0 %v2618
    %v2691 = vpop.f32.mrf.mxu0
    %v2692 = vadd.f32 %v2613, %v2691
    %v2693 = vpop.f32.mrf.mxu0
    %2694 = vdwg.mxu0
    %v2695 = vadd.f32 %v2490, %v2687
    %v2696 = vadd.f32 %v2491, %v2692
    %v2697 = vld [vmem:[%s5 + $0x14] sm:$0x1]
    %v2698 = vld [vmem:[%s5 + $0x15] sm:$0x1]
    %v2699 = vsel %vm181, %v2695, 0.0
    %2700 = vadd.xlane.f32.xlu0 %v2699
    %v2701 = vpop.xlane.xlu0 %2700
    %v2702 = vsel %vm181, %v2696, 0.0
    %2703 = vadd.xlane.f32.xlu0 %v2702
    %v2704 = vpop.xlane.xlu0 %2703
    %v2705 = vmul.f32 %v2701, %v188
    %v2706 = vmul.f32 %v2704, %v188
    %v2707 = vsub.f32 %v2695, %v2705
    %v2708 = vsub.f32 %v2696, %v2706
    %v2709 = vmul.f32 %v2707, %v2707
    %v2710 = vmul.f32 %v2708, %v2708
    %v2711 = vsel %vm181, %v2709, 0.0
    %2712 = vadd.xlane.f32.xlu0 %v2711
    %v2713 = vpop.xlane.xlu0 %2712
    %v2714 = vsel %vm181, %v2710, 0.0
    %2715 = vadd.xlane.f32.xlu0 %v2714
    %v2716 = vpop.xlane.xlu0 %2715
    %v2717 = vmul.f32 %v2713, %v188
    %v2718 = vmul.f32 %v2716, %v188
    %v2719 = vadd.f32 %v2717, 1e-12
    %v2720 = vadd.f32 %v2718, 1e-12
    %v2721 = vrsqrt.pop %v2719
    %v2722 = vrsqrt.pop %v2720
    %v2723 = vmul.f32 %v2707, %v2721
    %v2724 = vmul.f32 %v2708, %v2722
    %v2725 = vlaneseq
    %v2726 = vshrl.u32 %v2725, 7
    %v2727 = vsub.s32 0, %v2726
    %v2728 = vrot.slane %v2697, %v2727
    %v2729 = vmul.f32 %v2723, %v2728
    %v2730 = vmul.f32 %v2724, %v2728
    %v2731 = vlaneseq
    %v2732 = vshrl.u32 %v2731, 7
    %v2733 = vsub.s32 0, %v2732
    %v2734 = vrot.slane %v2698, %v2733
    %v2735 = vadd.f32 %v2729, %v2734
    %v2736 = vadd.f32 %v2730, %v2734
    %v2737 = vld [vmem:[%s5 + $0x18] sm:$0xff]
    %v2738 = vld [vmem:[%s5 + $0x20] sm:$0xff]
    %v2739 = vld [vmem:[%s5 + $0x28] sm:$0xff]
    %v2740 = vld [vmem:[%s5 + $0x30] sm:$0xff]
    %v2741 = vld [vmem:[%s5 + $0x16] sm:$0x1]
    %v2742 = vlaneseq
    %v2743 = vshrl.u32 %v2742, 7
    %v2744 = vsub.s32 0, %v2743
    %v2745 = vrot.slane %v2741, %v2744
    %v2748 = vrot.slane %v2736, 7
    %vm2749 = vcmask 1041409
    %v2750 = vsel %vm2749, %v2748, %v2735
    %v2751 = vsel %vm181, %v2750, 0
    %2753 = vmatprep.subr.mxu0 0.0
    %2754 = vmatpush1.msra.mxu0 0.0
    %2755 = vmatprep.subr.mxu0 0.0
    %2756 = vmatpush1.msra.mxu0 0.0
    %2757 = vmatprep.subr.mxu0 0.0
    %2758 = vmatpush1.msra.mxu0 0.0
    %2759 = vmatprep.subr.mxu0 0.0
    %2760 = vmatpush1.msra.mxu0 0.0
    %2761 = vmatprep.subr.mxu0 0.0
    %2762 = vmatpush1.msra.mxu0 0.0
    %2763 = vmatprep.subr.mxu0 0.0
    %2764 = vmatpush1.msra.mxu0 0.0
    %2765 = vmatprep.subr.mxu0 0.0
    %2766 = vmatpush1.msra.mxu0 0.0
    %2767 = vmatprep.subr.mxu0 0.0
    %2768 = vmatpush1.msra.mxu0 0.0
    %2769 = vmatprep.subr.mxu0 0.0
    %2770 = vmatpush1.msra.mxu0 0.0
    %2771 = vmatprep.subr.mxu0 0.0
    %2772 = vmatpush1.msra.mxu0 0.0
    %2773 = vmatprep.subr.mxu0 0.0
    %2774 = vmatpush1.msra.mxu0 0.0
    %2775 = vmatprep.subr.mxu0 0.0
    %2776 = vmatpush1.msra.mxu0 0.0
    %2777 = vmatprep.subr.mxu0 0.0
    %2778 = vmatpush1.msra.mxu0 %v2740
    %2779 = vmatprep.subr.mxu0 0.0
    %2780 = vmatpush1.msra.mxu0 %v2739
    %2781 = vmatprep.subr.mxu0 0.0
    %2782 = vmatpush1.msra.mxu0 %v2738
    %2783 = vmatprep.subr.mxu0 0.0
    %2784 = vmatpush1.msra.mxu0 %v2737
    %2785 = vmatprep.subr.mxu0 0.0
    %2786 = vmatpush2.msra.mxu0 0.0
    %2787 = vmatprep.subr.mxu0 0.0
    %2788 = vmatpush2.msra.mxu0 0.0
    %2789 = vmatprep.subr.mxu0 0.0
    %2790 = vmatpush2.msra.mxu0 0.0
    %2791 = vmatprep.subr.mxu0 0.0
    %2792 = vmatpush2.msra.mxu0 0.0
    %2793 = vmatprep.subr.mxu0 0.0
    %2794 = vmatpush2.msra.mxu0 0.0
    %2795 = vmatprep.subr.mxu0 0.0
    %2796 = vmatpush2.msra.mxu0 0.0
    %2797 = vmatprep.subr.mxu0 0.0
    %2798 = vmatpush2.msra.mxu0 0.0
    %2799 = vmatprep.subr.mxu0 0.0
    %2800 = vmatpush2.msra.mxu0 0.0
    %2801 = vmatprep.subr.mxu0 0.0
    %2802 = vmatpush2.msra.mxu0 0.0
    %2803 = vmatprep.subr.mxu0 0.0
    %2804 = vmatpush2.msra.mxu0 0.0
    %2805 = vmatprep.subr.mxu0 0.0
    %2806 = vmatpush2.msra.mxu0 0.0
    %2807 = vmatprep.subr.mxu0 0.0
    %2808 = vmatpush2.msra.mxu0 0.0
    %2809 = vmatprep.subr.mxu0 0.0
    %2810 = vmatpush2.msra.mxu0 0.0
    %2811 = vmatprep.subr.mxu0 0.0
    %2812 = vmatpush2.msra.mxu0 0.0
    %2813 = vmatprep.subr.mxu0 0.0
    %2814 = vmatpush2.msra.mxu0 0.0
    %2815 = vmatprep.subr.mxu0 0.0
    %2816 = vmatpush2.msra.mxu0 0.0
    %2817 = vmatprep.mubr.f32.mxu0 0.0
    %2818 = vmatmul.mubr.f32.gmra.mxu0 %v2751
    %v2819 = vpop.f32.mrf.mxu0
    %v2820 = vadd.f32 %v2745, %v2819
    %v2821 = vpop.f32.mrf.mxu0
    %2822 = vdwg.mxu0
    %v2823 = vtanh.pop %v2820
    %v2824 = vld [vmem:[%s5 + $0x38] sm:$0xff]
    %v2825 = vld [vmem:[%s5 + $0x40] sm:$0xff]
    %v2826 = vld [vmem:[%s5 + $0x48] sm:$0xff]
    %v2827 = vld [vmem:[%s5 + $0x50] sm:$0xff]
    %v2828 = vld [vmem:[%s5 + $0x17] sm:$0x1]
    %v2829 = vlaneseq
    %v2830 = vshrl.u32 %v2829, 7
    %v2831 = vsub.s32 0, %v2830
    %v2832 = vrot.slane %v2828, %v2831
    %v2834 = vsel %vm181, %v2823, 0
    %2836 = vmatprep.subr.mxu0 0.0
    %2837 = vmatpush1.msra.mxu0 0.0
    %2838 = vmatprep.subr.mxu0 0.0
    %2839 = vmatpush1.msra.mxu0 0.0
    %2840 = vmatprep.subr.mxu0 0.0
    %2841 = vmatpush1.msra.mxu0 0.0
    %2842 = vmatprep.subr.mxu0 0.0
    %2843 = vmatpush1.msra.mxu0 0.0
    %2844 = vmatprep.subr.mxu0 0.0
    %2845 = vmatpush1.msra.mxu0 0.0
    %2846 = vmatprep.subr.mxu0 0.0
    %2847 = vmatpush1.msra.mxu0 0.0
    %2848 = vmatprep.subr.mxu0 0.0
    %2849 = vmatpush1.msra.mxu0 0.0
    %2850 = vmatprep.subr.mxu0 0.0
    %2851 = vmatpush1.msra.mxu0 0.0
    %2852 = vmatprep.subr.mxu0 0.0
    %2853 = vmatpush1.msra.mxu0 0.0
    %2854 = vmatprep.subr.mxu0 0.0
    %2855 = vmatpush1.msra.mxu0 0.0
    %2856 = vmatprep.subr.mxu0 0.0
    %2857 = vmatpush1.msra.mxu0 0.0
    %2858 = vmatprep.subr.mxu0 0.0
    %2859 = vmatpush1.msra.mxu0 0.0
    %2860 = vmatprep.subr.mxu0 0.0
    %2861 = vmatpush1.msra.mxu0 %v2827
    %2862 = vmatprep.subr.mxu0 0.0
    %2863 = vmatpush1.msra.mxu0 %v2826
    %2864 = vmatprep.subr.mxu0 0.0
    %2865 = vmatpush1.msra.mxu0 %v2825
    %2866 = vmatprep.subr.mxu0 0.0
    %2867 = vmatpush1.msra.mxu0 %v2824
    %2868 = vmatprep.subr.mxu0 0.0
    %2869 = vmatpush2.msra.mxu0 0.0
    %2870 = vmatprep.subr.mxu0 0.0
    %2871 = vmatpush2.msra.mxu0 0.0
    %2872 = vmatprep.subr.mxu0 0.0
    %2873 = vmatpush2.msra.mxu0 0.0
    %2874 = vmatprep.subr.mxu0 0.0
    %2875 = vmatpush2.msra.mxu0 0.0
    %2876 = vmatprep.subr.mxu0 0.0
    %2877 = vmatpush2.msra.mxu0 0.0
    %2878 = vmatprep.subr.mxu0 0.0
    %2879 = vmatpush2.msra.mxu0 0.0
    %2880 = vmatprep.subr.mxu0 0.0
    %2881 = vmatpush2.msra.mxu0 0.0
    %2882 = vmatprep.subr.mxu0 0.0
    %2883 = vmatpush2.msra.mxu0 0.0
    %2884 = vmatprep.subr.mxu0 0.0
    %2885 = vmatpush2.msra.mxu0 0.0
    %2886 = vmatprep.subr.mxu0 0.0
    %2887 = vmatpush2.msra.mxu0 0.0
    %2888 = vmatprep.subr.mxu0 0.0
    %2889 = vmatpush2.msra.mxu0 0.0
    %2890 = vmatprep.subr.mxu0 0.0
    %2891 = vmatpush2.msra.mxu0 0.0
    %2892 = vmatprep.subr.mxu0 0.0
    %2893 = vmatpush2.msra.mxu0 0.0
    %2894 = vmatprep.subr.mxu0 0.0
    %2895 = vmatpush2.msra.mxu0 0.0
    %2896 = vmatprep.subr.mxu0 0.0
    %2897 = vmatpush2.msra.mxu0 0.0
    %2898 = vmatprep.subr.mxu0 0.0
    %2899 = vmatpush2.msra.mxu0 0.0
    %2900 = vmatprep.mubr.f32.mxu0 0.0
    %2901 = vmatmul.mubr.f32.gmra.mxu0 %v2834
    %v2902 = vpop.f32.mrf.mxu0
    %v2903 = vadd.f32 %v2832, %v2902
    %v2904 = vpop.f32.mrf.mxu0
    %2905 = vdwg.mxu0
    %2906 = vst [vmem:[#allocation9] sm:$0x3] %v2903
    // Predicated region
    $region38: #{sentiment_classifier_forward.1} parent=1 // pred_check
      _
    $region39: #{sentiment_classifier_forward.1} parent=1 // pred_check_branch
      %2908 = sbr.rel (0) target = $region41
    $region40: #{sentiment_classifier_forward.1} parent=1 // pred_region
      %s2910 = ssub.s32 32, 32
      %2911 = vsyncadd [#allocation4], %s2910
      %s2913 = sshll.u32 [#allocation9], 4
      %s2914 = int_to_ptr.vmem [resolvable:$true] %s2913
      %2916 = dma.vmem_to_hbm [thread:$0]  %s2914, 32, %s6, [#allocation4]
    $region41: #{sentiment_classifier_forward.1} parent=1 // pred_fallthru
      _
    // Predicated region
    $region42: #{sentiment_classifier_forward.1} parent=1 // pred_check
      _
    $region43: #{sentiment_classifier_forward.1} parent=1 // pred_check_branch
      %2918 = sbr.rel (0) target = $region45
    $region44: #{sentiment_classifier_forward.1} parent=1 // pred_region
      %2919 = dma.done [#allocation4], 32
    $region45: #{sentiment_classifier_forward.1} parent=1 // pred_fallthru
      _
    %2920 = vsyncpa [#allocation3], 1
    %2921 = vsyncpa [#allocation8], 1
    %2922 = vsyncpa [#allocation4], 1
    %2923 = vsyncpa [#allocation5], 1

</llo_original>
